<compile_context>
chip_gen: v5e
topology: v5e:2x2
jax: 0.10.0
libtpu: 0.0.40
codegen_flags: <defaults>
</compile_context>

<pallas_src>
import functools

import numpy as np
import jax
import jax.numpy as jnp
from jax.experimental import pallas as pl
from jax.experimental.pallas import tpu as pltpu


# ----------------------------------------------------------------------------
# Fused kernel: conv1+pool1+tanh -> conv2+pool2+tanh -> fc1 -> fc2 -> fc3.
# One grid step processes a batch tile of `bt` images.
# ----------------------------------------------------------------------------
def _lenet5_kernel(x_ref, w1_ref, b1_ref, w2_ref, b2_ref,
                   wfc1_ref, bfc1_ref, wfc2_ref, bfc2_ref, wfc3_ref, bfc3_ref,
                   o_ref, p1_ref, fcin_ref, *, bt):
    f32 = jnp.float32
    bf16 = jnp.bfloat16

    # ---- conv1 (banded matmuls) + maxpool1 + bias + tanh --------------------
    # x_ref[p, iy*bt + b, ix] = image[b, 2*iy + p, ix]   (row-parity packed)
    # Quadrant (r1, s1) = position inside the 2x2 pool window; the max over
    # the 4 quadrants commutes with the per-channel bias and tanh, so pooling
    # happens on the raw matmul outputs (no conv1 scratch at all).
    m1 = None
    for r1 in range(2):                       # pool-window row offset
        for s1 in range(2):                   # pool-window col offset (in W1)
            acc = None
            for dy in range(5):               # conv tap row
                par = (r1 + dy) % 2
                iy0 = (r1 + dy) // 2
                rows = x_ref[par, iy0 * bt:(iy0 + 14) * bt, :]   # (14*bt, 32)
                term = jnp.dot(rows, w1_ref[s1, dy],
                               preferred_element_type=f32)        # (14*bt, 84)
                acc = term if acc is None else acc + term
            m1 = acc if m1 is None else jnp.maximum(m1, acc)
    p1 = jnp.tanh(m1 + b1_ref[...]).astype(bf16)   # rows (I, b), lanes J*6+c

    # Store pooled conv1 output split by row parity so conv2's shifted-row
    # reads are contiguous:  p1_ref[I % 2, (I // 2)*bt + b, :].
    for ii in range(14):
        p1_ref[ii % 2, (ii // 2) * bt:(ii // 2 + 1) * bt, :] = \
            p1[ii * bt:(ii + 1) * bt, :]

    # ---- conv2 (banded matmuls) + maxpool2 + bias + tanh --------------------
    m2 = None
    for r2 in range(2):
        for s2 in range(2):
            acc = None
            for dy in range(5):
                par = (r2 + dy) % 2
                iy0 = (r2 + dy) // 2
                rows = p1_ref[par, iy0 * bt:(iy0 + 5) * bt, :]    # (5*bt, 84)
                term = jnp.dot(rows, w2_ref[s2, dy],
                               preferred_element_type=f32)         # (5*bt, 80)
                acc = term if acc is None else acc + term
            m2 = acc if m2 is None else jnp.maximum(m2, acc)
    p2 = jnp.tanh(m2 + b2_ref[...]).astype(bf16)   # rows (i2, b), lanes j2*16+c

    # Gather the 5 pooled spatial rows into lane chunks of the (bt, 400)
    # fc1 input (lane order (i2, j2, c); wfc1 was repacked to match).
    for i2 in range(5):
        fcin_ref[:, i2 * 80:(i2 + 1) * 80] = p2[i2 * bt:(i2 + 1) * bt, :]

    # ---- fc1 -> fc2 -> fc3 ---------------------------------------------------
    h1 = jnp.dot(fcin_ref[...], wfc1_ref[...], preferred_element_type=f32)
    h1 = jnp.tanh(h1 + bfc1_ref[...])                              # (bt, 120)
    h2 = jnp.dot(h1.astype(bf16), wfc2_ref[...], preferred_element_type=f32)
    h2 = jnp.tanh(h2 + bfc2_ref[...])                              # (bt, 84)
    h3 = jnp.dot(h2.astype(bf16), wfc3_ref[...], preferred_element_type=f32)
    o_ref[...] = h3 + bfc3_ref[...]                                # (bt, 10)


# ----------------------------------------------------------------------------
# One-time host-side weight repacking (banded conv weights, fc permutation).
# ----------------------------------------------------------------------------
def prepare_params(params):
    bf16 = jnp.bfloat16
    w1 = np.asarray(params["conv1_w"], np.float32)   # (6, 1, 5, 5)
    w2 = np.asarray(params["conv2_w"], np.float32)   # (16, 6, 5, 5)

    # conv1 banded weights: W1[s, dy, ix, j*6 + o] = w1[o, 0, dy, ix-(2j+s)]
    # Output lane j*6+o is the pooled x-position j (ox = 2j+s) and channel o.
    W1 = np.zeros((2, 5, 32, 14 * 6), np.float32)
    for s in range(2):
        for dy in range(5):
            for j in range(14):
                for dx in range(5):
                    ix = 2 * j + s + dx
                    W1[s, dy, ix, j * 6:(j + 1) * 6] = w1[:, 0, dy, dx]

    # conv2 banded weights: W2[s, dy, ix*6+c, j*16+o] = w2[o, c, dy, ix-(2j+s)]
    W2 = np.zeros((2, 5, 14 * 6, 5 * 16), np.float32)
    for s in range(2):
        for dy in range(5):
            for j in range(5):
                for dx in range(5):
                    ix = 2 * j + s + dx
                    W2[s, dy, ix * 6:(ix + 1) * 6, j * 16:(j + 1) * 16] = \
                        w2[:, :, dy, dx].T                       # (6, 16) [c, o]

    # fc1: PyTorch flatten order is (c, i2, j2); kernel lane order is
    # (i2, j2, c) -> permute the 400 input rows to match.
    fc1_w = np.asarray(params["fc1_w"], np.float32).reshape(120, 16, 5, 5)
    Wfc1 = fc1_w.transpose(2, 3, 1, 0).reshape(400, 120)

    b1 = np.asarray(params["conv1_b"], np.float32)
    b2 = np.asarray(params["conv2_b"], np.float32)
    return {
        "w1": jnp.asarray(W1, bf16),
        "b1": jnp.asarray(np.tile(b1, 14)[None, :]),             # (1, 84) f32
        "w2": jnp.asarray(W2, bf16),
        "b2": jnp.asarray(np.tile(b2, 5)[None, :]),              # (1, 80) f32
        "wfc1": jnp.asarray(Wfc1, bf16),
        "bfc1": jnp.asarray(np.asarray(params["fc1_b"], np.float32)[None, :]),
        "wfc2": jnp.asarray(np.asarray(params["fc2_w"], np.float32).T, bf16),
        "bfc2": jnp.asarray(np.asarray(params["fc2_b"], np.float32)[None, :]),
        "wfc3": jnp.asarray(np.asarray(params["fc3_w"], np.float32).T, bf16),
        "bfc3": jnp.asarray(np.asarray(params["fc3_b"], np.float32)[None, :]),
    }


def _round_up(v, m):
    return (v + m - 1) // m * m


@jax.jit
def lenet5_forward(prepped, x):
    """x: (B, 1, 32, 32) f32 NCHW -> logits (B, 10) f32."""
    B = x.shape[0]
    bt = 128 if B >= 128 else _round_up(max(B, 8), 8)     # batch tile (mult of 8)
    b_pad = _round_up(B, bt)
    n_tiles = b_pad // bt

    xs = x[:, 0]
    if b_pad != B:
        xs = jnp.pad(xs, ((0, b_pad - B), (0, 0), (0, 0)))
    # (B_pad, 32, 32) -> (2, n_tiles*16*bt, 32): row = tile*16*bt + iy*bt + b,
    # parity-split image rows so every in-kernel conv slice is contiguous.
    xp = xs.reshape(n_tiles, bt, 16, 2, 32).transpose(3, 0, 2, 1, 4)
    xp = xp.reshape(2, n_tiles * 16 * bt, 32).astype(jnp.bfloat16)

    out = pl.pallas_call(
        functools.partial(_lenet5_kernel, bt=bt),
        out_shape=jax.ShapeDtypeStruct((b_pad, 10), jnp.float32),
        grid_spec=pltpu.PrefetchScalarGridSpec(
            num_scalar_prefetch=0,
            grid=(n_tiles,),
            in_specs=[
                pl.BlockSpec((2, 16 * bt, 32), lambda i: (0, i, 0)),  # images
                pl.BlockSpec((2, 5, 32, 84), lambda i: (0, 0, 0, 0)),
                pl.BlockSpec((1, 84), lambda i: (0, 0)),
                pl.BlockSpec((2, 5, 84, 80), lambda i: (0, 0, 0, 0)),
                pl.BlockSpec((1, 80), lambda i: (0, 0)),
                pl.BlockSpec((400, 120), lambda i: (0, 0)),
                pl.BlockSpec((1, 120), lambda i: (0, 0)),
                pl.BlockSpec((120, 84), lambda i: (0, 0)),
                pl.BlockSpec((1, 84), lambda i: (0, 0)),
                pl.BlockSpec((84, 10), lambda i: (0, 0)),
                pl.BlockSpec((1, 10), lambda i: (0, 0)),
            ],
            out_specs=pl.BlockSpec((bt, 10), lambda i: (i, 0)),
            scratch_shapes=[
                pltpu.VMEM((2, 7 * bt, 84), jnp.bfloat16),  # pooled conv1 (parity-split)
                pltpu.VMEM((bt, 400), jnp.bfloat16),        # flattened fc1 input
            ],
        ),
        compiler_params=pltpu.CompilerParams(
            dimension_semantics=("parallel",),
            vmem_limit_bytes=32 * 1024 * 1024,
        ),
    )(xp, prepped["w1"], prepped["b1"], prepped["w2"], prepped["b2"],
      prepped["wfc1"], prepped["bfc1"], prepped["wfc2"], prepped["bfc2"],
      prepped["wfc3"], prepped["bfc3"])
    return out[:B]


# ----------------------------------------------------------------------------
# Deterministic synthetic parameters, plain-JAX reference, driver.
# ----------------------------------------------------------------------------
def init_params(key):
    keys = jax.random.split(key, 10)

    def init(k, shape, scale=0.05):
        return scale * jax.random.normal(k, shape, dtype=jnp.float32)

    return {
        "conv1_w": init(keys[0], (6, 1, 5, 5)),
        "conv1_b": init(keys[1], (6,)),
        "conv2_w": init(keys[2], (16, 6, 5, 5)),
        "conv2_b": init(keys[3], (16,)),
        "fc1_w": init(keys[4], (120, 16 * 5 * 5)),   # PyTorch Linear: (out, in)
        "fc1_b": init(keys[5], (120,)),
        "fc2_w": init(keys[6], (84, 120)),
        "fc2_b": init(keys[7], (84,)),
        "fc3_w": init(keys[8], (10, 84)),
        "fc3_b": init(keys[9], (10,)),
    }


def lenet5_reference(params, x):
    """Plain-JAX f32 reference with PyTorch semantics (sanity check only)."""
    def conv(v, w, b):
        y = jax.lax.conv_general_dilated(
            v, w, window_strides=(1, 1), padding="VALID",
            dimension_numbers=("NCHW", "OIHW", "NCHW"))
        return y + b.reshape(1, -1, 1, 1)

    def pool(v):
        return jax.lax.reduce_window(v, -jnp.inf, jax.lax.max,
                                     (1, 1, 2, 2), (1, 1, 2, 2), "VALID")

    v = pool(jnp.tanh(conv(x, params["conv1_w"], params["conv1_b"])))
    v = pool(jnp.tanh(conv(v, params["conv2_w"], params["conv2_b"])))
    v = v.reshape(v.shape[0], -1)            # NCHW flatten == torch .view
    v = jnp.tanh(v @ params["fc1_w"].T + params["fc1_b"])
    v = jnp.tanh(v @ params["fc2_w"].T + params["fc2_b"])
    return v @ params["fc3_w"].T + params["fc3_b"]


if __name__ == "__main__":
    root = jax.random.PRNGKey(0)
    pkey, xkey = jax.random.split(root)
    params = init_params(pkey)
    prepped = prepare_params(params)          # one-time weight repack (hoisted)

    # LeNet-5 requires 32x32 spatial input so fc1 (16*5*5 = 400) shape holds.
    x = jax.random.normal(xkey, (2, 1, 32, 32), dtype=jnp.float32)

    out = jax.block_until_ready(lenet5_forward(prepped, x))
    assert out.shape == (2, 10), out.shape
    assert out.dtype == jnp.float32

    ref = lenet5_reference(params, x)
    err = float(jnp.max(jnp.abs(out - ref)))
    assert err < 2e-2, f"max |pallas - reference| too large: {err}"

    print("KERNEL_OK")
</pallas_src>

<mosaic_0001>
module attributes {stable_mosaic.version = 11 : i64} {
  func.func @_lenet5_kernel(%arg0: i32, %arg1: memref<2x128x32xbf16, #tpu.memory_space<vmem>>, %arg2: memref<2x5x32x84xbf16, #tpu.memory_space<vmem>>, %arg3: memref<1x84xf32, #tpu.memory_space<vmem>>, %arg4: memref<2x5x84x80xbf16, #tpu.memory_space<vmem>>, %arg5: memref<1x80xf32, #tpu.memory_space<vmem>>, %arg6: memref<400x120xbf16, #tpu.memory_space<vmem>>, %arg7: memref<1x120xf32, #tpu.memory_space<vmem>>, %arg8: memref<120x84xbf16, #tpu.memory_space<vmem>>, %arg9: memref<1x84xf32, #tpu.memory_space<vmem>>, %arg10: memref<84x10xbf16, #tpu.memory_space<vmem>>, %arg11: memref<1x10xf32, #tpu.memory_space<vmem>>, %arg12: memref<8x10xf32, #tpu.memory_space<vmem>>, %arg13: memref<2x56x84xbf16, #tpu.memory_space<vmem>>, %arg14: memref<8x400xbf16, #tpu.memory_space<vmem>>) attributes {dimension_semantics = [#tpu.dimension_semantics<parallel>], iteration_bounds = array<i64: 1>, scalar_prefetch = 0 : i64, scratch_operands = 2 : i64, tpu.core_type = #tpu.core_type<tc>, window_params = [{transform_indices = @transform_0, window_bounds = array<i64: 2, 128, 32>}, {pipeline_mode = #tpu.pipeline_mode<synchronous>, transform_indices = @transform_1, window_bounds = array<i64: 2, 5, 32, 84>}, {pipeline_mode = #tpu.pipeline_mode<synchronous>, transform_indices = @transform_2, window_bounds = array<i64: 1, 84>}, {pipeline_mode = #tpu.pipeline_mode<synchronous>, transform_indices = @transform_3, window_bounds = array<i64: 2, 5, 84, 80>}, {pipeline_mode = #tpu.pipeline_mode<synchronous>, transform_indices = @transform_4, window_bounds = array<i64: 1, 80>}, {pipeline_mode = #tpu.pipeline_mode<synchronous>, transform_indices = @transform_5, window_bounds = array<i64: 400, 120>}, {pipeline_mode = #tpu.pipeline_mode<synchronous>, transform_indices = @transform_6, window_bounds = array<i64: 1, 120>}, {pipeline_mode = #tpu.pipeline_mode<synchronous>, transform_indices = @transform_7, window_bounds = array<i64: 120, 84>}, {pipeline_mode = #tpu.pipeline_mode<synchronous>, transform_indices = @transform_8, window_bounds = array<i64: 1, 84>}, {pipeline_mode = #tpu.pipeline_mode<synchronous>, transform_indices = @transform_9, window_bounds = array<i64: 84, 10>}, {pipeline_mode = #tpu.pipeline_mode<synchronous>, transform_indices = @transform_10, window_bounds = array<i64: 1, 10>}, {transform_indices = @transform_11, window_bounds = array<i64: 8, 10>}]} {
    %c0 = arith.constant 0 : index
    %c0_0 = arith.constant 0 : index
    %c0_1 = arith.constant 0 : index
    %0 = vector.load %arg1[%c0, %c0_0, %c0_1] : memref<2x128x32xbf16, #tpu.memory_space<vmem>>, vector<1x112x32xbf16>
    %1 = vector.shape_cast %0 : vector<1x112x32xbf16> to vector<112x32xbf16>
    %c0_2 = arith.constant 0 : index
    %c0_3 = arith.constant 0 : index
    %c0_4 = arith.constant 0 : index
    %c0_5 = arith.constant 0 : index
    %2 = vector.load %arg2[%c0_2, %c0_3, %c0_4, %c0_5] : memref<2x5x32x84xbf16, #tpu.memory_space<vmem>>, vector<1x1x32x84xbf16>
    %3 = vector.shape_cast %2 : vector<1x1x32x84xbf16> to vector<32x84xbf16>
    %cst = arith.constant dense<0.000000e+00> : vector<112x84xf32>
    %4 = tpu.matmul %1, %3, %cst {dimension_numbers = #tpu.dot_dimension_numbers<[1], [0], [0], [1], [0, 0, 1, 1], [], []>} : vector<112x32xbf16>, vector<32x84xbf16>, vector<112x84xf32> -> vector<112x84xf32>
    %c1 = arith.constant 1 : index
    %c0_6 = arith.constant 0 : index
    %c0_7 = arith.constant 0 : index
    %5 = vector.load %arg1[%c1, %c0_6, %c0_7] : memref<2x128x32xbf16, #tpu.memory_space<vmem>>, vector<1x112x32xbf16>
    %6 = vector.shape_cast %5 : vector<1x112x32xbf16> to vector<112x32xbf16>
    %c0_8 = arith.constant 0 : index
    %c1_9 = arith.constant 1 : index
    %c0_10 = arith.constant 0 : index
    %c0_11 = arith.constant 0 : index
    %7 = vector.load %arg2[%c0_8, %c1_9, %c0_10, %c0_11] : memref<2x5x32x84xbf16, #tpu.memory_space<vmem>>, vector<1x1x32x84xbf16>
    %8 = vector.shape_cast %7 : vector<1x1x32x84xbf16> to vector<32x84xbf16>
    %cst_12 = arith.constant dense<0.000000e+00> : vector<112x84xf32>
    %9 = tpu.matmul %6, %8, %cst_12 {dimension_numbers = #tpu.dot_dimension_numbers<[1], [0], [0], [1], [0, 0, 1, 1], [], []>} : vector<112x32xbf16>, vector<32x84xbf16>, vector<112x84xf32> -> vector<112x84xf32>
    %10 = arith.addf %4, %9 : vector<112x84xf32>
    %c0_13 = arith.constant 0 : index
    %c8 = arith.constant 8 : index
    %c0_14 = arith.constant 0 : index
    %11 = vector.load %arg1[%c0_13, %c8, %c0_14] : memref<2x128x32xbf16, #tpu.memory_space<vmem>>, vector<1x112x32xbf16>
    %12 = vector.shape_cast %11 : vector<1x112x32xbf16> to vector<112x32xbf16>
    %c0_15 = arith.constant 0 : index
    %c2 = arith.constant 2 : index
    %c0_16 = arith.constant 0 : index
    %c0_17 = arith.constant 0 : index
    %13 = vector.load %arg2[%c0_15, %c2, %c0_16, %c0_17] : memref<2x5x32x84xbf16, #tpu.memory_space<vmem>>, vector<1x1x32x84xbf16>
    %14 = vector.shape_cast %13 : vector<1x1x32x84xbf16> to vector<32x84xbf16>
    %cst_18 = arith.constant dense<0.000000e+00> : vector<112x84xf32>
    %15 = tpu.matmul %12, %14, %cst_18 {dimension_numbers = #tpu.dot_dimension_numbers<[1], [0], [0], [1], [0, 0, 1, 1], [], []>} : vector<112x32xbf16>, vector<32x84xbf16>, vector<112x84xf32> -> vector<112x84xf32>
    %16 = arith.addf %10, %15 : vector<112x84xf32>
    %c1_19 = arith.constant 1 : index
    %c8_20 = arith.constant 8 : index
    %c0_21 = arith.constant 0 : index
    %17 = vector.load %arg1[%c1_19, %c8_20, %c0_21] : memref<2x128x32xbf16, #tpu.memory_space<vmem>>, vector<1x112x32xbf16>
    %18 = vector.shape_cast %17 : vector<1x112x32xbf16> to vector<112x32xbf16>
    %c0_22 = arith.constant 0 : index
    %c3 = arith.constant 3 : index
    %c0_23 = arith.constant 0 : index
    %c0_24 = arith.constant 0 : index
    %19 = vector.load %arg2[%c0_22, %c3, %c0_23, %c0_24] : memref<2x5x32x84xbf16, #tpu.memory_space<vmem>>, vector<1x1x32x84xbf16>
    %20 = vector.shape_cast %19 : vector<1x1x32x84xbf16> to vector<32x84xbf16>
    %cst_25 = arith.constant dense<0.000000e+00> : vector<112x84xf32>
    %21 = tpu.matmul %18, %20, %cst_25 {dimension_numbers = #tpu.dot_dimension_numbers<[1], [0], [0], [1], [0, 0, 1, 1], [], []>} : vector<112x32xbf16>, vector<32x84xbf16>, vector<112x84xf32> -> vector<112x84xf32>
    %22 = arith.addf %16, %21 : vector<112x84xf32>
    %c0_26 = arith.constant 0 : index
    %c16 = arith.constant 16 : index
    %c0_27 = arith.constant 0 : index
    %23 = vector.load %arg1[%c0_26, %c16, %c0_27] : memref<2x128x32xbf16, #tpu.memory_space<vmem>>, vector<1x112x32xbf16>
    %24 = vector.shape_cast %23 : vector<1x112x32xbf16> to vector<112x32xbf16>
    %c0_28 = arith.constant 0 : index
    %c4 = arith.constant 4 : index
    %c0_29 = arith.constant 0 : index
    %c0_30 = arith.constant 0 : index
    %25 = vector.load %arg2[%c0_28, %c4, %c0_29, %c0_30] : memref<2x5x32x84xbf16, #tpu.memory_space<vmem>>, vector<1x1x32x84xbf16>
    %26 = vector.shape_cast %25 : vector<1x1x32x84xbf16> to vector<32x84xbf16>
    %cst_31 = arith.constant dense<0.000000e+00> : vector<112x84xf32>
    %27 = tpu.matmul %24, %26, %cst_31 {dimension_numbers = #tpu.dot_dimension_numbers<[1], [0], [0], [1], [0, 0, 1, 1], [], []>} : vector<112x32xbf16>, vector<32x84xbf16>, vector<112x84xf32> -> vector<112x84xf32>
    %28 = arith.addf %22, %27 : vector<112x84xf32>
    %c0_32 = arith.constant 0 : index
    %c0_33 = arith.constant 0 : index
    %c0_34 = arith.constant 0 : index
    %29 = vector.load %arg1[%c0_32, %c0_33, %c0_34] : memref<2x128x32xbf16, #tpu.memory_space<vmem>>, vector<1x112x32xbf16>
    %30 = vector.shape_cast %29 : vector<1x112x32xbf16> to vector<112x32xbf16>
    %c1_35 = arith.constant 1 : index
    %c0_36 = arith.constant 0 : index
    %c0_37 = arith.constant 0 : index
    %c0_38 = arith.constant 0 : index
    %31 = vector.load %arg2[%c1_35, %c0_36, %c0_37, %c0_38] : memref<2x5x32x84xbf16, #tpu.memory_space<vmem>>, vector<1x1x32x84xbf16>
    %32 = vector.shape_cast %31 : vector<1x1x32x84xbf16> to vector<32x84xbf16>
    %cst_39 = arith.constant dense<0.000000e+00> : vector<112x84xf32>
    %33 = tpu.matmul %30, %32, %cst_39 {dimension_numbers = #tpu.dot_dimension_numbers<[1], [0], [0], [1], [0, 0, 1, 1], [], []>} : vector<112x32xbf16>, vector<32x84xbf16>, vector<112x84xf32> -> vector<112x84xf32>
    %c1_40 = arith.constant 1 : index
    %c0_41 = arith.constant 0 : index
    %c0_42 = arith.constant 0 : index
    %34 = vector.load %arg1[%c1_40, %c0_41, %c0_42] : memref<2x128x32xbf16, #tpu.memory_space<vmem>>, vector<1x112x32xbf16>
    %35 = vector.shape_cast %34 : vector<1x112x32xbf16> to vector<112x32xbf16>
    %c1_43 = arith.constant 1 : index
    %c1_44 = arith.constant 1 : index
    %c0_45 = arith.constant 0 : index
    %c0_46 = arith.constant 0 : index
    %36 = vector.load %arg2[%c1_43, %c1_44, %c0_45, %c0_46] : memref<2x5x32x84xbf16, #tpu.memory_space<vmem>>, vector<1x1x32x84xbf16>
    %37 = vector.shape_cast %36 : vector<1x1x32x84xbf16> to vector<32x84xbf16>
    %cst_47 = arith.constant dense<0.000000e+00> : vector<112x84xf32>
    %38 = tpu.matmul %35, %37, %cst_47 {dimension_numbers = #tpu.dot_dimension_numbers<[1], [0], [0], [1], [0, 0, 1, 1], [], []>} : vector<112x32xbf16>, vector<32x84xbf16>, vector<112x84xf32> -> vector<112x84xf32>
    %39 = arith.addf %33, %38 : vector<112x84xf32>
    %c0_48 = arith.constant 0 : index
    %c8_49 = arith.constant 8 : index
    %c0_50 = arith.constant 0 : index
    %40 = vector.load %arg1[%c0_48, %c8_49, %c0_50] : memref<2x128x32xbf16, #tpu.memory_space<vmem>>, vector<1x112x32xbf16>
    %41 = vector.shape_cast %40 : vector<1x112x32xbf16> to vector<112x32xbf16>
    %c1_51 = arith.constant 1 : index
    %c2_52 = arith.constant 2 : index
    %c0_53 = arith.constant 0 : index
    %c0_54 = arith.constant 0 : index
    %42 = vector.load %arg2[%c1_51, %c2_52, %c0_53, %c0_54] : memref<2x5x32x84xbf16, #tpu.memory_space<vmem>>, vector<1x1x32x84xbf16>
    %43 = vector.shape_cast %42 : vector<1x1x32x84xbf16> to vector<32x84xbf16>
    %cst_55 = arith.constant dense<0.000000e+00> : vector<112x84xf32>
    %44 = tpu.matmul %41, %43, %cst_55 {dimension_numbers = #tpu.dot_dimension_numbers<[1], [0], [0], [1], [0, 0, 1, 1], [], []>} : vector<112x32xbf16>, vector<32x84xbf16>, vector<112x84xf32> -> vector<112x84xf32>
    %45 = arith.addf %39, %44 : vector<112x84xf32>
    %c1_56 = arith.constant 1 : index
    %c8_57 = arith.constant 8 : index
    %c0_58 = arith.constant 0 : index
    %46 = vector.load %arg1[%c1_56, %c8_57, %c0_58] : memref<2x128x32xbf16, #tpu.memory_space<vmem>>, vector<1x112x32xbf16>
    %47 = vector.shape_cast %46 : vector<1x112x32xbf16> to vector<112x32xbf16>
    %c1_59 = arith.constant 1 : index
    %c3_60 = arith.constant 3 : index
    %c0_61 = arith.constant 0 : index
    %c0_62 = arith.constant 0 : index
    %48 = vector.load %arg2[%c1_59, %c3_60, %c0_61, %c0_62] : memref<2x5x32x84xbf16, #tpu.memory_space<vmem>>, vector<1x1x32x84xbf16>
    %49 = vector.shape_cast %48 : vector<1x1x32x84xbf16> to vector<32x84xbf16>
    %cst_63 = arith.constant dense<0.000000e+00> : vector<112x84xf32>
    %50 = tpu.matmul %47, %49, %cst_63 {dimension_numbers = #tpu.dot_dimension_numbers<[1], [0], [0], [1], [0, 0, 1, 1], [], []>} : vector<112x32xbf16>, vector<32x84xbf16>, vector<112x84xf32> -> vector<112x84xf32>
    %51 = arith.addf %45, %50 : vector<112x84xf32>
    %c0_64 = arith.constant 0 : index
    %c16_65 = arith.constant 16 : index
    %c0_66 = arith.constant 0 : index
    %52 = vector.load %arg1[%c0_64, %c16_65, %c0_66] : memref<2x128x32xbf16, #tpu.memory_space<vmem>>, vector<1x112x32xbf16>
    %53 = vector.shape_cast %52 : vector<1x112x32xbf16> to vector<112x32xbf16>
    %c1_67 = arith.constant 1 : index
    %c4_68 = arith.constant 4 : index
    %c0_69 = arith.constant 0 : index
    %c0_70 = arith.constant 0 : index
    %54 = vector.load %arg2[%c1_67, %c4_68, %c0_69, %c0_70] : memref<2x5x32x84xbf16, #tpu.memory_space<vmem>>, vector<1x1x32x84xbf16>
    %55 = vector.shape_cast %54 : vector<1x1x32x84xbf16> to vector<32x84xbf16>
    %cst_71 = arith.constant dense<0.000000e+00> : vector<112x84xf32>
    %56 = tpu.matmul %53, %55, %cst_71 {dimension_numbers = #tpu.dot_dimension_numbers<[1], [0], [0], [1], [0, 0, 1, 1], [], []>} : vector<112x32xbf16>, vector<32x84xbf16>, vector<112x84xf32> -> vector<112x84xf32>
    %57 = arith.addf %51, %56 : vector<112x84xf32>
    %58 = arith.maximumf %28, %57 : vector<112x84xf32>
    %c1_72 = arith.constant 1 : index
    %c0_73 = arith.constant 0 : index
    %c0_74 = arith.constant 0 : index
    %59 = vector.load %arg1[%c1_72, %c0_73, %c0_74] : memref<2x128x32xbf16, #tpu.memory_space<vmem>>, vector<1x112x32xbf16>
    %60 = vector.shape_cast %59 : vector<1x112x32xbf16> to vector<112x32xbf16>
    %c0_75 = arith.constant 0 : index
    %c0_76 = arith.constant 0 : index
    %c0_77 = arith.constant 0 : index
    %c0_78 = arith.constant 0 : index
    %61 = vector.load %arg2[%c0_75, %c0_76, %c0_77, %c0_78] : memref<2x5x32x84xbf16, #tpu.memory_space<vmem>>, vector<1x1x32x84xbf16>
    %62 = vector.shape_cast %61 : vector<1x1x32x84xbf16> to vector<32x84xbf16>
    %cst_79 = arith.constant dense<0.000000e+00> : vector<112x84xf32>
    %63 = tpu.matmul %60, %62, %cst_79 {dimension_numbers = #tpu.dot_dimension_numbers<[1], [0], [0], [1], [0, 0, 1, 1], [], []>} : vector<112x32xbf16>, vector<32x84xbf16>, vector<112x84xf32> -> vector<112x84xf32>
    %c0_80 = arith.constant 0 : index
    %c8_81 = arith.constant 8 : index
    %c0_82 = arith.constant 0 : index
    %64 = vector.load %arg1[%c0_80, %c8_81, %c0_82] : memref<2x128x32xbf16, #tpu.memory_space<vmem>>, vector<1x112x32xbf16>
    %65 = vector.shape_cast %64 : vector<1x112x32xbf16> to vector<112x32xbf16>
    %c0_83 = arith.constant 0 : index
    %c1_84 = arith.constant 1 : index
    %c0_85 = arith.constant 0 : index
    %c0_86 = arith.constant 0 : index
    %66 = vector.load %arg2[%c0_83, %c1_84, %c0_85, %c0_86] : memref<2x5x32x84xbf16, #tpu.memory_space<vmem>>, vector<1x1x32x84xbf16>
    %67 = vector.shape_cast %66 : vector<1x1x32x84xbf16> to vector<32x84xbf16>
    %cst_87 = arith.constant dense<0.000000e+00> : vector<112x84xf32>
    %68 = tpu.matmul %65, %67, %cst_87 {dimension_numbers = #tpu.dot_dimension_numbers<[1], [0], [0], [1], [0, 0, 1, 1], [], []>} : vector<112x32xbf16>, vector<32x84xbf16>, vector<112x84xf32> -> vector<112x84xf32>
    %69 = arith.addf %63, %68 : vector<112x84xf32>
    %c1_88 = arith.constant 1 : index
    %c8_89 = arith.constant 8 : index
    %c0_90 = arith.constant 0 : index
    %70 = vector.load %arg1[%c1_88, %c8_89, %c0_90] : memref<2x128x32xbf16, #tpu.memory_space<vmem>>, vector<1x112x32xbf16>
    %71 = vector.shape_cast %70 : vector<1x112x32xbf16> to vector<112x32xbf16>
    %c0_91 = arith.constant 0 : index
    %c2_92 = arith.constant 2 : index
    %c0_93 = arith.constant 0 : index
    %c0_94 = arith.constant 0 : index
    %72 = vector.load %arg2[%c0_91, %c2_92, %c0_93, %c0_94] : memref<2x5x32x84xbf16, #tpu.memory_space<vmem>>, vector<1x1x32x84xbf16>
    %73 = vector.shape_cast %72 : vector<1x1x32x84xbf16> to vector<32x84xbf16>
    %cst_95 = arith.constant dense<0.000000e+00> : vector<112x84xf32>
    %74 = tpu.matmul %71, %73, %cst_95 {dimension_numbers = #tpu.dot_dimension_numbers<[1], [0], [0], [1], [0, 0, 1, 1], [], []>} : vector<112x32xbf16>, vector<32x84xbf16>, vector<112x84xf32> -> vector<112x84xf32>
    %75 = arith.addf %69, %74 : vector<112x84xf32>
    %c0_96 = arith.constant 0 : index
    %c16_97 = arith.constant 16 : index
    %c0_98 = arith.constant 0 : index
    %76 = vector.load %arg1[%c0_96, %c16_97, %c0_98] : memref<2x128x32xbf16, #tpu.memory_space<vmem>>, vector<1x112x32xbf16>
    %77 = vector.shape_cast %76 : vector<1x112x32xbf16> to vector<112x32xbf16>
    %c0_99 = arith.constant 0 : index
    %c3_100 = arith.constant 3 : index
    %c0_101 = arith.constant 0 : index
    %c0_102 = arith.constant 0 : index
    %78 = vector.load %arg2[%c0_99, %c3_100, %c0_101, %c0_102] : memref<2x5x32x84xbf16, #tpu.memory_space<vmem>>, vector<1x1x32x84xbf16>
    %79 = vector.shape_cast %78 : vector<1x1x32x84xbf16> to vector<32x84xbf16>
    %cst_103 = arith.constant dense<0.000000e+00> : vector<112x84xf32>
    %80 = tpu.matmul %77, %79, %cst_103 {dimension_numbers = #tpu.dot_dimension_numbers<[1], [0], [0], [1], [0, 0, 1, 1], [], []>} : vector<112x32xbf16>, vector<32x84xbf16>, vector<112x84xf32> -> vector<112x84xf32>
    %81 = arith.addf %75, %80 : vector<112x84xf32>
    %c1_104 = arith.constant 1 : index
    %c16_105 = arith.constant 16 : index
    %c0_106 = arith.constant 0 : index
    %82 = vector.load %arg1[%c1_104, %c16_105, %c0_106] : memref<2x128x32xbf16, #tpu.memory_space<vmem>>, vector<1x112x32xbf16>
    %83 = vector.shape_cast %82 : vector<1x112x32xbf16> to vector<112x32xbf16>
    %c0_107 = arith.constant 0 : index
    %c4_108 = arith.constant 4 : index
    %c0_109 = arith.constant 0 : index
    %c0_110 = arith.constant 0 : index
    %84 = vector.load %arg2[%c0_107, %c4_108, %c0_109, %c0_110] : memref<2x5x32x84xbf16, #tpu.memory_space<vmem>>, vector<1x1x32x84xbf16>
    %85 = vector.shape_cast %84 : vector<1x1x32x84xbf16> to vector<32x84xbf16>
    %cst_111 = arith.constant dense<0.000000e+00> : vector<112x84xf32>
    %86 = tpu.matmul %83, %85, %cst_111 {dimension_numbers = #tpu.dot_dimension_numbers<[1], [0], [0], [1], [0, 0, 1, 1], [], []>} : vector<112x32xbf16>, vector<32x84xbf16>, vector<112x84xf32> -> vector<112x84xf32>
    %87 = arith.addf %81, %86 : vector<112x84xf32>
    %88 = arith.maximumf %58, %87 : vector<112x84xf32>
    %c1_112 = arith.constant 1 : index
    %c0_113 = arith.constant 0 : index
    %c0_114 = arith.constant 0 : index
    %89 = vector.load %arg1[%c1_112, %c0_113, %c0_114] : memref<2x128x32xbf16, #tpu.memory_space<vmem>>, vector<1x112x32xbf16>
    %90 = vector.shape_cast %89 : vector<1x112x32xbf16> to vector<112x32xbf16>
    %c1_115 = arith.constant 1 : index
    %c0_116 = arith.constant 0 : index
    %c0_117 = arith.constant 0 : index
    %c0_118 = arith.constant 0 : index
    %91 = vector.load %arg2[%c1_115, %c0_116, %c0_117, %c0_118] : memref<2x5x32x84xbf16, #tpu.memory_space<vmem>>, vector<1x1x32x84xbf16>
    %92 = vector.shape_cast %91 : vector<1x1x32x84xbf16> to vector<32x84xbf16>
    %cst_119 = arith.constant dense<0.000000e+00> : vector<112x84xf32>
    %93 = tpu.matmul %90, %92, %cst_119 {dimension_numbers = #tpu.dot_dimension_numbers<[1], [0], [0], [1], [0, 0, 1, 1], [], []>} : vector<112x32xbf16>, vector<32x84xbf16>, vector<112x84xf32> -> vector<112x84xf32>
    %c0_120 = arith.constant 0 : index
    %c8_121 = arith.constant 8 : index
    %c0_122 = arith.constant 0 : index
    %94 = vector.load %arg1[%c0_120, %c8_121, %c0_122] : memref<2x128x32xbf16, #tpu.memory_space<vmem>>, vector<1x112x32xbf16>
    %95 = vector.shape_cast %94 : vector<1x112x32xbf16> to vector<112x32xbf16>
    %c1_123 = arith.constant 1 : index
    %c1_124 = arith.constant 1 : index
    %c0_125 = arith.constant 0 : index
    %c0_126 = arith.constant 0 : index
    %96 = vector.load %arg2[%c1_123, %c1_124, %c0_125, %c0_126] : memref<2x5x32x84xbf16, #tpu.memory_space<vmem>>, vector<1x1x32x84xbf16>
    %97 = vector.shape_cast %96 : vector<1x1x32x84xbf16> to vector<32x84xbf16>
    %cst_127 = arith.constant dense<0.000000e+00> : vector<112x84xf32>
    %98 = tpu.matmul %95, %97, %cst_127 {dimension_numbers = #tpu.dot_dimension_numbers<[1], [0], [0], [1], [0, 0, 1, 1], [], []>} : vector<112x32xbf16>, vector<32x84xbf16>, vector<112x84xf32> -> vector<112x84xf32>
    %99 = arith.addf %93, %98 : vector<112x84xf32>
    %c1_128 = arith.constant 1 : index
    %c8_129 = arith.constant 8 : index
    %c0_130 = arith.constant 0 : index
    %100 = vector.load %arg1[%c1_128, %c8_129, %c0_130] : memref<2x128x32xbf16, #tpu.memory_space<vmem>>, vector<1x112x32xbf16>
    %101 = vector.shape_cast %100 : vector<1x112x32xbf16> to vector<112x32xbf16>
    %c1_131 = arith.constant 1 : index
    %c2_132 = arith.constant 2 : index
    %c0_133 = arith.constant 0 : index
    %c0_134 = arith.constant 0 : index
    %102 = vector.load %arg2[%c1_131, %c2_132, %c0_133, %c0_134] : memref<2x5x32x84xbf16, #tpu.memory_space<vmem>>, vector<1x1x32x84xbf16>
    %103 = vector.shape_cast %102 : vector<1x1x32x84xbf16> to vector<32x84xbf16>
    %cst_135 = arith.constant dense<0.000000e+00> : vector<112x84xf32>
    %104 = tpu.matmul %101, %103, %cst_135 {dimension_numbers = #tpu.dot_dimension_numbers<[1], [0], [0], [1], [0, 0, 1, 1], [], []>} : vector<112x32xbf16>, vector<32x84xbf16>, vector<112x84xf32> -> vector<112x84xf32>
    %105 = arith.addf %99, %104 : vector<112x84xf32>
    %c0_136 = arith.constant 0 : index
    %c16_137 = arith.constant 16 : index
    %c0_138 = arith.constant 0 : index
    %106 = vector.load %arg1[%c0_136, %c16_137, %c0_138] : memref<2x128x32xbf16, #tpu.memory_space<vmem>>, vector<1x112x32xbf16>
    %107 = vector.shape_cast %106 : vector<1x112x32xbf16> to vector<112x32xbf16>
    %c1_139 = arith.constant 1 : index
    %c3_140 = arith.constant 3 : index
    %c0_141 = arith.constant 0 : index
    %c0_142 = arith.constant 0 : index
    %108 = vector.load %arg2[%c1_139, %c3_140, %c0_141, %c0_142] : memref<2x5x32x84xbf16, #tpu.memory_space<vmem>>, vector<1x1x32x84xbf16>
    %109 = vector.shape_cast %108 : vector<1x1x32x84xbf16> to vector<32x84xbf16>
    %cst_143 = arith.constant dense<0.000000e+00> : vector<112x84xf32>
    %110 = tpu.matmul %107, %109, %cst_143 {dimension_numbers = #tpu.dot_dimension_numbers<[1], [0], [0], [1], [0, 0, 1, 1], [], []>} : vector<112x32xbf16>, vector<32x84xbf16>, vector<112x84xf32> -> vector<112x84xf32>
    %111 = arith.addf %105, %110 : vector<112x84xf32>
    %c1_144 = arith.constant 1 : index
    %c16_145 = arith.constant 16 : index
    %c0_146 = arith.constant 0 : index
    %112 = vector.load %arg1[%c1_144, %c16_145, %c0_146] : memref<2x128x32xbf16, #tpu.memory_space<vmem>>, vector<1x112x32xbf16>
    %113 = vector.shape_cast %112 : vector<1x112x32xbf16> to vector<112x32xbf16>
    %c1_147 = arith.constant 1 : index
    %c4_148 = arith.constant 4 : index
    %c0_149 = arith.constant 0 : index
    %c0_150 = arith.constant 0 : index
    %114 = vector.load %arg2[%c1_147, %c4_148, %c0_149, %c0_150] : memref<2x5x32x84xbf16, #tpu.memory_space<vmem>>, vector<1x1x32x84xbf16>
    %115 = vector.shape_cast %114 : vector<1x1x32x84xbf16> to vector<32x84xbf16>
    %cst_151 = arith.constant dense<0.000000e+00> : vector<112x84xf32>
    %116 = tpu.matmul %113, %115, %cst_151 {dimension_numbers = #tpu.dot_dimension_numbers<[1], [0], [0], [1], [0, 0, 1, 1], [], []>} : vector<112x32xbf16>, vector<32x84xbf16>, vector<112x84xf32> -> vector<112x84xf32>
    %117 = arith.addf %111, %116 : vector<112x84xf32>
    %118 = arith.maximumf %88, %117 : vector<112x84xf32>
    %c0_152 = arith.constant 0 : index
    %c0_153 = arith.constant 0 : index
    %119 = vector.load %arg3[%c0_152, %c0_153] : memref<1x84xf32, #tpu.memory_space<vmem>>, vector<1x84xf32>
    %120 = vector.broadcast %119 : vector<1x84xf32> to vector<112x84xf32>
    %121 = arith.addf %118, %120 : vector<112x84xf32>
    %122 = math.tanh %121 : vector<112x84xf32>
    %123 = arith.truncf %122 : vector<112x84xf32> to vector<112x84xbf16>
    %124 = vector.extract_strided_slice %123 {offsets = [0, 0], sizes = [8, 84], strides = [1, 1]} : vector<112x84xbf16> to vector<8x84xbf16>
    %c0_154 = arith.constant 0 : index
    %c0_155 = arith.constant 0 : index
    %c0_156 = arith.constant 0 : index
    %125 = vector.load %arg13[%c0_154, %c0_155, %c0_156] : memref<2x56x84xbf16, #tpu.memory_space<vmem>>, vector<1x8x84xbf16>
    %126 = vector.shape_cast %125 : vector<1x8x84xbf16> to vector<8x84xbf16>
    %127 = vector.shape_cast %124 : vector<8x84xbf16> to vector<1x8x84xbf16>
    tpu.vector_store %arg13[%c0_154, %c0_155, %c0_156], %127 {strides = array<i32>} : memref<2x56x84xbf16, #tpu.memory_space<vmem>>, vector<1x8x84xbf16>,
    %128 = vector.extract_strided_slice %123 {offsets = [8, 0], sizes = [8, 84], strides = [1, 1]} : vector<112x84xbf16> to vector<8x84xbf16>
    %c1_157 = arith.constant 1 : index
    %c0_158 = arith.constant 0 : index
    %c0_159 = arith.constant 0 : index
    %129 = vector.load %arg13[%c1_157, %c0_158, %c0_159] : memref<2x56x84xbf16, #tpu.memory_space<vmem>>, vector<1x8x84xbf16>
    %130 = vector.shape_cast %129 : vector<1x8x84xbf16> to vector<8x84xbf16>
    %131 = vector.shape_cast %128 : vector<8x84xbf16> to vector<1x8x84xbf16>
    tpu.vector_store %arg13[%c1_157, %c0_158, %c0_159], %131 {strides = array<i32>} : memref<2x56x84xbf16, #tpu.memory_space<vmem>>, vector<1x8x84xbf16>,
    %132 = vector.extract_strided_slice %123 {offsets = [16, 0], sizes = [8, 84], strides = [1, 1]} : vector<112x84xbf16> to vector<8x84xbf16>
    %c0_160 = arith.constant 0 : index
    %c8_161 = arith.constant 8 : index
    %c0_162 = arith.constant 0 : index
    %133 = vector.load %arg13[%c0_160, %c8_161, %c0_162] : memref<2x56x84xbf16, #tpu.memory_space<vmem>>, vector<1x8x84xbf16>
    %134 = vector.shape_cast %133 : vector<1x8x84xbf16> to vector<8x84xbf16>
    %135 = vector.shape_cast %132 : vector<8x84xbf16> to vector<1x8x84xbf16>
    tpu.vector_store %arg13[%c0_160, %c8_161, %c0_162], %135 {strides = array<i32>} : memref<2x56x84xbf16, #tpu.memory_space<vmem>>, vector<1x8x84xbf16>,
    %136 = vector.extract_strided_slice %123 {offsets = [24, 0], sizes = [8, 84], strides = [1, 1]} : vector<112x84xbf16> to vector<8x84xbf16>
    %c1_163 = arith.constant 1 : index
    %c8_164 = arith.constant 8 : index
    %c0_165 = arith.constant 0 : index
    %137 = vector.load %arg13[%c1_163, %c8_164, %c0_165] : memref<2x56x84xbf16, #tpu.memory_space<vmem>>, vector<1x8x84xbf16>
    %138 = vector.shape_cast %137 : vector<1x8x84xbf16> to vector<8x84xbf16>
    %139 = vector.shape_cast %136 : vector<8x84xbf16> to vector<1x8x84xbf16>
    tpu.vector_store %arg13[%c1_163, %c8_164, %c0_165], %139 {strides = array<i32>} : memref<2x56x84xbf16, #tpu.memory_space<vmem>>, vector<1x8x84xbf16>,
    %140 = vector.extract_strided_slice %123 {offsets = [32, 0], sizes = [8, 84], strides = [1, 1]} : vector<112x84xbf16> to vector<8x84xbf16>
    %c0_166 = arith.constant 0 : index
    %c16_167 = arith.constant 16 : index
    %c0_168 = arith.constant 0 : index
    %141 = vector.load %arg13[%c0_166, %c16_167, %c0_168] : memref<2x56x84xbf16, #tpu.memory_space<vmem>>, vector<1x8x84xbf16>
    %142 = vector.shape_cast %141 : vector<1x8x84xbf16> to vector<8x84xbf16>
    %143 = vector.shape_cast %140 : vector<8x84xbf16> to vector<1x8x84xbf16>
    tpu.vector_store %arg13[%c0_166, %c16_167, %c0_168], %143 {strides = array<i32>} : memref<2x56x84xbf16, #tpu.memory_space<vmem>>, vector<1x8x84xbf16>,
    %144 = vector.extract_strided_slice %123 {offsets = [40, 0], sizes = [8, 84], strides = [1, 1]} : vector<112x84xbf16> to vector<8x84xbf16>
    %c1_169 = arith.constant 1 : index
    %c16_170 = arith.constant 16 : index
    %c0_171 = arith.constant 0 : index
    %145 = vector.load %arg13[%c1_169, %c16_170, %c0_171] : memref<2x56x84xbf16, #tpu.memory_space<vmem>>, vector<1x8x84xbf16>
    %146 = vector.shape_cast %145 : vector<1x8x84xbf16> to vector<8x84xbf16>
    %147 = vector.shape_cast %144 : vector<8x84xbf16> to vector<1x8x84xbf16>
    tpu.vector_store %arg13[%c1_169, %c16_170, %c0_171], %147 {strides = array<i32>} : memref<2x56x84xbf16, #tpu.memory_space<vmem>>, vector<1x8x84xbf16>,
    %148 = vector.extract_strided_slice %123 {offsets = [48, 0], sizes = [8, 84], strides = [1, 1]} : vector<112x84xbf16> to vector<8x84xbf16>
    %c0_172 = arith.constant 0 : index
    %c24 = arith.constant 24 : index
    %c0_173 = arith.constant 0 : index
    %149 = vector.load %arg13[%c0_172, %c24, %c0_173] : memref<2x56x84xbf16, #tpu.memory_space<vmem>>, vector<1x8x84xbf16>
    %150 = vector.shape_cast %149 : vector<1x8x84xbf16> to vector<8x84xbf16>
    %151 = vector.shape_cast %148 : vector<8x84xbf16> to vector<1x8x84xbf16>
    tpu.vector_store %arg13[%c0_172, %c24, %c0_173], %151 {strides = array<i32>} : memref<2x56x84xbf16, #tpu.memory_space<vmem>>, vector<1x8x84xbf16>,
    %152 = vector.extract_strided_slice %123 {offsets = [56, 0], sizes = [8, 84], strides = [1, 1]} : vector<112x84xbf16> to vector<8x84xbf16>
    %c1_174 = arith.constant 1 : index
    %c24_175 = arith.constant 24 : index
    %c0_176 = arith.constant 0 : index
    %153 = vector.load %arg13[%c1_174, %c24_175, %c0_176] : memref<2x56x84xbf16, #tpu.memory_space<vmem>>, vector<1x8x84xbf16>
    %154 = vector.shape_cast %153 : vector<1x8x84xbf16> to vector<8x84xbf16>
    %155 = vector.shape_cast %152 : vector<8x84xbf16> to vector<1x8x84xbf16>
    tpu.vector_store %arg13[%c1_174, %c24_175, %c0_176], %155 {strides = array<i32>} : memref<2x56x84xbf16, #tpu.memory_space<vmem>>, vector<1x8x84xbf16>,
    %156 = vector.extract_strided_slice %123 {offsets = [64, 0], sizes = [8, 84], strides = [1, 1]} : vector<112x84xbf16> to vector<8x84xbf16>
    %c0_177 = arith.constant 0 : index
    %c32 = arith.constant 32 : index
    %c0_178 = arith.constant 0 : index
    %157 = vector.load %arg13[%c0_177, %c32, %c0_178] : memref<2x56x84xbf16, #tpu.memory_space<vmem>>, vector<1x8x84xbf16>
    %158 = vector.shape_cast %157 : vector<1x8x84xbf16> to vector<8x84xbf16>
    %159 = vector.shape_cast %156 : vector<8x84xbf16> to vector<1x8x84xbf16>
    tpu.vector_store %arg13[%c0_177, %c32, %c0_178], %159 {strides = array<i32>} : memref<2x56x84xbf16, #tpu.memory_space<vmem>>, vector<1x8x84xbf16>,
    %160 = vector.extract_strided_slice %123 {offsets = [72, 0], sizes = [8, 84], strides = [1, 1]} : vector<112x84xbf16> to vector<8x84xbf16>
    %c1_179 = arith.constant 1 : index
    %c32_180 = arith.constant 32 : index
    %c0_181 = arith.constant 0 : index
    %161 = vector.load %arg13[%c1_179, %c32_180, %c0_181] : memref<2x56x84xbf16, #tpu.memory_space<vmem>>, vector<1x8x84xbf16>
    %162 = vector.shape_cast %161 : vector<1x8x84xbf16> to vector<8x84xbf16>
    %163 = vector.shape_cast %160 : vector<8x84xbf16> to vector<1x8x84xbf16>
    tpu.vector_store %arg13[%c1_179, %c32_180, %c0_181], %163 {strides = array<i32>} : memref<2x56x84xbf16, #tpu.memory_space<vmem>>, vector<1x8x84xbf16>,
    %164 = vector.extract_strided_slice %123 {offsets = [80, 0], sizes = [8, 84], strides = [1, 1]} : vector<112x84xbf16> to vector<8x84xbf16>
    %c0_182 = arith.constant 0 : index
    %c40 = arith.constant 40 : index
    %c0_183 = arith.constant 0 : index
    %165 = vector.load %arg13[%c0_182, %c40, %c0_183] : memref<2x56x84xbf16, #tpu.memory_space<vmem>>, vector<1x8x84xbf16>
    %166 = vector.shape_cast %165 : vector<1x8x84xbf16> to vector<8x84xbf16>
    %167 = vector.shape_cast %164 : vector<8x84xbf16> to vector<1x8x84xbf16>
    tpu.vector_store %arg13[%c0_182, %c40, %c0_183], %167 {strides = array<i32>} : memref<2x56x84xbf16, #tpu.memory_space<vmem>>, vector<1x8x84xbf16>,
    %168 = vector.extract_strided_slice %123 {offsets = [88, 0], sizes = [8, 84], strides = [1, 1]} : vector<112x84xbf16> to vector<8x84xbf16>
    %c1_184 = arith.constant 1 : index
    %c40_185 = arith.constant 40 : index
    %c0_186 = arith.constant 0 : index
    %169 = vector.load %arg13[%c1_184, %c40_185, %c0_186] : memref<2x56x84xbf16, #tpu.memory_space<vmem>>, vector<1x8x84xbf16>
    %170 = vector.shape_cast %169 : vector<1x8x84xbf16> to vector<8x84xbf16>
    %171 = vector.shape_cast %168 : vector<8x84xbf16> to vector<1x8x84xbf16>
    tpu.vector_store %arg13[%c1_184, %c40_185, %c0_186], %171 {strides = array<i32>} : memref<2x56x84xbf16, #tpu.memory_space<vmem>>, vector<1x8x84xbf16>,
    %172 = vector.extract_strided_slice %123 {offsets = [96, 0], sizes = [8, 84], strides = [1, 1]} : vector<112x84xbf16> to vector<8x84xbf16>
    %c0_187 = arith.constant 0 : index
    %c48 = arith.constant 48 : index
    %c0_188 = arith.constant 0 : index
    %173 = vector.load %arg13[%c0_187, %c48, %c0_188] : memref<2x56x84xbf16, #tpu.memory_space<vmem>>, vector<1x8x84xbf16>
    %174 = vector.shape_cast %173 : vector<1x8x84xbf16> to vector<8x84xbf16>
    %175 = vector.shape_cast %172 : vector<8x84xbf16> to vector<1x8x84xbf16>
    tpu.vector_store %arg13[%c0_187, %c48, %c0_188], %175 {strides = array<i32>} : memref<2x56x84xbf16, #tpu.memory_space<vmem>>, vector<1x8x84xbf16>,
    %176 = vector.extract_strided_slice %123 {offsets = [104, 0], sizes = [8, 84], strides = [1, 1]} : vector<112x84xbf16> to vector<8x84xbf16>
    %c1_189 = arith.constant 1 : index
    %c48_190 = arith.constant 48 : index
    %c0_191 = arith.constant 0 : index
    %177 = vector.load %arg13[%c1_189, %c48_190, %c0_191] : memref<2x56x84xbf16, #tpu.memory_space<vmem>>, vector<1x8x84xbf16>
    %178 = vector.shape_cast %177 : vector<1x8x84xbf16> to vector<8x84xbf16>
    %179 = vector.shape_cast %176 : vector<8x84xbf16> to vector<1x8x84xbf16>
    tpu.vector_store %arg13[%c1_189, %c48_190, %c0_191], %179 {strides = array<i32>} : memref<2x56x84xbf16, #tpu.memory_space<vmem>>, vector<1x8x84xbf16>,
    %c0_192 = arith.constant 0 : index
    %c0_193 = arith.constant 0 : index
    %c0_194 = arith.constant 0 : index
    %180 = vector.load %arg13[%c0_192, %c0_193, %c0_194] : memref<2x56x84xbf16, #tpu.memory_space<vmem>>, vector<1x40x84xbf16>
    %181 = vector.shape_cast %180 : vector<1x40x84xbf16> to vector<40x84xbf16>
    %c0_195 = arith.constant 0 : index
    %c0_196 = arith.constant 0 : index
    %c0_197 = arith.constant 0 : index
    %c0_198 = arith.constant 0 : index
    %182 = vector.load %arg4[%c0_195, %c0_196, %c0_197, %c0_198] : memref<2x5x84x80xbf16, #tpu.memory_space<vmem>>, vector<1x1x84x80xbf16>
    %183 = vector.shape_cast %182 : vector<1x1x84x80xbf16> to vector<84x80xbf16>
    %cst_199 = arith.constant dense<0.000000e+00> : vector<40x80xf32>
    %184 = tpu.matmul %181, %183, %cst_199 {dimension_numbers = #tpu.dot_dimension_numbers<[1], [0], [0], [1], [0, 0, 1, 1], [], []>} : vector<40x84xbf16>, vector<84x80xbf16>, vector<40x80xf32> -> vector<40x80xf32>
    %c1_200 = arith.constant 1 : index
    %c0_201 = arith.constant 0 : index
    %c0_202 = arith.constant 0 : index
    %185 = vector.load %arg13[%c1_200, %c0_201, %c0_202] : memref<2x56x84xbf16, #tpu.memory_space<vmem>>, vector<1x40x84xbf16>
    %186 = vector.shape_cast %185 : vector<1x40x84xbf16> to vector<40x84xbf16>
    %c0_203 = arith.constant 0 : index
    %c1_204 = arith.constant 1 : index
    %c0_205 = arith.constant 0 : index
    %c0_206 = arith.constant 0 : index
    %187 = vector.load %arg4[%c0_203, %c1_204, %c0_205, %c0_206] : memref<2x5x84x80xbf16, #tpu.memory_space<vmem>>, vector<1x1x84x80xbf16>
    %188 = vector.shape_cast %187 : vector<1x1x84x80xbf16> to vector<84x80xbf16>
    %cst_207 = arith.constant dense<0.000000e+00> : vector<40x80xf32>
    %189 = tpu.matmul %186, %188, %cst_207 {dimension_numbers = #tpu.dot_dimension_numbers<[1], [0], [0], [1], [0, 0, 1, 1], [], []>} : vector<40x84xbf16>, vector<84x80xbf16>, vector<40x80xf32> -> vector<40x80xf32>
    %190 = arith.addf %184, %189 : vector<40x80xf32>
    %c0_208 = arith.constant 0 : index
    %c8_209 = arith.constant 8 : index
    %c0_210 = arith.constant 0 : index
    %191 = vector.load %arg13[%c0_208, %c8_209, %c0_210] : memref<2x56x84xbf16, #tpu.memory_space<vmem>>, vector<1x40x84xbf16>
    %192 = vector.shape_cast %191 : vector<1x40x84xbf16> to vector<40x84xbf16>
    %c0_211 = arith.constant 0 : index
    %c2_212 = arith.constant 2 : index
    %c0_213 = arith.constant 0 : index
    %c0_214 = arith.constant 0 : index
    %193 = vector.load %arg4[%c0_211, %c2_212, %c0_213, %c0_214] : memref<2x5x84x80xbf16, #tpu.memory_space<vmem>>, vector<1x1x84x80xbf16>
    %194 = vector.shape_cast %193 : vector<1x1x84x80xbf16> to vector<84x80xbf16>
    %cst_215 = arith.constant dense<0.000000e+00> : vector<40x80xf32>
    %195 = tpu.matmul %192, %194, %cst_215 {dimension_numbers = #tpu.dot_dimension_numbers<[1], [0], [0], [1], [0, 0, 1, 1], [], []>} : vector<40x84xbf16>, vector<84x80xbf16>, vector<40x80xf32> -> vector<40x80xf32>
    %196 = arith.addf %190, %195 : vector<40x80xf32>
    %c1_216 = arith.constant 1 : index
    %c8_217 = arith.constant 8 : index
    %c0_218 = arith.constant 0 : index
    %197 = vector.load %arg13[%c1_216, %c8_217, %c0_218] : memref<2x56x84xbf16, #tpu.memory_space<vmem>>, vector<1x40x84xbf16>
    %198 = vector.shape_cast %197 : vector<1x40x84xbf16> to vector<40x84xbf16>
    %c0_219 = arith.constant 0 : index
    %c3_220 = arith.constant 3 : index
    %c0_221 = arith.constant 0 : index
    %c0_222 = arith.constant 0 : index
    %199 = vector.load %arg4[%c0_219, %c3_220, %c0_221, %c0_222] : memref<2x5x84x80xbf16, #tpu.memory_space<vmem>>, vector<1x1x84x80xbf16>
    %200 = vector.shape_cast %199 : vector<1x1x84x80xbf16> to vector<84x80xbf16>
    %cst_223 = arith.constant dense<0.000000e+00> : vector<40x80xf32>
    %201 = tpu.matmul %198, %200, %cst_223 {dimension_numbers = #tpu.dot_dimension_numbers<[1], [0], [0], [1], [0, 0, 1, 1], [], []>} : vector<40x84xbf16>, vector<84x80xbf16>, vector<40x80xf32> -> vector<40x80xf32>
    %202 = arith.addf %196, %201 : vector<40x80xf32>
    %c0_224 = arith.constant 0 : index
    %c16_225 = arith.constant 16 : index
    %c0_226 = arith.constant 0 : index
    %203 = vector.load %arg13[%c0_224, %c16_225, %c0_226] : memref<2x56x84xbf16, #tpu.memory_space<vmem>>, vector<1x40x84xbf16>
    %204 = vector.shape_cast %203 : vector<1x40x84xbf16> to vector<40x84xbf16>
    %c0_227 = arith.constant 0 : index
    %c4_228 = arith.constant 4 : index
    %c0_229 = arith.constant 0 : index
    %c0_230 = arith.constant 0 : index
    %205 = vector.load %arg4[%c0_227, %c4_228, %c0_229, %c0_230] : memref<2x5x84x80xbf16, #tpu.memory_space<vmem>>, vector<1x1x84x80xbf16>
    %206 = vector.shape_cast %205 : vector<1x1x84x80xbf16> to vector<84x80xbf16>
    %cst_231 = arith.constant dense<0.000000e+00> : vector<40x80xf32>
    %207 = tpu.matmul %204, %206, %cst_231 {dimension_numbers = #tpu.dot_dimension_numbers<[1], [0], [0], [1], [0, 0, 1, 1], [], []>} : vector<40x84xbf16>, vector<84x80xbf16>, vector<40x80xf32> -> vector<40x80xf32>
    %208 = arith.addf %202, %207 : vector<40x80xf32>
    %c0_232 = arith.constant 0 : index
    %c0_233 = arith.constant 0 : index
    %c0_234 = arith.constant 0 : index
    %209 = vector.load %arg13[%c0_232, %c0_233, %c0_234] : memref<2x56x84xbf16, #tpu.memory_space<vmem>>, vector<1x40x84xbf16>
    %210 = vector.shape_cast %209 : vector<1x40x84xbf16> to vector<40x84xbf16>
    %c1_235 = arith.constant 1 : index
    %c0_236 = arith.constant 0 : index
    %c0_237 = arith.constant 0 : index
    %c0_238 = arith.constant 0 : index
    %211 = vector.load %arg4[%c1_235, %c0_236, %c0_237, %c0_238] : memref<2x5x84x80xbf16, #tpu.memory_space<vmem>>, vector<1x1x84x80xbf16>
    %212 = vector.shape_cast %211 : vector<1x1x84x80xbf16> to vector<84x80xbf16>
    %cst_239 = arith.constant dense<0.000000e+00> : vector<40x80xf32>
    %213 = tpu.matmul %210, %212, %cst_239 {dimension_numbers = #tpu.dot_dimension_numbers<[1], [0], [0], [1], [0, 0, 1, 1], [], []>} : vector<40x84xbf16>, vector<84x80xbf16>, vector<40x80xf32> -> vector<40x80xf32>
    %c1_240 = arith.constant 1 : index
    %c0_241 = arith.constant 0 : index
    %c0_242 = arith.constant 0 : index
    %214 = vector.load %arg13[%c1_240, %c0_241, %c0_242] : memref<2x56x84xbf16, #tpu.memory_space<vmem>>, vector<1x40x84xbf16>
    %215 = vector.shape_cast %214 : vector<1x40x84xbf16> to vector<40x84xbf16>
    %c1_243 = arith.constant 1 : index
    %c1_244 = arith.constant 1 : index
    %c0_245 = arith.constant 0 : index
    %c0_246 = arith.constant 0 : index
    %216 = vector.load %arg4[%c1_243, %c1_244, %c0_245, %c0_246] : memref<2x5x84x80xbf16, #tpu.memory_space<vmem>>, vector<1x1x84x80xbf16>
    %217 = vector.shape_cast %216 : vector<1x1x84x80xbf16> to vector<84x80xbf16>
    %cst_247 = arith.constant dense<0.000000e+00> : vector<40x80xf32>
    %218 = tpu.matmul %215, %217, %cst_247 {dimension_numbers = #tpu.dot_dimension_numbers<[1], [0], [0], [1], [0, 0, 1, 1], [], []>} : vector<40x84xbf16>, vector<84x80xbf16>, vector<40x80xf32> -> vector<40x80xf32>
    %219 = arith.addf %213, %218 : vector<40x80xf32>
    %c0_248 = arith.constant 0 : index
    %c8_249 = arith.constant 8 : index
    %c0_250 = arith.constant 0 : index
    %220 = vector.load %arg13[%c0_248, %c8_249, %c0_250] : memref<2x56x84xbf16, #tpu.memory_space<vmem>>, vector<1x40x84xbf16>
    %221 = vector.shape_cast %220 : vector<1x40x84xbf16> to vector<40x84xbf16>
    %c1_251 = arith.constant 1 : index
    %c2_252 = arith.constant 2 : index
    %c0_253 = arith.constant 0 : index
    %c0_254 = arith.constant 0 : index
    %222 = vector.load %arg4[%c1_251, %c2_252, %c0_253, %c0_254] : memref<2x5x84x80xbf16, #tpu.memory_space<vmem>>, vector<1x1x84x80xbf16>
    %223 = vector.shape_cast %222 : vector<1x1x84x80xbf16> to vector<84x80xbf16>
    %cst_255 = arith.constant dense<0.000000e+00> : vector<40x80xf32>
    %224 = tpu.matmul %221, %223, %cst_255 {dimension_numbers = #tpu.dot_dimension_numbers<[1], [0], [0], [1], [0, 0, 1, 1], [], []>} : vector<40x84xbf16>, vector<84x80xbf16>, vector<40x80xf32> -> vector<40x80xf32>
    %225 = arith.addf %219, %224 : vector<40x80xf32>
    %c1_256 = arith.constant 1 : index
    %c8_257 = arith.constant 8 : index
    %c0_258 = arith.constant 0 : index
    %226 = vector.load %arg13[%c1_256, %c8_257, %c0_258] : memref<2x56x84xbf16, #tpu.memory_space<vmem>>, vector<1x40x84xbf16>
    %227 = vector.shape_cast %226 : vector<1x40x84xbf16> to vector<40x84xbf16>
    %c1_259 = arith.constant 1 : index
    %c3_260 = arith.constant 3 : index
    %c0_261 = arith.constant 0 : index
    %c0_262 = arith.constant 0 : index
    %228 = vector.load %arg4[%c1_259, %c3_260, %c0_261, %c0_262] : memref<2x5x84x80xbf16, #tpu.memory_space<vmem>>, vector<1x1x84x80xbf16>
    %229 = vector.shape_cast %228 : vector<1x1x84x80xbf16> to vector<84x80xbf16>
    %cst_263 = arith.constant dense<0.000000e+00> : vector<40x80xf32>
    %230 = tpu.matmul %227, %229, %cst_263 {dimension_numbers = #tpu.dot_dimension_numbers<[1], [0], [0], [1], [0, 0, 1, 1], [], []>} : vector<40x84xbf16>, vector<84x80xbf16>, vector<40x80xf32> -> vector<40x80xf32>
    %231 = arith.addf %225, %230 : vector<40x80xf32>
    %c0_264 = arith.constant 0 : index
    %c16_265 = arith.constant 16 : index
    %c0_266 = arith.constant 0 : index
    %232 = vector.load %arg13[%c0_264, %c16_265, %c0_266] : memref<2x56x84xbf16, #tpu.memory_space<vmem>>, vector<1x40x84xbf16>
    %233 = vector.shape_cast %232 : vector<1x40x84xbf16> to vector<40x84xbf16>
    %c1_267 = arith.constant 1 : index
    %c4_268 = arith.constant 4 : index
    %c0_269 = arith.constant 0 : index
    %c0_270 = arith.constant 0 : index
    %234 = vector.load %arg4[%c1_267, %c4_268, %c0_269, %c0_270] : memref<2x5x84x80xbf16, #tpu.memory_space<vmem>>, vector<1x1x84x80xbf16>
    %235 = vector.shape_cast %234 : vector<1x1x84x80xbf16> to vector<84x80xbf16>
    %cst_271 = arith.constant dense<0.000000e+00> : vector<40x80xf32>
    %236 = tpu.matmul %233, %235, %cst_271 {dimension_numbers = #tpu.dot_dimension_numbers<[1], [0], [0], [1], [0, 0, 1, 1], [], []>} : vector<40x84xbf16>, vector<84x80xbf16>, vector<40x80xf32> -> vector<40x80xf32>
    %237 = arith.addf %231, %236 : vector<40x80xf32>
    %238 = arith.maximumf %208, %237 : vector<40x80xf32>
    %c1_272 = arith.constant 1 : index
    %c0_273 = arith.constant 0 : index
    %c0_274 = arith.constant 0 : index
    %239 = vector.load %arg13[%c1_272, %c0_273, %c0_274] : memref<2x56x84xbf16, #tpu.memory_space<vmem>>, vector<1x40x84xbf16>
    %240 = vector.shape_cast %239 : vector<1x40x84xbf16> to vector<40x84xbf16>
    %c0_275 = arith.constant 0 : index
    %c0_276 = arith.constant 0 : index
    %c0_277 = arith.constant 0 : index
    %c0_278 = arith.constant 0 : index
    %241 = vector.load %arg4[%c0_275, %c0_276, %c0_277, %c0_278] : memref<2x5x84x80xbf16, #tpu.memory_space<vmem>>, vector<1x1x84x80xbf16>
    %242 = vector.shape_cast %241 : vector<1x1x84x80xbf16> to vector<84x80xbf16>
    %cst_279 = arith.constant dense<0.000000e+00> : vector<40x80xf32>
    %243 = tpu.matmul %240, %242, %cst_279 {dimension_numbers = #tpu.dot_dimension_numbers<[1], [0], [0], [1], [0, 0, 1, 1], [], []>} : vector<40x84xbf16>, vector<84x80xbf16>, vector<40x80xf32> -> vector<40x80xf32>
    %c0_280 = arith.constant 0 : index
    %c8_281 = arith.constant 8 : index
    %c0_282 = arith.constant 0 : index
    %244 = vector.load %arg13[%c0_280, %c8_281, %c0_282] : memref<2x56x84xbf16, #tpu.memory_space<vmem>>, vector<1x40x84xbf16>
    %245 = vector.shape_cast %244 : vector<1x40x84xbf16> to vector<40x84xbf16>
    %c0_283 = arith.constant 0 : index
    %c1_284 = arith.constant 1 : index
    %c0_285 = arith.constant 0 : index
    %c0_286 = arith.constant 0 : index
    %246 = vector.load %arg4[%c0_283, %c1_284, %c0_285, %c0_286] : memref<2x5x84x80xbf16, #tpu.memory_space<vmem>>, vector<1x1x84x80xbf16>
    %247 = vector.shape_cast %246 : vector<1x1x84x80xbf16> to vector<84x80xbf16>
    %cst_287 = arith.constant dense<0.000000e+00> : vector<40x80xf32>
    %248 = tpu.matmul %245, %247, %cst_287 {dimension_numbers = #tpu.dot_dimension_numbers<[1], [0], [0], [1], [0, 0, 1, 1], [], []>} : vector<40x84xbf16>, vector<84x80xbf16>, vector<40x80xf32> -> vector<40x80xf32>
    %249 = arith.addf %243, %248 : vector<40x80xf32>
    %c1_288 = arith.constant 1 : index
    %c8_289 = arith.constant 8 : index
    %c0_290 = arith.constant 0 : index
    %250 = vector.load %arg13[%c1_288, %c8_289, %c0_290] : memref<2x56x84xbf16, #tpu.memory_space<vmem>>, vector<1x40x84xbf16>
    %251 = vector.shape_cast %250 : vector<1x40x84xbf16> to vector<40x84xbf16>
    %c0_291 = arith.constant 0 : index
    %c2_292 = arith.constant 2 : index
    %c0_293 = arith.constant 0 : index
    %c0_294 = arith.constant 0 : index
    %252 = vector.load %arg4[%c0_291, %c2_292, %c0_293, %c0_294] : memref<2x5x84x80xbf16, #tpu.memory_space<vmem>>, vector<1x1x84x80xbf16>
    %253 = vector.shape_cast %252 : vector<1x1x84x80xbf16> to vector<84x80xbf16>
    %cst_295 = arith.constant dense<0.000000e+00> : vector<40x80xf32>
    %254 = tpu.matmul %251, %253, %cst_295 {dimension_numbers = #tpu.dot_dimension_numbers<[1], [0], [0], [1], [0, 0, 1, 1], [], []>} : vector<40x84xbf16>, vector<84x80xbf16>, vector<40x80xf32> -> vector<40x80xf32>
    %255 = arith.addf %249, %254 : vector<40x80xf32>
    %c0_296 = arith.constant 0 : index
    %c16_297 = arith.constant 16 : index
    %c0_298 = arith.constant 0 : index
    %256 = vector.load %arg13[%c0_296, %c16_297, %c0_298] : memref<2x56x84xbf16, #tpu.memory_space<vmem>>, vector<1x40x84xbf16>
    %257 = vector.shape_cast %256 : vector<1x40x84xbf16> to vector<40x84xbf16>
    %c0_299 = arith.constant 0 : index
    %c3_300 = arith.constant 3 : index
    %c0_301 = arith.constant 0 : index
    %c0_302 = arith.constant 0 : index
    %258 = vector.load %arg4[%c0_299, %c3_300, %c0_301, %c0_302] : memref<2x5x84x80xbf16, #tpu.memory_space<vmem>>, vector<1x1x84x80xbf16>
    %259 = vector.shape_cast %258 : vector<1x1x84x80xbf16> to vector<84x80xbf16>
    %cst_303 = arith.constant dense<0.000000e+00> : vector<40x80xf32>
    %260 = tpu.matmul %257, %259, %cst_303 {dimension_numbers = #tpu.dot_dimension_numbers<[1], [0], [0], [1], [0, 0, 1, 1], [], []>} : vector<40x84xbf16>, vector<84x80xbf16>, vector<40x80xf32> -> vector<40x80xf32>
    %261 = arith.addf %255, %260 : vector<40x80xf32>
    %c1_304 = arith.constant 1 : index
    %c16_305 = arith.constant 16 : index
    %c0_306 = arith.constant 0 : index
    %262 = vector.load %arg13[%c1_304, %c16_305, %c0_306] : memref<2x56x84xbf16, #tpu.memory_space<vmem>>, vector<1x40x84xbf16>
    %263 = vector.shape_cast %262 : vector<1x40x84xbf16> to vector<40x84xbf16>
    %c0_307 = arith.constant 0 : index
    %c4_308 = arith.constant 4 : index
    %c0_309 = arith.constant 0 : index
    %c0_310 = arith.constant 0 : index
    %264 = vector.load %arg4[%c0_307, %c4_308, %c0_309, %c0_310] : memref<2x5x84x80xbf16, #tpu.memory_space<vmem>>, vector<1x1x84x80xbf16>
    %265 = vector.shape_cast %264 : vector<1x1x84x80xbf16> to vector<84x80xbf16>
    %cst_311 = arith.constant dense<0.000000e+00> : vector<40x80xf32>
    %266 = tpu.matmul %263, %265, %cst_311 {dimension_numbers = #tpu.dot_dimension_numbers<[1], [0], [0], [1], [0, 0, 1, 1], [], []>} : vector<40x84xbf16>, vector<84x80xbf16>, vector<40x80xf32> -> vector<40x80xf32>
    %267 = arith.addf %261, %266 : vector<40x80xf32>
    %268 = arith.maximumf %238, %267 : vector<40x80xf32>
    %c1_312 = arith.constant 1 : index
    %c0_313 = arith.constant 0 : index
    %c0_314 = arith.constant 0 : index
    %269 = vector.load %arg13[%c1_312, %c0_313, %c0_314] : memref<2x56x84xbf16, #tpu.memory_space<vmem>>, vector<1x40x84xbf16>
    %270 = vector.shape_cast %269 : vector<1x40x84xbf16> to vector<40x84xbf16>
    %c1_315 = arith.constant 1 : index
    %c0_316 = arith.constant 0 : index
    %c0_317 = arith.constant 0 : index
    %c0_318 = arith.constant 0 : index
    %271 = vector.load %arg4[%c1_315, %c0_316, %c0_317, %c0_318] : memref<2x5x84x80xbf16, #tpu.memory_space<vmem>>, vector<1x1x84x80xbf16>
    %272 = vector.shape_cast %271 : vector<1x1x84x80xbf16> to vector<84x80xbf16>
    %cst_319 = arith.constant dense<0.000000e+00> : vector<40x80xf32>
    %273 = tpu.matmul %270, %272, %cst_319 {dimension_numbers = #tpu.dot_dimension_numbers<[1], [0], [0], [1], [0, 0, 1, 1], [], []>} : vector<40x84xbf16>, vector<84x80xbf16>, vector<40x80xf32> -> vector<40x80xf32>
    %c0_320 = arith.constant 0 : index
    %c8_321 = arith.constant 8 : index
    %c0_322 = arith.constant 0 : index
    %274 = vector.load %arg13[%c0_320, %c8_321, %c0_322] : memref<2x56x84xbf16, #tpu.memory_space<vmem>>, vector<1x40x84xbf16>
    %275 = vector.shape_cast %274 : vector<1x40x84xbf16> to vector<40x84xbf16>
    %c1_323 = arith.constant 1 : index
    %c1_324 = arith.constant 1 : index
    %c0_325 = arith.constant 0 : index
    %c0_326 = arith.constant 0 : index
    %276 = vector.load %arg4[%c1_323, %c1_324, %c0_325, %c0_326] : memref<2x5x84x80xbf16, #tpu.memory_space<vmem>>, vector<1x1x84x80xbf16>
    %277 = vector.shape_cast %276 : vector<1x1x84x80xbf16> to vector<84x80xbf16>
    %cst_327 = arith.constant dense<0.000000e+00> : vector<40x80xf32>
    %278 = tpu.matmul %275, %277, %cst_327 {dimension_numbers = #tpu.dot_dimension_numbers<[1], [0], [0], [1], [0, 0, 1, 1], [], []>} : vector<40x84xbf16>, vector<84x80xbf16>, vector<40x80xf32> -> vector<40x80xf32>
    %279 = arith.addf %273, %278 : vector<40x80xf32>
    %c1_328 = arith.constant 1 : index
    %c8_329 = arith.constant 8 : index
    %c0_330 = arith.constant 0 : index
    %280 = vector.load %arg13[%c1_328, %c8_329, %c0_330] : memref<2x56x84xbf16, #tpu.memory_space<vmem>>, vector<1x40x84xbf16>
    %281 = vector.shape_cast %280 : vector<1x40x84xbf16> to vector<40x84xbf16>
    %c1_331 = arith.constant 1 : index
    %c2_332 = arith.constant 2 : index
    %c0_333 = arith.constant 0 : index
    %c0_334 = arith.constant 0 : index
    %282 = vector.load %arg4[%c1_331, %c2_332, %c0_333, %c0_334] : memref<2x5x84x80xbf16, #tpu.memory_space<vmem>>, vector<1x1x84x80xbf16>
    %283 = vector.shape_cast %282 : vector<1x1x84x80xbf16> to vector<84x80xbf16>
    %cst_335 = arith.constant dense<0.000000e+00> : vector<40x80xf32>
    %284 = tpu.matmul %281, %283, %cst_335 {dimension_numbers = #tpu.dot_dimension_numbers<[1], [0], [0], [1], [0, 0, 1, 1], [], []>} : vector<40x84xbf16>, vector<84x80xbf16>, vector<40x80xf32> -> vector<40x80xf32>
    %285 = arith.addf %279, %284 : vector<40x80xf32>
    %c0_336 = arith.constant 0 : index
    %c16_337 = arith.constant 16 : index
    %c0_338 = arith.constant 0 : index
    %286 = vector.load %arg13[%c0_336, %c16_337, %c0_338] : memref<2x56x84xbf16, #tpu.memory_space<vmem>>, vector<1x40x84xbf16>
    %287 = vector.shape_cast %286 : vector<1x40x84xbf16> to vector<40x84xbf16>
    %c1_339 = arith.constant 1 : index
    %c3_340 = arith.constant 3 : index
    %c0_341 = arith.constant 0 : index
    %c0_342 = arith.constant 0 : index
    %288 = vector.load %arg4[%c1_339, %c3_340, %c0_341, %c0_342] : memref<2x5x84x80xbf16, #tpu.memory_space<vmem>>, vector<1x1x84x80xbf16>
    %289 = vector.shape_cast %288 : vector<1x1x84x80xbf16> to vector<84x80xbf16>
    %cst_343 = arith.constant dense<0.000000e+00> : vector<40x80xf32>
    %290 = tpu.matmul %287, %289, %cst_343 {dimension_numbers = #tpu.dot_dimension_numbers<[1], [0], [0], [1], [0, 0, 1, 1], [], []>} : vector<40x84xbf16>, vector<84x80xbf16>, vector<40x80xf32> -> vector<40x80xf32>
    %291 = arith.addf %285, %290 : vector<40x80xf32>
    %c1_344 = arith.constant 1 : index
    %c16_345 = arith.constant 16 : index
    %c0_346 = arith.constant 0 : index
    %292 = vector.load %arg13[%c1_344, %c16_345, %c0_346] : memref<2x56x84xbf16, #tpu.memory_space<vmem>>, vector<1x40x84xbf16>
    %293 = vector.shape_cast %292 : vector<1x40x84xbf16> to vector<40x84xbf16>
    %c1_347 = arith.constant 1 : index
    %c4_348 = arith.constant 4 : index
    %c0_349 = arith.constant 0 : index
    %c0_350 = arith.constant 0 : index
    %294 = vector.load %arg4[%c1_347, %c4_348, %c0_349, %c0_350] : memref<2x5x84x80xbf16, #tpu.memory_space<vmem>>, vector<1x1x84x80xbf16>
    %295 = vector.shape_cast %294 : vector<1x1x84x80xbf16> to vector<84x80xbf16>
    %cst_351 = arith.constant dense<0.000000e+00> : vector<40x80xf32>
    %296 = tpu.matmul %293, %295, %cst_351 {dimension_numbers = #tpu.dot_dimension_numbers<[1], [0], [0], [1], [0, 0, 1, 1], [], []>} : vector<40x84xbf16>, vector<84x80xbf16>, vector<40x80xf32> -> vector<40x80xf32>
    %297 = arith.addf %291, %296 : vector<40x80xf32>
    %298 = arith.maximumf %268, %297 : vector<40x80xf32>
    %c0_352 = arith.constant 0 : index
    %c0_353 = arith.constant 0 : index
    %299 = vector.load %arg5[%c0_352, %c0_353] : memref<1x80xf32, #tpu.memory_space<vmem>>, vector<1x80xf32>
    %300 = vector.broadcast %299 : vector<1x80xf32> to vector<40x80xf32>
    %301 = arith.addf %298, %300 : vector<40x80xf32>
    %302 = math.tanh %301 : vector<40x80xf32>
    %303 = arith.truncf %302 : vector<40x80xf32> to vector<40x80xbf16>
    %304 = vector.extract_strided_slice %303 {offsets = [0, 0], sizes = [8, 80], strides = [1, 1]} : vector<40x80xbf16> to vector<8x80xbf16>
    %c0_354 = arith.constant 0 : index
    %c0_355 = arith.constant 0 : index
    %305 = vector.load %arg14[%c0_354, %c0_355] : memref<8x400xbf16, #tpu.memory_space<vmem>>, vector<8x80xbf16>
    tpu.vector_store %arg14[%c0_354, %c0_355], %304 {strides = array<i32>} : memref<8x400xbf16, #tpu.memory_space<vmem>>, vector<8x80xbf16>,
    %306 = vector.extract_strided_slice %303 {offsets = [8, 0], sizes = [8, 80], strides = [1, 1]} : vector<40x80xbf16> to vector<8x80xbf16>
    %c0_356 = arith.constant 0 : index
    %c80 = arith.constant 80 : index
    %307 = vector.load %arg14[%c0_356, %c80] : memref<8x400xbf16, #tpu.memory_space<vmem>>, vector<8x80xbf16>
    tpu.vector_store %arg14[%c0_356, %c80], %306 {strides = array<i32>} : memref<8x400xbf16, #tpu.memory_space<vmem>>, vector<8x80xbf16>,
    %308 = vector.extract_strided_slice %303 {offsets = [16, 0], sizes = [8, 80], strides = [1, 1]} : vector<40x80xbf16> to vector<8x80xbf16>
    %c0_357 = arith.constant 0 : index
    %c160 = arith.constant 160 : index
    %309 = vector.load %arg14[%c0_357, %c160] : memref<8x400xbf16, #tpu.memory_space<vmem>>, vector<8x80xbf16>
    tpu.vector_store %arg14[%c0_357, %c160], %308 {strides = array<i32>} : memref<8x400xbf16, #tpu.memory_space<vmem>>, vector<8x80xbf16>,
    %310 = vector.extract_strided_slice %303 {offsets = [24, 0], sizes = [8, 80], strides = [1, 1]} : vector<40x80xbf16> to vector<8x80xbf16>
    %c0_358 = arith.constant 0 : index
    %c240 = arith.constant 240 : index
    %311 = vector.load %arg14[%c0_358, %c240] : memref<8x400xbf16, #tpu.memory_space<vmem>>, vector<8x80xbf16>
    tpu.vector_store %arg14[%c0_358, %c240], %310 {strides = array<i32>} : memref<8x400xbf16, #tpu.memory_space<vmem>>, vector<8x80xbf16>,
    %312 = vector.extract_strided_slice %303 {offsets = [32, 0], sizes = [8, 80], strides = [1, 1]} : vector<40x80xbf16> to vector<8x80xbf16>
    %c0_359 = arith.constant 0 : index
    %c320 = arith.constant 320 : index
    %313 = vector.load %arg14[%c0_359, %c320] : memref<8x400xbf16, #tpu.memory_space<vmem>>, vector<8x80xbf16>
    tpu.vector_store %arg14[%c0_359, %c320], %312 {strides = array<i32>} : memref<8x400xbf16, #tpu.memory_space<vmem>>, vector<8x80xbf16>,
    %c0_360 = arith.constant 0 : index
    %c0_361 = arith.constant 0 : index
    %314 = vector.load %arg14[%c0_360, %c0_361] : memref<8x400xbf16, #tpu.memory_space<vmem>>, vector<8x400xbf16>
    %c0_362 = arith.constant 0 : index
    %c0_363 = arith.constant 0 : index
    %315 = vector.load %arg6[%c0_362, %c0_363] : memref<400x120xbf16, #tpu.memory_space<vmem>>, vector<400x120xbf16>
    %cst_364 = arith.constant dense<0.000000e+00> : vector<8x120xf32>
    %316 = tpu.matmul %314, %315, %cst_364 {dimension_numbers = #tpu.dot_dimension_numbers<[1], [0], [0], [1], [0, 0, 1, 1], [], []>} : vector<8x400xbf16>, vector<400x120xbf16>, vector<8x120xf32> -> vector<8x120xf32>
    %c0_365 = arith.constant 0 : index
    %c0_366 = arith.constant 0 : index
    %317 = vector.load %arg7[%c0_365, %c0_366] : memref<1x120xf32, #tpu.memory_space<vmem>>, vector<1x120xf32>
    %318 = vector.broadcast %317 : vector<1x120xf32> to vector<8x120xf32>
    %319 = arith.addf %316, %318 : vector<8x120xf32>
    %320 = math.tanh %319 : vector<8x120xf32>
    %321 = arith.truncf %320 : vector<8x120xf32> to vector<8x120xbf16>
    %c0_367 = arith.constant 0 : index
    %c0_368 = arith.constant 0 : index
    %322 = vector.load %arg8[%c0_367, %c0_368] : memref<120x84xbf16, #tpu.memory_space<vmem>>, vector<120x84xbf16>
    %cst_369 = arith.constant dense<0.000000e+00> : vector<8x84xf32>
    %323 = tpu.matmul %321, %322, %cst_369 {dimension_numbers = #tpu.dot_dimension_numbers<[1], [0], [0], [1], [0, 0, 1, 1], [], []>} : vector<8x120xbf16>, vector<120x84xbf16>, vector<8x84xf32> -> vector<8x84xf32>
    %c0_370 = arith.constant 0 : index
    %c0_371 = arith.constant 0 : index
    %324 = vector.load %arg9[%c0_370, %c0_371] : memref<1x84xf32, #tpu.memory_space<vmem>>, vector<1x84xf32>
    %325 = vector.broadcast %324 : vector<1x84xf32> to vector<8x84xf32>
    %326 = arith.addf %323, %325 : vector<8x84xf32>
    %327 = math.tanh %326 : vector<8x84xf32>
    %328 = arith.truncf %327 : vector<8x84xf32> to vector<8x84xbf16>
    %c0_372 = arith.constant 0 : index
    %c0_373 = arith.constant 0 : index
    %329 = vector.load %arg10[%c0_372, %c0_373] : memref<84x10xbf16, #tpu.memory_space<vmem>>, vector<84x10xbf16>
    %cst_374 = arith.constant dense<0.000000e+00> : vector<8x10xf32>
    %330 = tpu.matmul %328, %329, %cst_374 {dimension_numbers = #tpu.dot_dimension_numbers<[1], [0], [0], [1], [0, 0, 1, 1], [], []>} : vector<8x84xbf16>, vector<84x10xbf16>, vector<8x10xf32> -> vector<8x10xf32>
    %c0_375 = arith.constant 0 : index
    %c0_376 = arith.constant 0 : index
    %331 = vector.load %arg11[%c0_375, %c0_376] : memref<1x10xf32, #tpu.memory_space<vmem>>, vector<1x10xf32>
    %332 = vector.broadcast %331 : vector<1x10xf32> to vector<8x10xf32>
    %333 = arith.addf %330, %332 : vector<8x10xf32>
    %c0_377 = arith.constant 0 : index
    %c0_378 = arith.constant 0 : index
    %334 = vector.load %arg12[%c0_377, %c0_378] : memref<8x10xf32, #tpu.memory_space<vmem>>, vector<8x10xf32>
    tpu.vector_store %arg12[%c0_377, %c0_378], %333 {strides = array<i32>} : memref<8x10xf32, #tpu.memory_space<vmem>>, vector<8x10xf32>,
    return
  }
  func.func @transform_0(%arg0: i32) -> (i32, i32, i32) {
    %c0_i32 = arith.constant 0 : i32
    %c0_i32_0 = arith.constant 0 : i32
    %c0_i32_1 = arith.constant 0 : i32
    return %c0_i32, %arg0, %c0_i32_0 : i32, i32, i32
  }
  func.func @transform_1(%arg0: i32) -> (i32, i32, i32, i32) {
    %c0_i32 = arith.constant 0 : i32
    %c0_i32_0 = arith.constant 0 : i32
    %c0_i32_1 = arith.constant 0 : i32
    %c0_i32_2 = arith.constant 0 : i32
    %c0_i32_3 = arith.constant 0 : i32
    return %c0_i32, %c0_i32_0, %c0_i32_1, %c0_i32_2 : i32, i32, i32, i32
  }
  func.func @transform_2(%arg0: i32) -> (i32, i32) {
    %c0_i32 = arith.constant 0 : i32
    %c0_i32_0 = arith.constant 0 : i32
    %c0_i32_1 = arith.constant 0 : i32
    return %c0_i32, %c0_i32_0 : i32, i32
  }
  func.func @transform_3(%arg0: i32) -> (i32, i32, i32, i32) {
    %c0_i32 = arith.constant 0 : i32
    %c0_i32_0 = arith.constant 0 : i32
    %c0_i32_1 = arith.constant 0 : i32
    %c0_i32_2 = arith.constant 0 : i32
    %c0_i32_3 = arith.constant 0 : i32
    return %c0_i32, %c0_i32_0, %c0_i32_1, %c0_i32_2 : i32, i32, i32, i32
  }
  func.func @transform_4(%arg0: i32) -> (i32, i32) {
    %c0_i32 = arith.constant 0 : i32
    %c0_i32_0 = arith.constant 0 : i32
    %c0_i32_1 = arith.constant 0 : i32
    return %c0_i32, %c0_i32_0 : i32, i32
  }
  func.func @transform_5(%arg0: i32) -> (i32, i32) {
    %c0_i32 = arith.constant 0 : i32
    %c0_i32_0 = arith.constant 0 : i32
    %c0_i32_1 = arith.constant 0 : i32
    return %c0_i32, %c0_i32_0 : i32, i32
  }
  func.func @transform_6(%arg0: i32) -> (i32, i32) {
    %c0_i32 = arith.constant 0 : i32
    %c0_i32_0 = arith.constant 0 : i32
    %c0_i32_1 = arith.constant 0 : i32
    return %c0_i32, %c0_i32_0 : i32, i32
  }
  func.func @transform_7(%arg0: i32) -> (i32, i32) {
    %c0_i32 = arith.constant 0 : i32
    %c0_i32_0 = arith.constant 0 : i32
    %c0_i32_1 = arith.constant 0 : i32
    return %c0_i32, %c0_i32_0 : i32, i32
  }
  func.func @transform_8(%arg0: i32) -> (i32, i32) {
    %c0_i32 = arith.constant 0 : i32
    %c0_i32_0 = arith.constant 0 : i32
    %c0_i32_1 = arith.constant 0 : i32
    return %c0_i32, %c0_i32_0 : i32, i32
  }
  func.func @transform_9(%arg0: i32) -> (i32, i32) {
    %c0_i32 = arith.constant 0 : i32
    %c0_i32_0 = arith.constant 0 : i32
    %c0_i32_1 = arith.constant 0 : i32
    return %c0_i32, %c0_i32_0 : i32, i32
  }
  func.func @transform_10(%arg0: i32) -> (i32, i32) {
    %c0_i32 = arith.constant 0 : i32
    %c0_i32_0 = arith.constant 0 : i32
    %c0_i32_1 = arith.constant 0 : i32
    return %c0_i32, %c0_i32_0 : i32, i32
  }
  func.func @transform_11(%arg0: i32) -> (i32, i32) {
    %c0_i32 = arith.constant 0 : i32
    %c0_i32_0 = arith.constant 0 : i32
    return %arg0, %c0_i32 : i32, i32
  }
}

</mosaic_0001>

<llo_original>
// kernel: lenet5_forward.1
$region0: #{lenet5_forward.1}
  #allocation0 [shape = 'u32[]', space=smem, size = 0x4, offset = 0x4, fixed_abs, tag = 'smem constant byte address 0x4 - core index']
  #allocation1 [shape = 'u32[72,128]{1,0:T(1,128)}', space=vmem, size = 0x9000, scoped, tag = 'internal scratch']
  #allocation2 [shape = 'bf16[2,56,84]{2,1,0:T(8,128)(2,1)}', space=vmem, size = 0x7000, scoped, tag = 'scratch operand']
  #allocation3 [shape = 'bf16[8,400]{1,0:T(8,128)(2,1)}', space=vmem, size = 0x2000, scoped, tag = 'scratch operand']
  %s0 = inlined_call_operand.vmem [shape: bf16[2,128,32], index: 0, kind: input, shape index: {}]
  %s1 = inlined_call_operand.vmem [shape: bf16[2,5,32,84], index: 1, kind: input, shape index: {}]
  %s2 = inlined_call_operand.vmem [shape: f32[1,84], index: 2, kind: input, shape index: {}]
  %s3 = inlined_call_operand.vmem [shape: bf16[2,5,84,80], index: 3, kind: input, shape index: {}]
  %s4 = inlined_call_operand.vmem [shape: f32[1,80], index: 4, kind: input, shape index: {}]
  %s5 = inlined_call_operand.vmem [shape: bf16[400,120], index: 5, kind: input, shape index: {}]
  %s6 = inlined_call_operand.vmem [shape: f32[1,120], index: 6, kind: input, shape index: {}]
  %s7 = inlined_call_operand.vmem [shape: bf16[120,84], index: 7, kind: input, shape index: {}]
  %s8 = inlined_call_operand.vmem [shape: f32[1,84], index: 8, kind: input, shape index: {}]
  %s9 = inlined_call_operand.vmem [shape: bf16[84,10], index: 9, kind: input, shape index: {}]
  %s10 = inlined_call_operand.vmem [shape: f32[1,10], index: 10, kind: input, shape index: {}]
  %s11 = inlined_call_operand.vmem [shape: f32[8,10], index: 11, kind: output, shape index: {}]
  %s12 = sld [smem:[#allocation0]]
  $region54: #{lenet5_forward.1} parent=0
    _
  %s14 = ssub.s32 1, %s12
  %s15 = scalar_select 0, %s14, %s12
  // Predicated region
  $region2: #{lenet5_forward.1} parent=0 // pred_check
    _
  $region3: #{lenet5_forward.1} parent=0 // pred_check_branch
    %17 = sbr.rel (0) target = $region5
  $region4: #{lenet5_forward.1} parent=0 // pred_region
    _
  $region5: #{lenet5_forward.1} parent=0 // pred_fallthru
    _
  // Predicated region
  $region6: #{lenet5_forward.1} parent=0 // pred_check
    _
  $region7: #{lenet5_forward.1} parent=0 // pred_check_branch
    %19 = sbr.rel (0) target = $region9
  $region8: #{lenet5_forward.1} parent=0 // pred_region
    _
  $region9: #{lenet5_forward.1} parent=0 // pred_fallthru
    _
  // Predicated region
  $region10: #{lenet5_forward.1} parent=0 // pred_check
    _
  $region11: #{lenet5_forward.1} parent=0 // pred_check_branch
    %21 = sbr.rel (0) target = $region13
  $region12: #{lenet5_forward.1} parent=0 // pred_region
    _
  $region13: #{lenet5_forward.1} parent=0 // pred_fallthru
    _
  // Predicated region
  $region14: #{lenet5_forward.1} parent=0 // pred_check
    _
  $region15: #{lenet5_forward.1} parent=0 // pred_check_branch
    %23 = sbr.rel (0) target = $region17
  $region16: #{lenet5_forward.1} parent=0 // pred_region
    _
  $region17: #{lenet5_forward.1} parent=0 // pred_fallthru
    _
  // Predicated region
  $region18: #{lenet5_forward.1} parent=0 // pred_check
    _
  $region19: #{lenet5_forward.1} parent=0 // pred_check_branch
    %25 = sbr.rel (0) target = $region21
  $region20: #{lenet5_forward.1} parent=0 // pred_region
    _
  $region21: #{lenet5_forward.1} parent=0 // pred_fallthru
    _
  // Predicated region
  $region22: #{lenet5_forward.1} parent=0 // pred_check
    _
  $region23: #{lenet5_forward.1} parent=0 // pred_check_branch
    %27 = sbr.rel (0) target = $region25
  $region24: #{lenet5_forward.1} parent=0 // pred_region
    _
  $region25: #{lenet5_forward.1} parent=0 // pred_fallthru
    _
  // Predicated region
  $region26: #{lenet5_forward.1} parent=0 // pred_check
    _
  $region27: #{lenet5_forward.1} parent=0 // pred_check_branch
    %29 = sbr.rel (0) target = $region29
  $region28: #{lenet5_forward.1} parent=0 // pred_region
    _
  $region29: #{lenet5_forward.1} parent=0 // pred_fallthru
    _
  // Predicated region
  $region30: #{lenet5_forward.1} parent=0 // pred_check
    _
  $region31: #{lenet5_forward.1} parent=0 // pred_check_branch
    %31 = sbr.rel (0) target = $region33
  $region32: #{lenet5_forward.1} parent=0 // pred_region
    _
  $region33: #{lenet5_forward.1} parent=0 // pred_fallthru
    _
  // Predicated region
  $region34: #{lenet5_forward.1} parent=0 // pred_check
    _
  $region35: #{lenet5_forward.1} parent=0 // pred_check_branch
    %33 = sbr.rel (0) target = $region37
  $region36: #{lenet5_forward.1} parent=0 // pred_region
    _
  $region37: #{lenet5_forward.1} parent=0 // pred_fallthru
    _
  // Predicated region
  $region38: #{lenet5_forward.1} parent=0 // pred_check
    _
  $region39: #{lenet5_forward.1} parent=0 // pred_check_branch
    %35 = sbr.rel (0) target = $region41
  $region40: #{lenet5_forward.1} parent=0 // pred_region
    _
  $region41: #{lenet5_forward.1} parent=0 // pred_fallthru
    _
  // Predicated region
  $region42: #{lenet5_forward.1} parent=0 // pred_check
    _
  $region43: #{lenet5_forward.1} parent=0 // pred_check_branch
    %37 = sbr.rel (0) target = $region45
  $region44: #{lenet5_forward.1} parent=0 // pred_region
    _
  $region45: #{lenet5_forward.1} parent=0 // pred_fallthru
    _
  %v39 = vld [vmem:[%s0] sm:$0xf]
  %v40 = vld [vmem:[%s0 + $0x4] sm:$0xf]
  %v41 = vld [vmem:[%s0 + $0x8] sm:$0xf]
  %v42 = vld [vmem:[%s0 + $0xc] sm:$0xf]
  %v43 = vld [vmem:[%s0 + $0x10] sm:$0xf]
  %v44 = vld [vmem:[%s0 + $0x14] sm:$0xf]
  %v45 = vld [vmem:[%s0 + $0x18] sm:$0xf]
  %v46 = vld [vmem:[%s0 + $0x1c] sm:$0xf]
  %v47 = vld [vmem:[%s0 + $0x20] sm:$0xf]
  %v48 = vld [vmem:[%s0 + $0x24] sm:$0xf]
  %v49 = vld [vmem:[%s0 + $0x28] sm:$0xf]
  %v50 = vld [vmem:[%s0 + $0x2c] sm:$0xf]
  %v51 = vld [vmem:[%s0 + $0x30] sm:$0xf]
  %v52 = vld [vmem:[%s0 + $0x34] sm:$0xf]
  %v53 = vld [vmem:[%s1] sm:$0xf]
  %v54 = vld [vmem:[%s1 + $0x4] sm:$0xf]
  %v55 = vld [vmem:[%s1 + $0x8] sm:$0xf]
  %v56 = vld [vmem:[%s1 + $0xc] sm:$0xf]
  %s57 = scalar_lea.vmem %s0, 64
  %v58 = vld [vmem:[%s57] sm:$0xf]
  %v59 = vld [vmem:[%s57 + $0x4] sm:$0xf]
  %v60 = vld [vmem:[%s57 + $0x8] sm:$0xf]
  %v61 = vld [vmem:[%s57 + $0xc] sm:$0xf]
  %v62 = vld [vmem:[%s57 + $0x10] sm:$0xf]
  %v63 = vld [vmem:[%s57 + $0x14] sm:$0xf]
  %v64 = vld [vmem:[%s57 + $0x18] sm:$0xf]
  %v65 = vld [vmem:[%s57 + $0x1c] sm:$0xf]
  %v66 = vld [vmem:[%s57 + $0x20] sm:$0xf]
  %v67 = vld [vmem:[%s57 + $0x24] sm:$0xf]
  %v68 = vld [vmem:[%s57 + $0x28] sm:$0xf]
  %v69 = vld [vmem:[%s57 + $0x2c] sm:$0xf]
  %v70 = vld [vmem:[%s57 + $0x30] sm:$0xf]
  %v71 = vld [vmem:[%s57 + $0x34] sm:$0xf]
  %s72 = scalar_lea.vmem %s1, 16
  %v73 = vld [vmem:[%s72] sm:$0xf]
  %v74 = vld [vmem:[%s72 + $0x4] sm:$0xf]
  %v75 = vld [vmem:[%s72 + $0x8] sm:$0xf]
  %v76 = vld [vmem:[%s72 + $0xc] sm:$0xf]
  %v91 = vunpack.c.l.b16 %v58
  %v92 = vunpack.c.l.b16 %v59
  %v93 = vunpack.c.l.b16 %v60
  %v94 = vunpack.c.l.b16 %v61
  %v95 = vunpack.c.l.b16 %v62
  %v96 = vunpack.c.l.b16 %v63
  %v97 = vunpack.c.l.b16 %v64
  %v98 = vunpack.c.l.b16 %v65
  %v99 = vunpack.c.l.b16 %v66
  %v100 = vunpack.c.l.b16 %v67
  %v101 = vunpack.c.l.b16 %v68
  %v102 = vunpack.c.l.b16 %v69
  %v103 = vunpack.c.l.b16 %v70
  %v104 = vunpack.c.l.b16 %v71
  %v105 = vpack.c.b16 %v92, %v91
  %v106 = vpack.c.b16 %v94, %v93
  %v107 = vpack.c.b16 %v96, %v95
  %v108 = vpack.c.b16 %v98, %v97
  %v109 = vpack.c.b16 %v100, %v99
  %v110 = vpack.c.b16 %v102, %v101
  %v111 = vpack.c.b16 %v104, %v103
  %v116 = vunpack.c.l.b16 %v73
  %v117 = vunpack.c.l.b16 %v74
  %v118 = vunpack.c.l.b16 %v75
  %v119 = vunpack.c.l.b16 %v76
  %v120 = vpack.c.b16 %v117, %v116
  %v121 = vpack.c.b16 %v119, %v118
  %vm124 = vcmask 261120
  %v126 = vsel %vm124, %v105, 0
  %v129 = vsel %vm124, %v106, 0
  %v132 = vsel %vm124, %v107, 0
  %v135 = vsel %vm124, %v108, 0
  %v138 = vsel %vm124, %v109, 0
  %v141 = vsel %vm124, %v110, 0
  %v144 = vsel %vm124, %v111, 0
  %146 = vmatpush.bf16.msra.mxu0 0
  %147 = vmatpush.bf16.msra.mxu0 0
  %148 = vmatpush.bf16.msra.mxu0 0
  %149 = vmatpush.bf16.msra.mxu0 0
  %150 = vmatpush.bf16.msra.mxu0 0
  %151 = vmatpush.bf16.msra.mxu0 0
  %152 = vmatpush.bf16.msra.mxu0 %v121
  %153 = vmatpush.bf16.msra.mxu0 %v120
  %154 = vmatmul.bf16.gmra.mxu0 %v126
  %v155 = vpop.f32.mrf.mxu0
  %v156 = vadd.f32 0.0, %v155
  %v157 = vpop.f32.mrf.mxu0
  %v158 = vadd.f32 0.0, %v157
  %159 = vmatmul.bf16.gmra.mxu0 %v129
  %v160 = vpop.f32.mrf.mxu0
  %v161 = vadd.f32 0.0, %v160
  %v162 = vpop.f32.mrf.mxu0
  %v163 = vadd.f32 0.0, %v162
  %164 = vmatmul.bf16.gmra.mxu0 %v132
  %v165 = vpop.f32.mrf.mxu0
  %v166 = vadd.f32 0.0, %v165
  %v167 = vpop.f32.mrf.mxu0
  %v168 = vadd.f32 0.0, %v167
  %169 = vmatmul.bf16.gmra.mxu0 %v135
  %v170 = vpop.f32.mrf.mxu0
  %v171 = vadd.f32 0.0, %v170
  %v172 = vpop.f32.mrf.mxu0
  %v173 = vadd.f32 0.0, %v172
  %174 = vmatmul.bf16.gmra.mxu0 %v138
  %v175 = vpop.f32.mrf.mxu0
  %v176 = vadd.f32 0.0, %v175
  %v177 = vpop.f32.mrf.mxu0
  %v178 = vadd.f32 0.0, %v177
  %179 = vmatmul.bf16.gmra.mxu0 %v141
  %v180 = vpop.f32.mrf.mxu0
  %v181 = vadd.f32 0.0, %v180
  %v182 = vpop.f32.mrf.mxu0
  %v183 = vadd.f32 0.0, %v182
  %184 = vmatmul.bf16.gmra.mxu0 %v144
  %v185 = vpop.f32.mrf.mxu0
  %v186 = vadd.f32 0.0, %v185
  %v187 = vpop.f32.mrf.mxu0
  %v188 = vadd.f32 0.0, %v187
  %189 = vdwg.mxu0
  %v204 = vunpack.c.l.b16 %v39
  %v205 = vunpack.c.l.b16 %v40
  %v206 = vunpack.c.l.b16 %v41
  %v207 = vunpack.c.l.b16 %v42
  %v208 = vunpack.c.l.b16 %v43
  %v209 = vunpack.c.l.b16 %v44
  %v210 = vunpack.c.l.b16 %v45
  %v211 = vunpack.c.l.b16 %v46
  %v212 = vunpack.c.l.b16 %v47
  %v213 = vunpack.c.l.b16 %v48
  %v214 = vunpack.c.l.b16 %v49
  %v215 = vunpack.c.l.b16 %v50
  %v216 = vunpack.c.l.b16 %v51
  %v217 = vunpack.c.l.b16 %v52
  %v218 = vpack.c.b16 %v205, %v204
  %v219 = vpack.c.b16 %v207, %v206
  %v220 = vpack.c.b16 %v209, %v208
  %v221 = vpack.c.b16 %v211, %v210
  %v222 = vpack.c.b16 %v213, %v212
  %v223 = vpack.c.b16 %v215, %v214
  %v224 = vpack.c.b16 %v217, %v216
  %v229 = vunpack.c.l.b16 %v53
  %v230 = vunpack.c.l.b16 %v54
  %v231 = vunpack.c.l.b16 %v55
  %v232 = vunpack.c.l.b16 %v56
  %v233 = vpack.c.b16 %v230, %v229
  %v234 = vpack.c.b16 %v232, %v231
  %v238 = vsel %vm124, %v218, 0
  %v241 = vsel %vm124, %v219, 0
  %v244 = vsel %vm124, %v220, 0
  %v247 = vsel %vm124, %v221, 0
  %v250 = vsel %vm124, %v222, 0
  %v253 = vsel %vm124, %v223, 0
  %v256 = vsel %vm124, %v224, 0
  %258 = vmatpush.bf16.msra.mxu0 0
  %259 = vmatpush.bf16.msra.mxu0 0
  %260 = vmatpush.bf16.msra.mxu0 0
  %261 = vmatpush.bf16.msra.mxu0 0
  %262 = vmatpush.bf16.msra.mxu0 0
  %263 = vmatpush.bf16.msra.mxu0 0
  %264 = vmatpush.bf16.msra.mxu0 %v234
  %265 = vmatpush.bf16.msra.mxu0 %v233
  %266 = vmatmul.bf16.gmra.mxu0 %v238
  %v267 = vpop.f32.mrf.mxu0
  %v268 = vadd.f32 %v156, %v267
  %v269 = vpop.f32.mrf.mxu0
  %v270 = vadd.f32 %v158, %v269
  %271 = vmatmul.bf16.gmra.mxu0 %v241
  %v272 = vpop.f32.mrf.mxu0
  %v273 = vadd.f32 %v161, %v272
  %v274 = vpop.f32.mrf.mxu0
  %v275 = vadd.f32 %v163, %v274
  %276 = vmatmul.bf16.gmra.mxu0 %v244
  %v277 = vpop.f32.mrf.mxu0
  %v278 = vadd.f32 %v166, %v277
  %v279 = vpop.f32.mrf.mxu0
  %v280 = vadd.f32 %v168, %v279
  %281 = vmatmul.bf16.gmra.mxu0 %v247
  %v282 = vpop.f32.mrf.mxu0
  %v283 = vadd.f32 %v171, %v282
  %v284 = vpop.f32.mrf.mxu0
  %v285 = vadd.f32 %v173, %v284
  %286 = vmatmul.bf16.gmra.mxu0 %v250
  %v287 = vpop.f32.mrf.mxu0
  %v288 = vadd.f32 %v176, %v287
  %v289 = vpop.f32.mrf.mxu0
  %v290 = vadd.f32 %v178, %v289
  %291 = vmatmul.bf16.gmra.mxu0 %v253
  %v292 = vpop.f32.mrf.mxu0
  %v293 = vadd.f32 %v181, %v292
  %v294 = vpop.f32.mrf.mxu0
  %v295 = vadd.f32 %v183, %v294
  %296 = vmatmul.bf16.gmra.mxu0 %v256
  %v297 = vpop.f32.mrf.mxu0
  %v298 = vadd.f32 %v186, %v297
  %v299 = vpop.f32.mrf.mxu0
  %v300 = vadd.f32 %v188, %v299
  %301 = vdwg.mxu0
  %v302 = vld [vmem:[%s0 + $0x4] sm:$0xf]
  %v303 = vld [vmem:[%s0 + $0x8] sm:$0xf]
  %v304 = vld [vmem:[%s0 + $0xc] sm:$0xf]
  %v305 = vld [vmem:[%s0 + $0x10] sm:$0xf]
  %v306 = vld [vmem:[%s0 + $0x14] sm:$0xf]
  %v307 = vld [vmem:[%s0 + $0x18] sm:$0xf]
  %v308 = vld [vmem:[%s0 + $0x1c] sm:$0xf]
  %v309 = vld [vmem:[%s0 + $0x20] sm:$0xf]
  %v310 = vld [vmem:[%s0 + $0x24] sm:$0xf]
  %v311 = vld [vmem:[%s0 + $0x28] sm:$0xf]
  %v312 = vld [vmem:[%s0 + $0x2c] sm:$0xf]
  %v313 = vld [vmem:[%s0 + $0x30] sm:$0xf]
  %v314 = vld [vmem:[%s0 + $0x34] sm:$0xf]
  %v315 = vld [vmem:[%s0 + $0x38] sm:$0xf]
  %s316 = scalar_lea.vmem %s1, 32
  %v317 = vld [vmem:[%s316] sm:$0xf]
  %v318 = vld [vmem:[%s316 + $0x4] sm:$0xf]
  %v319 = vld [vmem:[%s316 + $0x8] sm:$0xf]
  %v320 = vld [vmem:[%s316 + $0xc] sm:$0xf]
  %v335 = vunpack.c.l.b16 %v302
  %v336 = vunpack.c.l.b16 %v303
  %v337 = vunpack.c.l.b16 %v304
  %v338 = vunpack.c.l.b16 %v305
  %v339 = vunpack.c.l.b16 %v306
  %v340 = vunpack.c.l.b16 %v307
  %v341 = vunpack.c.l.b16 %v308
  %v342 = vunpack.c.l.b16 %v309
  %v343 = vunpack.c.l.b16 %v310
  %v344 = vunpack.c.l.b16 %v311
  %v345 = vunpack.c.l.b16 %v312
  %v346 = vunpack.c.l.b16 %v313
  %v347 = vunpack.c.l.b16 %v314
  %v348 = vunpack.c.l.b16 %v315
  %v349 = vpack.c.b16 %v336, %v335
  %v350 = vpack.c.b16 %v338, %v337
  %v351 = vpack.c.b16 %v340, %v339
  %v352 = vpack.c.b16 %v342, %v341
  %v353 = vpack.c.b16 %v344, %v343
  %v354 = vpack.c.b16 %v346, %v345
  %v355 = vpack.c.b16 %v348, %v347
  %v360 = vunpack.c.l.b16 %v317
  %v361 = vunpack.c.l.b16 %v318
  %v362 = vunpack.c.l.b16 %v319
  %v363 = vunpack.c.l.b16 %v320
  %v364 = vpack.c.b16 %v361, %v360
  %v365 = vpack.c.b16 %v363, %v362
  %v369 = vsel %vm124, %v349, 0
  %v372 = vsel %vm124, %v350, 0
  %v375 = vsel %vm124, %v351, 0
  %v378 = vsel %vm124, %v352, 0
  %v381 = vsel %vm124, %v353, 0
  %v384 = vsel %vm124, %v354, 0
  %v387 = vsel %vm124, %v355, 0
  %389 = vmatpush.bf16.msra.mxu0 0
  %390 = vmatpush.bf16.msra.mxu0 0
  %391 = vmatpush.bf16.msra.mxu0 0
  %392 = vmatpush.bf16.msra.mxu0 0
  %393 = vmatpush.bf16.msra.mxu0 0
  %394 = vmatpush.bf16.msra.mxu0 0
  %395 = vmatpush.bf16.msra.mxu0 %v365
  %396 = vmatpush.bf16.msra.mxu0 %v364
  %397 = vmatmul.bf16.gmra.mxu0 %v369
  %v398 = vpop.f32.mrf.mxu0
  %v399 = vadd.f32 0.0, %v398
  %v400 = vpop.f32.mrf.mxu0
  %v401 = vadd.f32 0.0, %v400
  %402 = vmatmul.bf16.gmra.mxu0 %v372
  %v403 = vpop.f32.mrf.mxu0
  %v404 = vadd.f32 0.0, %v403
  %v405 = vpop.f32.mrf.mxu0
  %v406 = vadd.f32 0.0, %v405
  %407 = vmatmul.bf16.gmra.mxu0 %v375
  %v408 = vpop.f32.mrf.mxu0
  %v409 = vadd.f32 0.0, %v408
  %v410 = vpop.f32.mrf.mxu0
  %v411 = vadd.f32 0.0, %v410
  %412 = vmatmul.bf16.gmra.mxu0 %v378
  %v413 = vpop.f32.mrf.mxu0
  %v414 = vadd.f32 0.0, %v413
  %v415 = vpop.f32.mrf.mxu0
  %v416 = vadd.f32 0.0, %v415
  %417 = vmatmul.bf16.gmra.mxu0 %v381
  %v418 = vpop.f32.mrf.mxu0
  %v419 = vadd.f32 0.0, %v418
  %v420 = vpop.f32.mrf.mxu0
  %v421 = vadd.f32 0.0, %v420
  %422 = vmatmul.bf16.gmra.mxu0 %v384
  %v423 = vpop.f32.mrf.mxu0
  %v424 = vadd.f32 0.0, %v423
  %v425 = vpop.f32.mrf.mxu0
  %v426 = vadd.f32 0.0, %v425
  %427 = vmatmul.bf16.gmra.mxu0 %v387
  %v428 = vpop.f32.mrf.mxu0
  %v429 = vadd.f32 0.0, %v428
  %v430 = vpop.f32.mrf.mxu0
  %v431 = vadd.f32 0.0, %v430
  %432 = vdwg.mxu0
  %v433 = vadd.f32 %v268, %v399
  %v434 = vadd.f32 %v270, %v401
  %v435 = vadd.f32 %v273, %v404
  %v436 = vadd.f32 %v275, %v406
  %v437 = vadd.f32 %v278, %v409
  %v438 = vadd.f32 %v280, %v411
  %v439 = vadd.f32 %v283, %v414
  %v440 = vadd.f32 %v285, %v416
  %v441 = vadd.f32 %v288, %v419
  %v442 = vadd.f32 %v290, %v421
  %v443 = vadd.f32 %v293, %v424
  %v444 = vadd.f32 %v295, %v426
  %v445 = vadd.f32 %v298, %v429
  %v446 = vadd.f32 %v300, %v431
  %v447 = vld [vmem:[%s57 + $0x4] sm:$0xf]
  %v448 = vld [vmem:[%s57 + $0x8] sm:$0xf]
  %v449 = vld [vmem:[%s57 + $0xc] sm:$0xf]
  %v450 = vld [vmem:[%s57 + $0x10] sm:$0xf]
  %v451 = vld [vmem:[%s57 + $0x14] sm:$0xf]
  %v452 = vld [vmem:[%s57 + $0x18] sm:$0xf]
  %v453 = vld [vmem:[%s57 + $0x1c] sm:$0xf]
  %v454 = vld [vmem:[%s57 + $0x20] sm:$0xf]
  %v455 = vld [vmem:[%s57 + $0x24] sm:$0xf]
  %v456 = vld [vmem:[%s57 + $0x28] sm:$0xf]
  %v457 = vld [vmem:[%s57 + $0x2c] sm:$0xf]
  %v458 = vld [vmem:[%s57 + $0x30] sm:$0xf]
  %v459 = vld [vmem:[%s57 + $0x34] sm:$0xf]
  %v460 = vld [vmem:[%s57 + $0x38] sm:$0xf]
  %s461 = scalar_lea.vmem %s1, 48
  %v462 = vld [vmem:[%s461] sm:$0xf]
  %v463 = vld [vmem:[%s461 + $0x4] sm:$0xf]
  %v464 = vld [vmem:[%s461 + $0x8] sm:$0xf]
  %v465 = vld [vmem:[%s461 + $0xc] sm:$0xf]
  %v480 = vunpack.c.l.b16 %v447
  %v481 = vunpack.c.l.b16 %v448
  %v482 = vunpack.c.l.b16 %v449
  %v483 = vunpack.c.l.b16 %v450
  %v484 = vunpack.c.l.b16 %v451
  %v485 = vunpack.c.l.b16 %v452
  %v486 = vunpack.c.l.b16 %v453
  %v487 = vunpack.c.l.b16 %v454
  %v488 = vunpack.c.l.b16 %v455
  %v489 = vunpack.c.l.b16 %v456
  %v490 = vunpack.c.l.b16 %v457
  %v491 = vunpack.c.l.b16 %v458
  %v492 = vunpack.c.l.b16 %v459
  %v493 = vunpack.c.l.b16 %v460
  %v494 = vpack.c.b16 %v481, %v480
  %v495 = vpack.c.b16 %v483, %v482
  %v496 = vpack.c.b16 %v485, %v484
  %v497 = vpack.c.b16 %v487, %v486
  %v498 = vpack.c.b16 %v489, %v488
  %v499 = vpack.c.b16 %v491, %v490
  %v500 = vpack.c.b16 %v493, %v492
  %v505 = vunpack.c.l.b16 %v462
  %v506 = vunpack.c.l.b16 %v463
  %v507 = vunpack.c.l.b16 %v464
  %v508 = vunpack.c.l.b16 %v465
  %v509 = vpack.c.b16 %v506, %v505
  %v510 = vpack.c.b16 %v508, %v507
  %v514 = vsel %vm124, %v494, 0
  %v517 = vsel %vm124, %v495, 0
  %v520 = vsel %vm124, %v496, 0
  %v523 = vsel %vm124, %v497, 0
  %v526 = vsel %vm124, %v498, 0
  %v529 = vsel %vm124, %v499, 0
  %v532 = vsel %vm124, %v500, 0
  %534 = vmatpush.bf16.msra.mxu0 0
  %535 = vmatpush.bf16.msra.mxu0 0
  %536 = vmatpush.bf16.msra.mxu0 0
  %537 = vmatpush.bf16.msra.mxu0 0
  %538 = vmatpush.bf16.msra.mxu0 0
  %539 = vmatpush.bf16.msra.mxu0 0
  %540 = vmatpush.bf16.msra.mxu0 %v510
  %541 = vmatpush.bf16.msra.mxu0 %v509
  %542 = vmatmul.bf16.gmra.mxu0 %v514
  %v543 = vpop.f32.mrf.mxu0
  %v544 = vadd.f32 0.0, %v543
  %v545 = vpop.f32.mrf.mxu0
  %v546 = vadd.f32 0.0, %v545
  %547 = vmatmul.bf16.gmra.mxu0 %v517
  %v548 = vpop.f32.mrf.mxu0
  %v549 = vadd.f32 0.0, %v548
  %v550 = vpop.f32.mrf.mxu0
  %v551 = vadd.f32 0.0, %v550
  %552 = vmatmul.bf16.gmra.mxu0 %v520
  %v553 = vpop.f32.mrf.mxu0
  %v554 = vadd.f32 0.0, %v553
  %v555 = vpop.f32.mrf.mxu0
  %v556 = vadd.f32 0.0, %v555
  %557 = vmatmul.bf16.gmra.mxu0 %v523
  %v558 = vpop.f32.mrf.mxu0
  %v559 = vadd.f32 0.0, %v558
  %v560 = vpop.f32.mrf.mxu0
  %v561 = vadd.f32 0.0, %v560
  %562 = vmatmul.bf16.gmra.mxu0 %v526
  %v563 = vpop.f32.mrf.mxu0
  %v564 = vadd.f32 0.0, %v563
  %v565 = vpop.f32.mrf.mxu0
  %v566 = vadd.f32 0.0, %v565
  %567 = vmatmul.bf16.gmra.mxu0 %v529
  %v568 = vpop.f32.mrf.mxu0
  %v569 = vadd.f32 0.0, %v568
  %v570 = vpop.f32.mrf.mxu0
  %v571 = vadd.f32 0.0, %v570
  %572 = vmatmul.bf16.gmra.mxu0 %v532
  %v573 = vpop.f32.mrf.mxu0
  %v574 = vadd.f32 0.0, %v573
  %v575 = vpop.f32.mrf.mxu0
  %v576 = vadd.f32 0.0, %v575
  %577 = vdwg.mxu0
  %v578 = vadd.f32 %v433, %v544
  %v579 = vadd.f32 %v434, %v546
  %v580 = vadd.f32 %v435, %v549
  %v581 = vadd.f32 %v436, %v551
  %v582 = vadd.f32 %v437, %v554
  %v583 = vadd.f32 %v438, %v556
  %v584 = vadd.f32 %v439, %v559
  %v585 = vadd.f32 %v440, %v561
  %v586 = vadd.f32 %v441, %v564
  %v587 = vadd.f32 %v442, %v566
  %v588 = vadd.f32 %v443, %v569
  %v589 = vadd.f32 %v444, %v571
  %v590 = vadd.f32 %v445, %v574
  %v591 = vadd.f32 %v446, %v576
  %v592 = vld [vmem:[%s0 + $0x8] sm:$0xf]
  %v593 = vld [vmem:[%s0 + $0xc] sm:$0xf]
  %v594 = vld [vmem:[%s0 + $0x10] sm:$0xf]
  %v595 = vld [vmem:[%s0 + $0x14] sm:$0xf]
  %v596 = vld [vmem:[%s0 + $0x18] sm:$0xf]
  %v597 = vld [vmem:[%s0 + $0x1c] sm:$0xf]
  %v598 = vld [vmem:[%s0 + $0x20] sm:$0xf]
  %v599 = vld [vmem:[%s0 + $0x24] sm:$0xf]
  %v600 = vld [vmem:[%s0 + $0x28] sm:$0xf]
  %v601 = vld [vmem:[%s0 + $0x2c] sm:$0xf]
  %v602 = vld [vmem:[%s0 + $0x30] sm:$0xf]
  %v603 = vld [vmem:[%s0 + $0x34] sm:$0xf]
  %v604 = vld [vmem:[%s0 + $0x38] sm:$0xf]
  %v605 = vld [vmem:[%s0 + $0x3c] sm:$0xf]
  %s606 = scalar_lea.vmem %s1, 64
  %v607 = vld [vmem:[%s606] sm:$0xf]
  %v608 = vld [vmem:[%s606 + $0x4] sm:$0xf]
  %v609 = vld [vmem:[%s606 + $0x8] sm:$0xf]
  %v610 = vld [vmem:[%s606 + $0xc] sm:$0xf]
  %v625 = vunpack.c.l.b16 %v592
  %v626 = vunpack.c.l.b16 %v593
  %v627 = vunpack.c.l.b16 %v594
  %v628 = vunpack.c.l.b16 %v595
  %v629 = vunpack.c.l.b16 %v596
  %v630 = vunpack.c.l.b16 %v597
  %v631 = vunpack.c.l.b16 %v598
  %v632 = vunpack.c.l.b16 %v599
  %v633 = vunpack.c.l.b16 %v600
  %v634 = vunpack.c.l.b16 %v601
  %v635 = vunpack.c.l.b16 %v602
  %v636 = vunpack.c.l.b16 %v603
  %v637 = vunpack.c.l.b16 %v604
  %v638 = vunpack.c.l.b16 %v605
  %v639 = vpack.c.b16 %v626, %v625
  %v640 = vpack.c.b16 %v628, %v627
  %v641 = vpack.c.b16 %v630, %v629
  %v642 = vpack.c.b16 %v632, %v631
  %v643 = vpack.c.b16 %v634, %v633
  %v644 = vpack.c.b16 %v636, %v635
  %v645 = vpack.c.b16 %v638, %v637
  %v650 = vunpack.c.l.b16 %v607
  %v651 = vunpack.c.l.b16 %v608
  %v652 = vunpack.c.l.b16 %v609
  %v653 = vunpack.c.l.b16 %v610
  %v654 = vpack.c.b16 %v651, %v650
  %v655 = vpack.c.b16 %v653, %v652
  %v659 = vsel %vm124, %v639, 0
  %v662 = vsel %vm124, %v640, 0
  %v665 = vsel %vm124, %v641, 0
  %v668 = vsel %vm124, %v642, 0
  %v671 = vsel %vm124, %v643, 0
  %v674 = vsel %vm124, %v644, 0
  %v677 = vsel %vm124, %v645, 0
  %679 = vmatpush.bf16.msra.mxu0 0
  %680 = vmatpush.bf16.msra.mxu0 0
  %681 = vmatpush.bf16.msra.mxu0 0
  %682 = vmatpush.bf16.msra.mxu0 0
  %683 = vmatpush.bf16.msra.mxu0 0
  %684 = vmatpush.bf16.msra.mxu0 0
  %685 = vmatpush.bf16.msra.mxu0 %v655
  %686 = vmatpush.bf16.msra.mxu0 %v654
  %687 = vmatmul.bf16.gmra.mxu0 %v659
  %v688 = vpop.f32.mrf.mxu0
  %v689 = vadd.f32 0.0, %v688
  %v690 = vpop.f32.mrf.mxu0
  %v691 = vadd.f32 0.0, %v690
  %692 = vmatmul.bf16.gmra.mxu0 %v662
  %v693 = vpop.f32.mrf.mxu0
  %v694 = vadd.f32 0.0, %v693
  %v695 = vpop.f32.mrf.mxu0
  %v696 = vadd.f32 0.0, %v695
  %697 = vmatmul.bf16.gmra.mxu0 %v665
  %v698 = vpop.f32.mrf.mxu0
  %v699 = vadd.f32 0.0, %v698
  %v700 = vpop.f32.mrf.mxu0
  %v701 = vadd.f32 0.0, %v700
  %702 = vmatmul.bf16.gmra.mxu0 %v668
  %v703 = vpop.f32.mrf.mxu0
  %v704 = vadd.f32 0.0, %v703
  %v705 = vpop.f32.mrf.mxu0
  %v706 = vadd.f32 0.0, %v705
  %707 = vmatmul.bf16.gmra.mxu0 %v671
  %v708 = vpop.f32.mrf.mxu0
  %v709 = vadd.f32 0.0, %v708
  %v710 = vpop.f32.mrf.mxu0
  %v711 = vadd.f32 0.0, %v710
  %712 = vmatmul.bf16.gmra.mxu0 %v674
  %v713 = vpop.f32.mrf.mxu0
  %v714 = vadd.f32 0.0, %v713
  %v715 = vpop.f32.mrf.mxu0
  %v716 = vadd.f32 0.0, %v715
  %717 = vmatmul.bf16.gmra.mxu0 %v677
  %v718 = vpop.f32.mrf.mxu0
  %v719 = vadd.f32 0.0, %v718
  %v720 = vpop.f32.mrf.mxu0
  %v721 = vadd.f32 0.0, %v720
  %722 = vdwg.mxu0
  %v723 = vadd.f32 %v578, %v689
  %v724 = vadd.f32 %v579, %v691
  %v725 = vadd.f32 %v580, %v694
  %v726 = vadd.f32 %v581, %v696
  %v727 = vadd.f32 %v582, %v699
  %v728 = vadd.f32 %v583, %v701
  %v729 = vadd.f32 %v584, %v704
  %v730 = vadd.f32 %v585, %v706
  %v731 = vadd.f32 %v586, %v709
  %v732 = vadd.f32 %v587, %v711
  %v733 = vadd.f32 %v588, %v714
  %v734 = vadd.f32 %v589, %v716
  %v735 = vadd.f32 %v590, %v719
  %v736 = vadd.f32 %v591, %v721
  %s737 = scalar_lea.vmem %s1, 80
  %v738 = vld [vmem:[%s737] sm:$0xf]
  %v739 = vld [vmem:[%s737 + $0x4] sm:$0xf]
  %v740 = vld [vmem:[%s737 + $0x8] sm:$0xf]
  %v741 = vld [vmem:[%s737 + $0xc] sm:$0xf]
  %s742 = scalar_lea.vmem %s1, 96
  %v743 = vld [vmem:[%s742] sm:$0xf]
  %v744 = vld [vmem:[%s742 + $0x4] sm:$0xf]
  %v745 = vld [vmem:[%s742 + $0x8] sm:$0xf]
  %v746 = vld [vmem:[%s742 + $0xc] sm:$0xf]
  %v751 = vunpack.c.l.b16 %v743
  %v752 = vunpack.c.l.b16 %v744
  %v753 = vunpack.c.l.b16 %v745
  %v754 = vunpack.c.l.b16 %v746
  %v755 = vpack.c.b16 %v752, %v751
  %v756 = vpack.c.b16 %v754, %v753
  %759 = vmatpush.bf16.msra.mxu0 0
  %760 = vmatpush.bf16.msra.mxu0 0
  %761 = vmatpush.bf16.msra.mxu0 0
  %762 = vmatpush.bf16.msra.mxu0 0
  %763 = vmatpush.bf16.msra.mxu0 0
  %764 = vmatpush.bf16.msra.mxu0 0
  %765 = vmatpush.bf16.msra.mxu0 %v756
  %766 = vmatpush.bf16.msra.mxu0 %v755
  %767 = vmatmul.bf16.gmra.mxu0 %v126
  %v768 = vpop.f32.mrf.mxu0
  %v769 = vadd.f32 0.0, %v768
  %v770 = vpop.f32.mrf.mxu0
  %v771 = vadd.f32 0.0, %v770
  %772 = vmatmul.bf16.gmra.mxu0 %v129
  %v773 = vpop.f32.mrf.mxu0
  %v774 = vadd.f32 0.0, %v773
  %v775 = vpop.f32.mrf.mxu0
  %v776 = vadd.f32 0.0, %v775
  %777 = vmatmul.bf16.gmra.mxu0 %v132
  %v778 = vpop.f32.mrf.mxu0
  %v779 = vadd.f32 0.0, %v778
  %v780 = vpop.f32.mrf.mxu0
  %v781 = vadd.f32 0.0, %v780
  %782 = vmatmul.bf16.gmra.mxu0 %v135
  %v783 = vpop.f32.mrf.mxu0
  %v784 = vadd.f32 0.0, %v783
  %v785 = vpop.f32.mrf.mxu0
  %v786 = vadd.f32 0.0, %v785
  %787 = vmatmul.bf16.gmra.mxu0 %v138
  %v788 = vpop.f32.mrf.mxu0
  %v789 = vadd.f32 0.0, %v788
  %v790 = vpop.f32.mrf.mxu0
  %v791 = vadd.f32 0.0, %v790
  %792 = vmatmul.bf16.gmra.mxu0 %v141
  %v793 = vpop.f32.mrf.mxu0
  %v794 = vadd.f32 0.0, %v793
  %v795 = vpop.f32.mrf.mxu0
  %v796 = vadd.f32 0.0, %v795
  %797 = vmatmul.bf16.gmra.mxu0 %v144
  %v798 = vpop.f32.mrf.mxu0
  %v799 = vadd.f32 0.0, %v798
  %v800 = vpop.f32.mrf.mxu0
  %v801 = vadd.f32 0.0, %v800
  %802 = vdwg.mxu0
  %v807 = vunpack.c.l.b16 %v738
  %v808 = vunpack.c.l.b16 %v739
  %v809 = vunpack.c.l.b16 %v740
  %v810 = vunpack.c.l.b16 %v741
  %v811 = vpack.c.b16 %v808, %v807
  %v812 = vpack.c.b16 %v810, %v809
  %815 = vmatpush.bf16.msra.mxu0 0
  %816 = vmatpush.bf16.msra.mxu0 0
  %817 = vmatpush.bf16.msra.mxu0 0
  %818 = vmatpush.bf16.msra.mxu0 0
  %819 = vmatpush.bf16.msra.mxu0 0
  %820 = vmatpush.bf16.msra.mxu0 0
  %821 = vmatpush.bf16.msra.mxu0 %v812
  %822 = vmatpush.bf16.msra.mxu0 %v811
  %823 = vmatmul.bf16.gmra.mxu0 %v238
  %v824 = vpop.f32.mrf.mxu0
  %v825 = vadd.f32 %v769, %v824
  %v826 = vpop.f32.mrf.mxu0
  %v827 = vadd.f32 %v771, %v826
  %828 = vmatmul.bf16.gmra.mxu0 %v241
  %v829 = vpop.f32.mrf.mxu0
  %v830 = vadd.f32 %v774, %v829
  %v831 = vpop.f32.mrf.mxu0
  %v832 = vadd.f32 %v776, %v831
  %833 = vmatmul.bf16.gmra.mxu0 %v244
  %v834 = vpop.f32.mrf.mxu0
  %v835 = vadd.f32 %v779, %v834
  %v836 = vpop.f32.mrf.mxu0
  %v837 = vadd.f32 %v781, %v836
  %838 = vmatmul.bf16.gmra.mxu0 %v247
  %v839 = vpop.f32.mrf.mxu0
  %v840 = vadd.f32 %v784, %v839
  %v841 = vpop.f32.mrf.mxu0
  %v842 = vadd.f32 %v786, %v841
  %843 = vmatmul.bf16.gmra.mxu0 %v250
  %v844 = vpop.f32.mrf.mxu0
  %v845 = vadd.f32 %v789, %v844
  %v846 = vpop.f32.mrf.mxu0
  %v847 = vadd.f32 %v791, %v846
  %848 = vmatmul.bf16.gmra.mxu0 %v253
  %v849 = vpop.f32.mrf.mxu0
  %v850 = vadd.f32 %v794, %v849
  %v851 = vpop.f32.mrf.mxu0
  %v852 = vadd.f32 %v796, %v851
  %853 = vmatmul.bf16.gmra.mxu0 %v256
  %v854 = vpop.f32.mrf.mxu0
  %v855 = vadd.f32 %v799, %v854
  %v856 = vpop.f32.mrf.mxu0
  %v857 = vadd.f32 %v801, %v856
  %858 = vdwg.mxu0
  %s859 = scalar_lea.vmem %s1, 112
  %v860 = vld [vmem:[%s859] sm:$0xf]
  %v861 = vld [vmem:[%s859 + $0x4] sm:$0xf]
  %v862 = vld [vmem:[%s859 + $0x8] sm:$0xf]
  %v863 = vld [vmem:[%s859 + $0xc] sm:$0xf]
  %v868 = vunpack.c.l.b16 %v860
  %v869 = vunpack.c.l.b16 %v861
  %v870 = vunpack.c.l.b16 %v862
  %v871 = vunpack.c.l.b16 %v863
  %v872 = vpack.c.b16 %v869, %v868
  %v873 = vpack.c.b16 %v871, %v870
  %876 = vmatpush.bf16.msra.mxu0 0
  %877 = vmatpush.bf16.msra.mxu0 0
  %878 = vmatpush.bf16.msra.mxu0 0
  %879 = vmatpush.bf16.msra.mxu0 0
  %880 = vmatpush.bf16.msra.mxu0 0
  %881 = vmatpush.bf16.msra.mxu0 0
  %882 = vmatpush.bf16.msra.mxu0 %v873
  %883 = vmatpush.bf16.msra.mxu0 %v872
  %884 = vmatmul.bf16.gmra.mxu0 %v369
  %v885 = vpop.f32.mrf.mxu0
  %v886 = vadd.f32 0.0, %v885
  %v887 = vpop.f32.mrf.mxu0
  %v888 = vadd.f32 0.0, %v887
  %889 = vmatmul.bf16.gmra.mxu0 %v372
  %v890 = vpop.f32.mrf.mxu0
  %v891 = vadd.f32 0.0, %v890
  %v892 = vpop.f32.mrf.mxu0
  %v893 = vadd.f32 0.0, %v892
  %894 = vmatmul.bf16.gmra.mxu0 %v375
  %v895 = vpop.f32.mrf.mxu0
  %v896 = vadd.f32 0.0, %v895
  %v897 = vpop.f32.mrf.mxu0
  %v898 = vadd.f32 0.0, %v897
  %899 = vmatmul.bf16.gmra.mxu0 %v378
  %v900 = vpop.f32.mrf.mxu0
  %v901 = vadd.f32 0.0, %v900
  %v902 = vpop.f32.mrf.mxu0
  %v903 = vadd.f32 0.0, %v902
  %904 = vmatmul.bf16.gmra.mxu0 %v381
  %v905 = vpop.f32.mrf.mxu0
  %v906 = vadd.f32 0.0, %v905
  %v907 = vpop.f32.mrf.mxu0
  %v908 = vadd.f32 0.0, %v907
  %909 = vmatmul.bf16.gmra.mxu0 %v384
  %v910 = vpop.f32.mrf.mxu0
  %v911 = vadd.f32 0.0, %v910
  %v912 = vpop.f32.mrf.mxu0
  %v913 = vadd.f32 0.0, %v912
  %914 = vmatmul.bf16.gmra.mxu0 %v387
  %v915 = vpop.f32.mrf.mxu0
  %v916 = vadd.f32 0.0, %v915
  %v917 = vpop.f32.mrf.mxu0
  %v918 = vadd.f32 0.0, %v917
  %919 = vdwg.mxu0
  %v920 = vadd.f32 %v825, %v886
  %v921 = vadd.f32 %v827, %v888
  %v922 = vadd.f32 %v830, %v891
  %v923 = vadd.f32 %v832, %v893
  %v924 = vadd.f32 %v835, %v896
  %v925 = vadd.f32 %v837, %v898
  %v926 = vadd.f32 %v840, %v901
  %v927 = vadd.f32 %v842, %v903
  %v928 = vadd.f32 %v845, %v906
  %v929 = vadd.f32 %v847, %v908
  %v930 = vadd.f32 %v850, %v911
  %v931 = vadd.f32 %v852, %v913
  %v932 = vadd.f32 %v855, %v916
  %v933 = vadd.f32 %v857, %v918
  %s934 = scalar_lea.vmem %s1, 128
  %v935 = vld [vmem:[%s934] sm:$0xf]
  %v936 = vld [vmem:[%s934 + $0x4] sm:$0xf]
  %v937 = vld [vmem:[%s934 + $0x8] sm:$0xf]
  %v938 = vld [vmem:[%s934 + $0xc] sm:$0xf]
  %v943 = vunpack.c.l.b16 %v935
  %v944 = vunpack.c.l.b16 %v936
  %v945 = vunpack.c.l.b16 %v937
  %v946 = vunpack.c.l.b16 %v938
  %v947 = vpack.c.b16 %v944, %v943
  %v948 = vpack.c.b16 %v946, %v945
  %951 = vmatpush.bf16.msra.mxu0 0
  %952 = vmatpush.bf16.msra.mxu0 0
  %953 = vmatpush.bf16.msra.mxu0 0
  %954 = vmatpush.bf16.msra.mxu0 0
  %955 = vmatpush.bf16.msra.mxu0 0
  %956 = vmatpush.bf16.msra.mxu0 0
  %957 = vmatpush.bf16.msra.mxu0 %v948
  %958 = vmatpush.bf16.msra.mxu0 %v947
  %959 = vmatmul.bf16.gmra.mxu0 %v514
  %v960 = vpop.f32.mrf.mxu0
  %v961 = vadd.f32 0.0, %v960
  %v962 = vpop.f32.mrf.mxu0
  %v963 = vadd.f32 0.0, %v962
  %964 = vmatmul.bf16.gmra.mxu0 %v517
  %v965 = vpop.f32.mrf.mxu0
  %v966 = vadd.f32 0.0, %v965
  %v967 = vpop.f32.mrf.mxu0
  %v968 = vadd.f32 0.0, %v967
  %969 = vmatmul.bf16.gmra.mxu0 %v520
  %v970 = vpop.f32.mrf.mxu0
  %v971 = vadd.f32 0.0, %v970
  %v972 = vpop.f32.mrf.mxu0
  %v973 = vadd.f32 0.0, %v972
  %974 = vmatmul.bf16.gmra.mxu0 %v523
  %v975 = vpop.f32.mrf.mxu0
  %v976 = vadd.f32 0.0, %v975
  %v977 = vpop.f32.mrf.mxu0
  %v978 = vadd.f32 0.0, %v977
  %979 = vmatmul.bf16.gmra.mxu0 %v526
  %v980 = vpop.f32.mrf.mxu0
  %v981 = vadd.f32 0.0, %v980
  %v982 = vpop.f32.mrf.mxu0
  %v983 = vadd.f32 0.0, %v982
  %984 = vmatmul.bf16.gmra.mxu0 %v529
  %v985 = vpop.f32.mrf.mxu0
  %v986 = vadd.f32 0.0, %v985
  %v987 = vpop.f32.mrf.mxu0
  %v988 = vadd.f32 0.0, %v987
  %989 = vmatmul.bf16.gmra.mxu0 %v532
  %v990 = vpop.f32.mrf.mxu0
  %v991 = vadd.f32 0.0, %v990
  %v992 = vpop.f32.mrf.mxu0
  %v993 = vadd.f32 0.0, %v992
  %994 = vdwg.mxu0
  %v995 = vadd.f32 %v920, %v961
  %v996 = vadd.f32 %v921, %v963
  %v997 = vadd.f32 %v922, %v966
  %v998 = vadd.f32 %v923, %v968
  %v999 = vadd.f32 %v924, %v971
  %v1000 = vadd.f32 %v925, %v973
  %v1001 = vadd.f32 %v926, %v976
  %v1002 = vadd.f32 %v927, %v978
  %v1003 = vadd.f32 %v928, %v981
  %v1004 = vadd.f32 %v929, %v983
  %v1005 = vadd.f32 %v930, %v986
  %v1006 = vadd.f32 %v931, %v988
  %v1007 = vadd.f32 %v932, %v991
  %v1008 = vadd.f32 %v933, %v993
  %s1009 = scalar_lea.vmem %s1, 144
  %v1010 = vld [vmem:[%s1009] sm:$0xf]
  %v1011 = vld [vmem:[%s1009 + $0x4] sm:$0xf]
  %v1012 = vld [vmem:[%s1009 + $0x8] sm:$0xf]
  %v1013 = vld [vmem:[%s1009 + $0xc] sm:$0xf]
  %v1018 = vunpack.c.l.b16 %v1010
  %v1019 = vunpack.c.l.b16 %v1011
  %v1020 = vunpack.c.l.b16 %v1012
  %v1021 = vunpack.c.l.b16 %v1013
  %v1022 = vpack.c.b16 %v1019, %v1018
  %v1023 = vpack.c.b16 %v1021, %v1020
  %1026 = vmatpush.bf16.msra.mxu0 0
  %1027 = vmatpush.bf16.msra.mxu0 0
  %1028 = vmatpush.bf16.msra.mxu0 0
  %1029 = vmatpush.bf16.msra.mxu0 0
  %1030 = vmatpush.bf16.msra.mxu0 0
  %1031 = vmatpush.bf16.msra.mxu0 0
  %1032 = vmatpush.bf16.msra.mxu0 %v1023
  %1033 = vmatpush.bf16.msra.mxu0 %v1022
  %1034 = vmatmul.bf16.gmra.mxu0 %v659
  %v1035 = vpop.f32.mrf.mxu0
  %v1036 = vadd.f32 0.0, %v1035
  %v1037 = vpop.f32.mrf.mxu0
  %v1038 = vadd.f32 0.0, %v1037
  %1039 = vmatmul.bf16.gmra.mxu0 %v662
  %v1040 = vpop.f32.mrf.mxu0
  %v1041 = vadd.f32 0.0, %v1040
  %v1042 = vpop.f32.mrf.mxu0
  %v1043 = vadd.f32 0.0, %v1042
  %1044 = vmatmul.bf16.gmra.mxu0 %v665
  %v1045 = vpop.f32.mrf.mxu0
  %v1046 = vadd.f32 0.0, %v1045
  %v1047 = vpop.f32.mrf.mxu0
  %v1048 = vadd.f32 0.0, %v1047
  %1049 = vmatmul.bf16.gmra.mxu0 %v668
  %v1050 = vpop.f32.mrf.mxu0
  %v1051 = vadd.f32 0.0, %v1050
  %v1052 = vpop.f32.mrf.mxu0
  %v1053 = vadd.f32 0.0, %v1052
  %1054 = vmatmul.bf16.gmra.mxu0 %v671
  %v1055 = vpop.f32.mrf.mxu0
  %v1056 = vadd.f32 0.0, %v1055
  %v1057 = vpop.f32.mrf.mxu0
  %v1058 = vadd.f32 0.0, %v1057
  %1059 = vmatmul.bf16.gmra.mxu0 %v674
  %v1060 = vpop.f32.mrf.mxu0
  %v1061 = vadd.f32 0.0, %v1060
  %v1062 = vpop.f32.mrf.mxu0
  %v1063 = vadd.f32 0.0, %v1062
  %1064 = vmatmul.bf16.gmra.mxu0 %v677
  %v1065 = vpop.f32.mrf.mxu0
  %v1066 = vadd.f32 0.0, %v1065
  %v1067 = vpop.f32.mrf.mxu0
  %v1068 = vadd.f32 0.0, %v1067
  %1069 = vdwg.mxu0
  %v1070 = vadd.f32 %v995, %v1036
  %v1071 = vadd.f32 %v996, %v1038
  %v1072 = vadd.f32 %v997, %v1041
  %v1073 = vadd.f32 %v998, %v1043
  %v1074 = vadd.f32 %v999, %v1046
  %v1075 = vadd.f32 %v1000, %v1048
  %v1076 = vadd.f32 %v1001, %v1051
  %v1077 = vadd.f32 %v1002, %v1053
  %v1078 = vadd.f32 %v1003, %v1056
  %v1079 = vadd.f32 %v1004, %v1058
  %v1080 = vadd.f32 %v1005, %v1061
  %v1081 = vadd.f32 %v1006, %v1063
  %v1082 = vadd.f32 %v1007, %v1066
  %v1083 = vadd.f32 %v1008, %v1068
  %v1084 = vmax.f32 %v723, %v1070
  %v1085 = vmax.f32 %v724, %v1071
  %v1086 = vmax.f32 %v725, %v1072
  %v1087 = vmax.f32 %v726, %v1073
  %v1088 = vmax.f32 %v727, %v1074
  %v1089 = vmax.f32 %v728, %v1075
  %v1090 = vmax.f32 %v729, %v1076
  %v1091 = vmax.f32 %v730, %v1077
  %v1092 = vmax.f32 %v731, %v1078
  %v1093 = vmax.f32 %v732, %v1079
  %v1094 = vmax.f32 %v733, %v1080
  %v1095 = vmax.f32 %v734, %v1081
  %v1096 = vmax.f32 %v735, %v1082
  %v1097 = vmax.f32 %v736, %v1083
  %1098 = vmatpush.bf16.msra.mxu0 0
  %1099 = vmatpush.bf16.msra.mxu0 0
  %1100 = vmatpush.bf16.msra.mxu0 0
  %1101 = vmatpush.bf16.msra.mxu0 0
  %1102 = vmatpush.bf16.msra.mxu0 0
  %1103 = vmatpush.bf16.msra.mxu0 0
  %1104 = vmatpush.bf16.msra.mxu0 %v121
  %1105 = vmatpush.bf16.msra.mxu0 %v120
  %1106 = vmatmul.bf16.gmra.mxu0 %v369
  %v1107 = vpop.f32.mrf.mxu0
  %v1108 = vadd.f32 0.0, %v1107
  %v1109 = vpop.f32.mrf.mxu0
  %v1110 = vadd.f32 0.0, %v1109
  %1111 = vmatmul.bf16.gmra.mxu0 %v372
  %v1112 = vpop.f32.mrf.mxu0
  %v1113 = vadd.f32 0.0, %v1112
  %v1114 = vpop.f32.mrf.mxu0
  %v1115 = vadd.f32 0.0, %v1114
  %1116 = vmatmul.bf16.gmra.mxu0 %v375
  %v1117 = vpop.f32.mrf.mxu0
  %v1118 = vadd.f32 0.0, %v1117
  %v1119 = vpop.f32.mrf.mxu0
  %v1120 = vadd.f32 0.0, %v1119
  %1121 = vmatmul.bf16.gmra.mxu0 %v378
  %v1122 = vpop.f32.mrf.mxu0
  %v1123 = vadd.f32 0.0, %v1122
  %v1124 = vpop.f32.mrf.mxu0
  %v1125 = vadd.f32 0.0, %v1124
  %1126 = vmatmul.bf16.gmra.mxu0 %v381
  %v1127 = vpop.f32.mrf.mxu0
  %v1128 = vadd.f32 0.0, %v1127
  %v1129 = vpop.f32.mrf.mxu0
  %v1130 = vadd.f32 0.0, %v1129
  %1131 = vmatmul.bf16.gmra.mxu0 %v384
  %v1132 = vpop.f32.mrf.mxu0
  %v1133 = vadd.f32 0.0, %v1132
  %v1134 = vpop.f32.mrf.mxu0
  %v1135 = vadd.f32 0.0, %v1134
  %1136 = vmatmul.bf16.gmra.mxu0 %v387
  %v1137 = vpop.f32.mrf.mxu0
  %v1138 = vadd.f32 0.0, %v1137
  %v1139 = vpop.f32.mrf.mxu0
  %v1140 = vadd.f32 0.0, %v1139
  %1141 = vdwg.mxu0
  %1142 = vmatpush.bf16.msra.mxu0 0
  %1143 = vmatpush.bf16.msra.mxu0 0
  %1144 = vmatpush.bf16.msra.mxu0 0
  %1145 = vmatpush.bf16.msra.mxu0 0
  %1146 = vmatpush.bf16.msra.mxu0 0
  %1147 = vmatpush.bf16.msra.mxu0 0
  %1148 = vmatpush.bf16.msra.mxu0 %v234
  %1149 = vmatpush.bf16.msra.mxu0 %v233
  %1150 = vmatmul.bf16.gmra.mxu0 %v126
  %v1151 = vpop.f32.mrf.mxu0
  %v1152 = vadd.f32 %v1108, %v1151
  %v1153 = vpop.f32.mrf.mxu0
  %v1154 = vadd.f32 %v1110, %v1153
  %1155 = vmatmul.bf16.gmra.mxu0 %v129
  %v1156 = vpop.f32.mrf.mxu0
  %v1157 = vadd.f32 %v1113, %v1156
  %v1158 = vpop.f32.mrf.mxu0
  %v1159 = vadd.f32 %v1115, %v1158
  %1160 = vmatmul.bf16.gmra.mxu0 %v132
  %v1161 = vpop.f32.mrf.mxu0
  %v1162 = vadd.f32 %v1118, %v1161
  %v1163 = vpop.f32.mrf.mxu0
  %v1164 = vadd.f32 %v1120, %v1163
  %1165 = vmatmul.bf16.gmra.mxu0 %v135
  %v1166 = vpop.f32.mrf.mxu0
  %v1167 = vadd.f32 %v1123, %v1166
  %v1168 = vpop.f32.mrf.mxu0
  %v1169 = vadd.f32 %v1125, %v1168
  %1170 = vmatmul.bf16.gmra.mxu0 %v138
  %v1171 = vpop.f32.mrf.mxu0
  %v1172 = vadd.f32 %v1128, %v1171
  %v1173 = vpop.f32.mrf.mxu0
  %v1174 = vadd.f32 %v1130, %v1173
  %1175 = vmatmul.bf16.gmra.mxu0 %v141
  %v1176 = vpop.f32.mrf.mxu0
  %v1177 = vadd.f32 %v1133, %v1176
  %v1178 = vpop.f32.mrf.mxu0
  %v1179 = vadd.f32 %v1135, %v1178
  %1180 = vmatmul.bf16.gmra.mxu0 %v144
  %v1181 = vpop.f32.mrf.mxu0
  %v1182 = vadd.f32 %v1138, %v1181
  %v1183 = vpop.f32.mrf.mxu0
  %v1184 = vadd.f32 %v1140, %v1183
  %1185 = vdwg.mxu0
  %1186 = vmatpush.bf16.msra.mxu0 0
  %1187 = vmatpush.bf16.msra.mxu0 0
  %1188 = vmatpush.bf16.msra.mxu0 0
  %1189 = vmatpush.bf16.msra.mxu0 0
  %1190 = vmatpush.bf16.msra.mxu0 0
  %1191 = vmatpush.bf16.msra.mxu0 0
  %1192 = vmatpush.bf16.msra.mxu0 %v365
  %1193 = vmatpush.bf16.msra.mxu0 %v364
  %1194 = vmatmul.bf16.gmra.mxu0 %v514
  %v1195 = vpop.f32.mrf.mxu0
  %v1196 = vadd.f32 0.0, %v1195
  %v1197 = vpop.f32.mrf.mxu0
  %v1198 = vadd.f32 0.0, %v1197
  %1199 = vmatmul.bf16.gmra.mxu0 %v517
  %v1200 = vpop.f32.mrf.mxu0
  %v1201 = vadd.f32 0.0, %v1200
  %v1202 = vpop.f32.mrf.mxu0
  %v1203 = vadd.f32 0.0, %v1202
  %1204 = vmatmul.bf16.gmra.mxu0 %v520
  %v1205 = vpop.f32.mrf.mxu0
  %v1206 = vadd.f32 0.0, %v1205
  %v1207 = vpop.f32.mrf.mxu0
  %v1208 = vadd.f32 0.0, %v1207
  %1209 = vmatmul.bf16.gmra.mxu0 %v523
  %v1210 = vpop.f32.mrf.mxu0
  %v1211 = vadd.f32 0.0, %v1210
  %v1212 = vpop.f32.mrf.mxu0
  %v1213 = vadd.f32 0.0, %v1212
  %1214 = vmatmul.bf16.gmra.mxu0 %v526
  %v1215 = vpop.f32.mrf.mxu0
  %v1216 = vadd.f32 0.0, %v1215
  %v1217 = vpop.f32.mrf.mxu0
  %v1218 = vadd.f32 0.0, %v1217
  %1219 = vmatmul.bf16.gmra.mxu0 %v529
  %v1220 = vpop.f32.mrf.mxu0
  %v1221 = vadd.f32 0.0, %v1220
  %v1222 = vpop.f32.mrf.mxu0
  %v1223 = vadd.f32 0.0, %v1222
  %1224 = vmatmul.bf16.gmra.mxu0 %v532
  %v1225 = vpop.f32.mrf.mxu0
  %v1226 = vadd.f32 0.0, %v1225
  %v1227 = vpop.f32.mrf.mxu0
  %v1228 = vadd.f32 0.0, %v1227
  %1229 = vdwg.mxu0
  %v1230 = vadd.f32 %v1152, %v1196
  %v1231 = vadd.f32 %v1154, %v1198
  %v1232 = vadd.f32 %v1157, %v1201
  %v1233 = vadd.f32 %v1159, %v1203
  %v1234 = vadd.f32 %v1162, %v1206
  %v1235 = vadd.f32 %v1164, %v1208
  %v1236 = vadd.f32 %v1167, %v1211
  %v1237 = vadd.f32 %v1169, %v1213
  %v1238 = vadd.f32 %v1172, %v1216
  %v1239 = vadd.f32 %v1174, %v1218
  %v1240 = vadd.f32 %v1177, %v1221
  %v1241 = vadd.f32 %v1179, %v1223
  %v1242 = vadd.f32 %v1182, %v1226
  %v1243 = vadd.f32 %v1184, %v1228
  %1244 = vmatpush.bf16.msra.mxu0 0
  %1245 = vmatpush.bf16.msra.mxu0 0
  %1246 = vmatpush.bf16.msra.mxu0 0
  %1247 = vmatpush.bf16.msra.mxu0 0
  %1248 = vmatpush.bf16.msra.mxu0 0
  %1249 = vmatpush.bf16.msra.mxu0 0
  %1250 = vmatpush.bf16.msra.mxu0 %v510
  %1251 = vmatpush.bf16.msra.mxu0 %v509
  %1252 = vmatmul.bf16.gmra.mxu0 %v659
  %v1253 = vpop.f32.mrf.mxu0
  %v1254 = vadd.f32 0.0, %v1253
  %v1255 = vpop.f32.mrf.mxu0
  %v1256 = vadd.f32 0.0, %v1255
  %1257 = vmatmul.bf16.gmra.mxu0 %v662
  %v1258 = vpop.f32.mrf.mxu0
  %v1259 = vadd.f32 0.0, %v1258
  %v1260 = vpop.f32.mrf.mxu0
  %v1261 = vadd.f32 0.0, %v1260
  %1262 = vmatmul.bf16.gmra.mxu0 %v665
  %v1263 = vpop.f32.mrf.mxu0
  %v1264 = vadd.f32 0.0, %v1263
  %v1265 = vpop.f32.mrf.mxu0
  %v1266 = vadd.f32 0.0, %v1265
  %1267 = vmatmul.bf16.gmra.mxu0 %v668
  %v1268 = vpop.f32.mrf.mxu0
  %v1269 = vadd.f32 0.0, %v1268
  %v1270 = vpop.f32.mrf.mxu0
  %v1271 = vadd.f32 0.0, %v1270
  %1272 = vmatmul.bf16.gmra.mxu0 %v671
  %v1273 = vpop.f32.mrf.mxu0
  %v1274 = vadd.f32 0.0, %v1273
  %v1275 = vpop.f32.mrf.mxu0
  %v1276 = vadd.f32 0.0, %v1275
  %1277 = vmatmul.bf16.gmra.mxu0 %v674
  %v1278 = vpop.f32.mrf.mxu0
  %v1279 = vadd.f32 0.0, %v1278
  %v1280 = vpop.f32.mrf.mxu0
  %v1281 = vadd.f32 0.0, %v1280
  %1282 = vmatmul.bf16.gmra.mxu0 %v677
  %v1283 = vpop.f32.mrf.mxu0
  %v1284 = vadd.f32 0.0, %v1283
  %v1285 = vpop.f32.mrf.mxu0
  %v1286 = vadd.f32 0.0, %v1285
  %1287 = vdwg.mxu0
  %v1288 = vadd.f32 %v1230, %v1254
  %v1289 = vadd.f32 %v1231, %v1256
  %v1290 = vadd.f32 %v1232, %v1259
  %v1291 = vadd.f32 %v1233, %v1261
  %v1292 = vadd.f32 %v1234, %v1264
  %v1293 = vadd.f32 %v1235, %v1266
  %v1294 = vadd.f32 %v1236, %v1269
  %v1295 = vadd.f32 %v1237, %v1271
  %v1296 = vadd.f32 %v1238, %v1274
  %v1297 = vadd.f32 %v1239, %v1276
  %v1298 = vadd.f32 %v1240, %v1279
  %v1299 = vadd.f32 %v1241, %v1281
  %v1300 = vadd.f32 %v1242, %v1284
  %v1301 = vadd.f32 %v1243, %v1286
  %v1302 = vld [vmem:[%s57 + $0x8] sm:$0xf]
  %v1303 = vld [vmem:[%s57 + $0xc] sm:$0xf]
  %v1304 = vld [vmem:[%s57 + $0x10] sm:$0xf]
  %v1305 = vld [vmem:[%s57 + $0x14] sm:$0xf]
  %v1306 = vld [vmem:[%s57 + $0x18] sm:$0xf]
  %v1307 = vld [vmem:[%s57 + $0x1c] sm:$0xf]
  %v1308 = vld [vmem:[%s57 + $0x20] sm:$0xf]
  %v1309 = vld [vmem:[%s57 + $0x24] sm:$0xf]
  %v1310 = vld [vmem:[%s57 + $0x28] sm:$0xf]
  %v1311 = vld [vmem:[%s57 + $0x2c] sm:$0xf]
  %v1312 = vld [vmem:[%s57 + $0x30] sm:$0xf]
  %v1313 = vld [vmem:[%s57 + $0x34] sm:$0xf]
  %v1314 = vld [vmem:[%s57 + $0x38] sm:$0xf]
  %v1315 = vld [vmem:[%s57 + $0x3c] sm:$0xf]
  %v1330 = vunpack.c.l.b16 %v1302
  %v1331 = vunpack.c.l.b16 %v1303
  %v1332 = vunpack.c.l.b16 %v1304
  %v1333 = vunpack.c.l.b16 %v1305
  %v1334 = vunpack.c.l.b16 %v1306
  %v1335 = vunpack.c.l.b16 %v1307
  %v1336 = vunpack.c.l.b16 %v1308
  %v1337 = vunpack.c.l.b16 %v1309
  %v1338 = vunpack.c.l.b16 %v1310
  %v1339 = vunpack.c.l.b16 %v1311
  %v1340 = vunpack.c.l.b16 %v1312
  %v1341 = vunpack.c.l.b16 %v1313
  %v1342 = vunpack.c.l.b16 %v1314
  %v1343 = vunpack.c.l.b16 %v1315
  %v1344 = vpack.c.b16 %v1331, %v1330
  %v1345 = vpack.c.b16 %v1333, %v1332
  %v1346 = vpack.c.b16 %v1335, %v1334
  %v1347 = vpack.c.b16 %v1337, %v1336
  %v1348 = vpack.c.b16 %v1339, %v1338
  %v1349 = vpack.c.b16 %v1341, %v1340
  %v1350 = vpack.c.b16 %v1343, %v1342
  %v1352 = vsel %vm124, %v1344, 0
  %v1355 = vsel %vm124, %v1345, 0
  %v1358 = vsel %vm124, %v1346, 0
  %v1361 = vsel %vm124, %v1347, 0
  %v1364 = vsel %vm124, %v1348, 0
  %v1367 = vsel %vm124, %v1349, 0
  %v1370 = vsel %vm124, %v1350, 0
  %1372 = vmatpush.bf16.msra.mxu0 0
  %1373 = vmatpush.bf16.msra.mxu0 0
  %1374 = vmatpush.bf16.msra.mxu0 0
  %1375 = vmatpush.bf16.msra.mxu0 0
  %1376 = vmatpush.bf16.msra.mxu0 0
  %1377 = vmatpush.bf16.msra.mxu0 0
  %1378 = vmatpush.bf16.msra.mxu0 %v655
  %1379 = vmatpush.bf16.msra.mxu0 %v654
  %1380 = vmatmul.bf16.gmra.mxu0 %v1352
  %v1381 = vpop.f32.mrf.mxu0
  %v1382 = vadd.f32 0.0, %v1381
  %v1383 = vpop.f32.mrf.mxu0
  %v1384 = vadd.f32 0.0, %v1383
  %1385 = vmatmul.bf16.gmra.mxu0 %v1355
  %v1386 = vpop.f32.mrf.mxu0
  %v1387 = vadd.f32 0.0, %v1386
  %v1388 = vpop.f32.mrf.mxu0
  %v1389 = vadd.f32 0.0, %v1388
  %1390 = vmatmul.bf16.gmra.mxu0 %v1358
  %v1391 = vpop.f32.mrf.mxu0
  %v1392 = vadd.f32 0.0, %v1391
  %v1393 = vpop.f32.mrf.mxu0
  %v1394 = vadd.f32 0.0, %v1393
  %1395 = vmatmul.bf16.gmra.mxu0 %v1361
  %v1396 = vpop.f32.mrf.mxu0
  %v1397 = vadd.f32 0.0, %v1396
  %v1398 = vpop.f32.mrf.mxu0
  %v1399 = vadd.f32 0.0, %v1398
  %1400 = vmatmul.bf16.gmra.mxu0 %v1364
  %v1401 = vpop.f32.mrf.mxu0
  %v1402 = vadd.f32 0.0, %v1401
  %v1403 = vpop.f32.mrf.mxu0
  %v1404 = vadd.f32 0.0, %v1403
  %1405 = vmatmul.bf16.gmra.mxu0 %v1367
  %v1406 = vpop.f32.mrf.mxu0
  %v1407 = vadd.f32 0.0, %v1406
  %v1408 = vpop.f32.mrf.mxu0
  %v1409 = vadd.f32 0.0, %v1408
  %1410 = vmatmul.bf16.gmra.mxu0 %v1370
  %v1411 = vpop.f32.mrf.mxu0
  %v1412 = vadd.f32 0.0, %v1411
  %v1413 = vpop.f32.mrf.mxu0
  %v1414 = vadd.f32 0.0, %v1413
  %1415 = vdwg.mxu0
  %v1416 = vadd.f32 %v1288, %v1382
  %v1417 = vadd.f32 %v1289, %v1384
  %v1418 = vadd.f32 %v1290, %v1387
  %v1419 = vadd.f32 %v1291, %v1389
  %v1420 = vadd.f32 %v1292, %v1392
  %v1421 = vadd.f32 %v1293, %v1394
  %v1422 = vadd.f32 %v1294, %v1397
  %v1423 = vadd.f32 %v1295, %v1399
  %v1424 = vadd.f32 %v1296, %v1402
  %v1425 = vadd.f32 %v1297, %v1404
  %v1426 = vadd.f32 %v1298, %v1407
  %v1427 = vadd.f32 %v1299, %v1409
  %v1428 = vadd.f32 %v1300, %v1412
  %v1429 = vadd.f32 %v1301, %v1414
  %v1430 = vmax.f32 %v1084, %v1416
  %v1431 = vmax.f32 %v1085, %v1417
  %v1432 = vmax.f32 %v1086, %v1418
  %v1433 = vmax.f32 %v1087, %v1419
  %v1434 = vmax.f32 %v1088, %v1420
  %v1435 = vmax.f32 %v1089, %v1421
  %v1436 = vmax.f32 %v1090, %v1422
  %v1437 = vmax.f32 %v1091, %v1423
  %v1438 = vmax.f32 %v1092, %v1424
  %v1439 = vmax.f32 %v1093, %v1425
  %v1440 = vmax.f32 %v1094, %v1426
  %v1441 = vmax.f32 %v1095, %v1427
  %v1442 = vmax.f32 %v1096, %v1428
  %v1443 = vmax.f32 %v1097, %v1429
  %1444 = vmatpush.bf16.msra.mxu0 0
  %1445 = vmatpush.bf16.msra.mxu0 0
  %1446 = vmatpush.bf16.msra.mxu0 0
  %1447 = vmatpush.bf16.msra.mxu0 0
  %1448 = vmatpush.bf16.msra.mxu0 0
  %1449 = vmatpush.bf16.msra.mxu0 0
  %1450 = vmatpush.bf16.msra.mxu0 %v756
  %1451 = vmatpush.bf16.msra.mxu0 %v755
  %1452 = vmatmul.bf16.gmra.mxu0 %v369
  %v1453 = vpop.f32.mrf.mxu0
  %v1454 = vadd.f32 0.0, %v1453
  %v1455 = vpop.f32.mrf.mxu0
  %v1456 = vadd.f32 0.0, %v1455
  %1457 = vmatmul.bf16.gmra.mxu0 %v372
  %v1458 = vpop.f32.mrf.mxu0
  %v1459 = vadd.f32 0.0, %v1458
  %v1460 = vpop.f32.mrf.mxu0
  %v1461 = vadd.f32 0.0, %v1460
  %1462 = vmatmul.bf16.gmra.mxu0 %v375
  %v1463 = vpop.f32.mrf.mxu0
  %v1464 = vadd.f32 0.0, %v1463
  %v1465 = vpop.f32.mrf.mxu0
  %v1466 = vadd.f32 0.0, %v1465
  %1467 = vmatmul.bf16.gmra.mxu0 %v378
  %v1468 = vpop.f32.mrf.mxu0
  %v1469 = vadd.f32 0.0, %v1468
  %v1470 = vpop.f32.mrf.mxu0
  %v1471 = vadd.f32 0.0, %v1470
  %1472 = vmatmul.bf16.gmra.mxu0 %v381
  %v1473 = vpop.f32.mrf.mxu0
  %v1474 = vadd.f32 0.0, %v1473
  %v1475 = vpop.f32.mrf.mxu0
  %v1476 = vadd.f32 0.0, %v1475
  %1477 = vmatmul.bf16.gmra.mxu0 %v384
  %v1478 = vpop.f32.mrf.mxu0
  %v1479 = vadd.f32 0.0, %v1478
  %v1480 = vpop.f32.mrf.mxu0
  %v1481 = vadd.f32 0.0, %v1480
  %1482 = vmatmul.bf16.gmra.mxu0 %v387
  %v1483 = vpop.f32.mrf.mxu0
  %v1484 = vadd.f32 0.0, %v1483
  %v1485 = vpop.f32.mrf.mxu0
  %v1486 = vadd.f32 0.0, %v1485
  %1487 = vdwg.mxu0
  %1488 = vmatpush.bf16.msra.mxu0 0
  %1489 = vmatpush.bf16.msra.mxu0 0
  %1490 = vmatpush.bf16.msra.mxu0 0
  %1491 = vmatpush.bf16.msra.mxu0 0
  %1492 = vmatpush.bf16.msra.mxu0 0
  %1493 = vmatpush.bf16.msra.mxu0 0
  %1494 = vmatpush.bf16.msra.mxu0 %v812
  %1495 = vmatpush.bf16.msra.mxu0 %v811
  %1496 = vmatmul.bf16.gmra.mxu0 %v126
  %v1497 = vpop.f32.mrf.mxu0
  %v1498 = vadd.f32 %v1454, %v1497
  %v1499 = vpop.f32.mrf.mxu0
  %v1500 = vadd.f32 %v1456, %v1499
  %1501 = vmatmul.bf16.gmra.mxu0 %v129
  %v1502 = vpop.f32.mrf.mxu0
  %v1503 = vadd.f32 %v1459, %v1502
  %v1504 = vpop.f32.mrf.mxu0
  %v1505 = vadd.f32 %v1461, %v1504
  %1506 = vmatmul.bf16.gmra.mxu0 %v132
  %v1507 = vpop.f32.mrf.mxu0
  %v1508 = vadd.f32 %v1464, %v1507
  %v1509 = vpop.f32.mrf.mxu0
  %v1510 = vadd.f32 %v1466, %v1509
  %1511 = vmatmul.bf16.gmra.mxu0 %v135
  %v1512 = vpop.f32.mrf.mxu0
  %v1513 = vadd.f32 %v1469, %v1512
  %v1514 = vpop.f32.mrf.mxu0
  %v1515 = vadd.f32 %v1471, %v1514
  %1516 = vmatmul.bf16.gmra.mxu0 %v138
  %v1517 = vpop.f32.mrf.mxu0
  %v1518 = vadd.f32 %v1474, %v1517
  %v1519 = vpop.f32.mrf.mxu0
  %v1520 = vadd.f32 %v1476, %v1519
  %1521 = vmatmul.bf16.gmra.mxu0 %v141
  %v1522 = vpop.f32.mrf.mxu0
  %v1523 = vadd.f32 %v1479, %v1522
  %v1524 = vpop.f32.mrf.mxu0
  %v1525 = vadd.f32 %v1481, %v1524
  %1526 = vmatmul.bf16.gmra.mxu0 %v144
  %v1527 = vpop.f32.mrf.mxu0
  %v1528 = vadd.f32 %v1484, %v1527
  %v1529 = vpop.f32.mrf.mxu0
  %v1530 = vadd.f32 %v1486, %v1529
  %1531 = vdwg.mxu0
  %1532 = vmatpush.bf16.msra.mxu0 0
  %1533 = vmatpush.bf16.msra.mxu0 0
  %1534 = vmatpush.bf16.msra.mxu0 0
  %1535 = vmatpush.bf16.msra.mxu0 0
  %1536 = vmatpush.bf16.msra.mxu0 0
  %1537 = vmatpush.bf16.msra.mxu0 0
  %1538 = vmatpush.bf16.msra.mxu0 %v873
  %1539 = vmatpush.bf16.msra.mxu0 %v872
  %1540 = vmatmul.bf16.gmra.mxu0 %v514
  %v1541 = vpop.f32.mrf.mxu0
  %v1542 = vadd.f32 0.0, %v1541
  %v1543 = vpop.f32.mrf.mxu0
  %v1544 = vadd.f32 0.0, %v1543
  %1545 = vmatmul.bf16.gmra.mxu0 %v517
  %v1546 = vpop.f32.mrf.mxu0
  %v1547 = vadd.f32 0.0, %v1546
  %v1548 = vpop.f32.mrf.mxu0
  %v1549 = vadd.f32 0.0, %v1548
  %1550 = vmatmul.bf16.gmra.mxu0 %v520
  %v1551 = vpop.f32.mrf.mxu0
  %v1552 = vadd.f32 0.0, %v1551
  %v1553 = vpop.f32.mrf.mxu0
  %v1554 = vadd.f32 0.0, %v1553
  %1555 = vmatmul.bf16.gmra.mxu0 %v523
  %v1556 = vpop.f32.mrf.mxu0
  %v1557 = vadd.f32 0.0, %v1556
  %v1558 = vpop.f32.mrf.mxu0
  %v1559 = vadd.f32 0.0, %v1558
  %1560 = vmatmul.bf16.gmra.mxu0 %v526
  %v1561 = vpop.f32.mrf.mxu0
  %v1562 = vadd.f32 0.0, %v1561
  %v1563 = vpop.f32.mrf.mxu0
  %v1564 = vadd.f32 0.0, %v1563
  %1565 = vmatmul.bf16.gmra.mxu0 %v529
  %v1566 = vpop.f32.mrf.mxu0
  %v1567 = vadd.f32 0.0, %v1566
  %v1568 = vpop.f32.mrf.mxu0
  %v1569 = vadd.f32 0.0, %v1568
  %1570 = vmatmul.bf16.gmra.mxu0 %v532
  %v1571 = vpop.f32.mrf.mxu0
  %v1572 = vadd.f32 0.0, %v1571
  %v1573 = vpop.f32.mrf.mxu0
  %v1574 = vadd.f32 0.0, %v1573
  %1575 = vdwg.mxu0
  %v1576 = vadd.f32 %v1498, %v1542
  %v1577 = vadd.f32 %v1500, %v1544
  %v1578 = vadd.f32 %v1503, %v1547
  %v1579 = vadd.f32 %v1505, %v1549
  %v1580 = vadd.f32 %v1508, %v1552
  %v1581 = vadd.f32 %v1510, %v1554
  %v1582 = vadd.f32 %v1513, %v1557
  %v1583 = vadd.f32 %v1515, %v1559
  %v1584 = vadd.f32 %v1518, %v1562
  %v1585 = vadd.f32 %v1520, %v1564
  %v1586 = vadd.f32 %v1523, %v1567
  %v1587 = vadd.f32 %v1525, %v1569
  %v1588 = vadd.f32 %v1528, %v1572
  %v1589 = vadd.f32 %v1530, %v1574
  %1590 = vmatpush.bf16.msra.mxu0 0
  %1591 = vmatpush.bf16.msra.mxu0 0
  %1592 = vmatpush.bf16.msra.mxu0 0
  %1593 = vmatpush.bf16.msra.mxu0 0
  %1594 = vmatpush.bf16.msra.mxu0 0
  %1595 = vmatpush.bf16.msra.mxu0 0
  %1596 = vmatpush.bf16.msra.mxu0 %v948
  %1597 = vmatpush.bf16.msra.mxu0 %v947
  %1598 = vmatmul.bf16.gmra.mxu0 %v659
  %v1599 = vpop.f32.mrf.mxu0
  %v1600 = vadd.f32 0.0, %v1599
  %v1601 = vpop.f32.mrf.mxu0
  %v1602 = vadd.f32 0.0, %v1601
  %1603 = vmatmul.bf16.gmra.mxu0 %v662
  %v1604 = vpop.f32.mrf.mxu0
  %v1605 = vadd.f32 0.0, %v1604
  %v1606 = vpop.f32.mrf.mxu0
  %v1607 = vadd.f32 0.0, %v1606
  %1608 = vmatmul.bf16.gmra.mxu0 %v665
  %v1609 = vpop.f32.mrf.mxu0
  %v1610 = vadd.f32 0.0, %v1609
  %v1611 = vpop.f32.mrf.mxu0
  %v1612 = vadd.f32 0.0, %v1611
  %1613 = vmatmul.bf16.gmra.mxu0 %v668
  %v1614 = vpop.f32.mrf.mxu0
  %v1615 = vadd.f32 0.0, %v1614
  %v1616 = vpop.f32.mrf.mxu0
  %v1617 = vadd.f32 0.0, %v1616
  %1618 = vmatmul.bf16.gmra.mxu0 %v671
  %v1619 = vpop.f32.mrf.mxu0
  %v1620 = vadd.f32 0.0, %v1619
  %v1621 = vpop.f32.mrf.mxu0
  %v1622 = vadd.f32 0.0, %v1621
  %1623 = vmatmul.bf16.gmra.mxu0 %v674
  %v1624 = vpop.f32.mrf.mxu0
  %v1625 = vadd.f32 0.0, %v1624
  %v1626 = vpop.f32.mrf.mxu0
  %v1627 = vadd.f32 0.0, %v1626
  %1628 = vmatmul.bf16.gmra.mxu0 %v677
  %v1629 = vpop.f32.mrf.mxu0
  %v1630 = vadd.f32 0.0, %v1629
  %v1631 = vpop.f32.mrf.mxu0
  %v1632 = vadd.f32 0.0, %v1631
  %1633 = vdwg.mxu0
  %v1634 = vadd.f32 %v1576, %v1600
  %v1635 = vadd.f32 %v1577, %v1602
  %v1636 = vadd.f32 %v1578, %v1605
  %v1637 = vadd.f32 %v1579, %v1607
  %v1638 = vadd.f32 %v1580, %v1610
  %v1639 = vadd.f32 %v1581, %v1612
  %v1640 = vadd.f32 %v1582, %v1615
  %v1641 = vadd.f32 %v1583, %v1617
  %v1642 = vadd.f32 %v1584, %v1620
  %v1643 = vadd.f32 %v1585, %v1622
  %v1644 = vadd.f32 %v1586, %v1625
  %v1645 = vadd.f32 %v1587, %v1627
  %v1646 = vadd.f32 %v1588, %v1630
  %v1647 = vadd.f32 %v1589, %v1632
  %1648 = vmatpush.bf16.msra.mxu0 0
  %1649 = vmatpush.bf16.msra.mxu0 0
  %1650 = vmatpush.bf16.msra.mxu0 0
  %1651 = vmatpush.bf16.msra.mxu0 0
  %1652 = vmatpush.bf16.msra.mxu0 0
  %1653 = vmatpush.bf16.msra.mxu0 0
  %1654 = vmatpush.bf16.msra.mxu0 %v1023
  %1655 = vmatpush.bf16.msra.mxu0 %v1022
  %1656 = vmatmul.bf16.gmra.mxu0 %v1352
  %v1657 = vpop.f32.mrf.mxu0
  %v1658 = vadd.f32 0.0, %v1657
  %v1659 = vpop.f32.mrf.mxu0
  %v1660 = vadd.f32 0.0, %v1659
  %1661 = vmatmul.bf16.gmra.mxu0 %v1355
  %v1662 = vpop.f32.mrf.mxu0
  %v1663 = vadd.f32 0.0, %v1662
  %v1664 = vpop.f32.mrf.mxu0
  %v1665 = vadd.f32 0.0, %v1664
  %1666 = vmatmul.bf16.gmra.mxu0 %v1358
  %v1667 = vpop.f32.mrf.mxu0
  %v1668 = vadd.f32 0.0, %v1667
  %v1669 = vpop.f32.mrf.mxu0
  %v1670 = vadd.f32 0.0, %v1669
  %1671 = vmatmul.bf16.gmra.mxu0 %v1361
  %v1672 = vpop.f32.mrf.mxu0
  %v1673 = vadd.f32 0.0, %v1672
  %v1674 = vpop.f32.mrf.mxu0
  %v1675 = vadd.f32 0.0, %v1674
  %1676 = vmatmul.bf16.gmra.mxu0 %v1364
  %v1677 = vpop.f32.mrf.mxu0
  %v1678 = vadd.f32 0.0, %v1677
  %v1679 = vpop.f32.mrf.mxu0
  %v1680 = vadd.f32 0.0, %v1679
  %1681 = vmatmul.bf16.gmra.mxu0 %v1367
  %v1682 = vpop.f32.mrf.mxu0
  %v1683 = vadd.f32 0.0, %v1682
  %v1684 = vpop.f32.mrf.mxu0
  %v1685 = vadd.f32 0.0, %v1684
  %1686 = vmatmul.bf16.gmra.mxu0 %v1370
  %v1687 = vpop.f32.mrf.mxu0
  %v1688 = vadd.f32 0.0, %v1687
  %v1689 = vpop.f32.mrf.mxu0
  %v1690 = vadd.f32 0.0, %v1689
  %1691 = vdwg.mxu0
  %v1692 = vadd.f32 %v1634, %v1658
  %v1693 = vadd.f32 %v1635, %v1660
  %v1694 = vadd.f32 %v1636, %v1663
  %v1695 = vadd.f32 %v1637, %v1665
  %v1696 = vadd.f32 %v1638, %v1668
  %v1697 = vadd.f32 %v1639, %v1670
  %v1698 = vadd.f32 %v1640, %v1673
  %v1699 = vadd.f32 %v1641, %v1675
  %v1700 = vadd.f32 %v1642, %v1678
  %v1701 = vadd.f32 %v1643, %v1680
  %v1702 = vadd.f32 %v1644, %v1683
  %v1703 = vadd.f32 %v1645, %v1685
  %v1704 = vadd.f32 %v1646, %v1688
  %v1705 = vadd.f32 %v1647, %v1690
  %v1706 = vmax.f32 %v1430, %v1692
  %v1707 = vmax.f32 %v1431, %v1693
  %v1708 = vmax.f32 %v1432, %v1694
  %v1709 = vmax.f32 %v1433, %v1695
  %v1710 = vmax.f32 %v1434, %v1696
  %v1711 = vmax.f32 %v1435, %v1697
  %v1712 = vmax.f32 %v1436, %v1698
  %v1713 = vmax.f32 %v1437, %v1699
  %v1714 = vmax.f32 %v1438, %v1700
  %v1715 = vmax.f32 %v1439, %v1701
  %v1716 = vmax.f32 %v1440, %v1702
  %v1717 = vmax.f32 %v1441, %v1703
  %v1718 = vmax.f32 %v1442, %v1704
  %v1719 = vmax.f32 %v1443, %v1705
  %v1720 = vld [vmem:[%s2] sm:$0x1]
  %v1722 = vperm.slane %v1720, 0
  %v1724 = vadd.f32 %v1706, %v1722
  %v1725 = vadd.f32 %v1707, %v1722
  %v1726 = vadd.f32 %v1708, %v1722
  %v1727 = vadd.f32 %v1709, %v1722
  %v1728 = vadd.f32 %v1710, %v1722
  %v1729 = vadd.f32 %v1711, %v1722
  %v1730 = vadd.f32 %v1712, %v1722
  %v1731 = vadd.f32 %v1713, %v1722
  %v1732 = vadd.f32 %v1714, %v1722
  %v1733 = vadd.f32 %v1715, %v1722
  %v1734 = vadd.f32 %v1716, %v1722
  %v1735 = vadd.f32 %v1717, %v1722
  %v1736 = vadd.f32 %v1718, %v1722
  %v1737 = vadd.f32 %v1719, %v1722
  %v1738 = vtanh.pop %v1724
  %v1739 = vtanh.pop %v1725
  %v1740 = vtanh.pop %v1726
  %v1741 = vtanh.pop %v1727
  %v1742 = vtanh.pop %v1728
  %v1743 = vtanh.pop %v1729
  %v1744 = vtanh.pop %v1730
  %v1745 = vtanh.pop %v1731
  %v1746 = vtanh.pop %v1732
  %v1747 = vtanh.pop %v1733
  %v1748 = vtanh.pop %v1734
  %v1749 = vtanh.pop %v1735
  %v1750 = vtanh.pop %v1736
  %v1751 = vtanh.pop %v1737
  %v1752 = vpack.c.bf16 %v1738, %v1738
  %v1753 = vpack.c.bf16 %v1739, %v1739
  %v1754 = vpack.c.bf16 %v1740, %v1740
  %v1755 = vpack.c.bf16 %v1741, %v1741
  %v1756 = vpack.c.bf16 %v1742, %v1742
  %v1757 = vpack.c.bf16 %v1743, %v1743
  %v1758 = vpack.c.bf16 %v1744, %v1744
  %v1759 = vpack.c.bf16 %v1745, %v1745
  %v1760 = vpack.c.bf16 %v1746, %v1746
  %v1761 = vpack.c.bf16 %v1747, %v1747
  %v1762 = vpack.c.bf16 %v1748, %v1748
  %v1763 = vpack.c.bf16 %v1749, %v1749
  %v1764 = vpack.c.bf16 %v1750, %v1750
  %v1765 = vpack.c.bf16 %v1751, %v1751
  %vm1766 = vcmask 683008
  %1767 = vst.msk [vmem:[#allocation2] sm:$0xf] %vm1766, %v1752
  %s1768 = scalar_lea.vmem [#allocation2], 28
  %1769 = vst.msk [vmem:[%s1768] sm:$0xf] %vm1766, %v1753
  %1770 = vst.msk [vmem:[#allocation2 + $0x4] sm:$0xf] %vm1766, %v1754
  %1771 = vst.msk [vmem:[%s1768 + $0x4] sm:$0xf] %vm1766, %v1755
  %1772 = vst.msk [vmem:[#allocation2 + $0x8] sm:$0xf] %vm1766, %v1756
  %1773 = vst.msk [vmem:[%s1768 + $0x8] sm:$0xf] %vm1766, %v1757
  %1774 = vst.msk [vmem:[#allocation2 + $0xc] sm:$0xf] %vm1766, %v1758
  %1775 = vst.msk [vmem:[%s1768 + $0xc] sm:$0xf] %vm1766, %v1759
  %1776 = vst.msk [vmem:[#allocation2 + $0x10] sm:$0xf] %vm1766, %v1760
  %1777 = vst.msk [vmem:[%s1768 + $0x10] sm:$0xf] %vm1766, %v1761
  %1778 = vst.msk [vmem:[#allocation2 + $0x14] sm:$0xf] %vm1766, %v1762
  %1779 = vst.msk [vmem:[%s1768 + $0x14] sm:$0xf] %vm1766, %v1763
  %1780 = vst.msk [vmem:[#allocation2 + $0x18] sm:$0xf] %vm1766, %v1764
  %1781 = vst.msk [vmem:[%s1768 + $0x18] sm:$0xf] %vm1766, %v1765
  %v1782 = vld [vmem:[#allocation2] sm:$0xf]
  %v1783 = vld [vmem:[#allocation2 + $0x4] sm:$0xf]
  %v1784 = vld [vmem:[#allocation2 + $0x8] sm:$0xf]
  %v1785 = vld [vmem:[#allocation2 + $0xc] sm:$0xf]
  %v1786 = vld [vmem:[#allocation2 + $0x10] sm:$0xf]
  %v1787 = vld [vmem:[%s3] sm:$0xf]
  %v1788 = vld [vmem:[%s3 + $0x4] sm:$0xf]
  %v1789 = vld [vmem:[%s3 + $0x8] sm:$0xf]
  %v1790 = vld [vmem:[%s3 + $0xc] sm:$0xf]
  %v1791 = vld [vmem:[%s3 + $0x10] sm:$0xf]
  %v1792 = vld [vmem:[%s3 + $0x14] sm:$0xf]
  %v1793 = vld [vmem:[%s3 + $0x18] sm:$0xf]
  %v1794 = vld [vmem:[%s3 + $0x1c] sm:$0xf]
  %v1795 = vld [vmem:[%s3 + $0x20] sm:$0xf]
  %v1796 = vld [vmem:[%s3 + $0x24] sm:$0xf]
  %v1797 = vld [vmem:[%s3 + $0x28] sm:$0x3]
  %v1798 = vld [vmem:[%s1768] sm:$0xf]
  %v1799 = vld [vmem:[%s1768 + $0x4] sm:$0xf]
  %v1800 = vld [vmem:[%s1768 + $0x8] sm:$0xf]
  %v1801 = vld [vmem:[%s1768 + $0xc] sm:$0xf]
  %v1802 = vld [vmem:[%s1768 + $0x10] sm:$0xf]
  %s1803 = scalar_lea.vmem %s3, 44
  %v1804 = vld [vmem:[%s1803] sm:$0xf]
  %v1805 = vld [vmem:[%s1803 + $0x4] sm:$0xf]
  %v1806 = vld [vmem:[%s1803 + $0x8] sm:$0xf]
  %v1807 = vld [vmem:[%s1803 + $0xc] sm:$0xf]
  %v1808 = vld [vmem:[%s1803 + $0x10] sm:$0xf]
  %v1809 = vld [vmem:[%s1803 + $0x14] sm:$0xf]
  %v1810 = vld [vmem:[%s1803 + $0x18] sm:$0xf]
  %v1811 = vld [vmem:[%s1803 + $0x1c] sm:$0xf]
  %v1812 = vld [vmem:[%s1803 + $0x20] sm:$0xf]
  %v1813 = vld [vmem:[%s1803 + $0x24] sm:$0xf]
  %v1814 = vld [vmem:[%s1803 + $0x28] sm:$0x3]
  %v1820 = vunpack.c.l.b16 %v1798
  %v1821 = vunpack.c.l.b16 %v1799
  %v1822 = vunpack.c.l.b16 %v1800
  %v1823 = vunpack.c.l.b16 %v1801
  %v1824 = vunpack.c.l.b16 %v1802
  %v1825 = vpack.c.b16 %v1821, %v1820
  %v1826 = vpack.c.b16 %v1823, %v1822
  %v1827 = vpack.c.b16 %v1824, %v1824
  %v1839 = vunpack.c.l.b16 %v1804
  %v1840 = vunpack.c.l.b16 %v1805
  %v1841 = vunpack.c.l.b16 %v1806
  %v1842 = vunpack.c.l.b16 %v1807
  %v1843 = vunpack.c.l.b16 %v1808
  %v1844 = vunpack.c.l.b16 %v1809
  %v1845 = vunpack.c.l.b16 %v1810
  %v1846 = vunpack.c.l.b16 %v1811
  %v1847 = vunpack.c.l.b16 %v1812
  %v1848 = vunpack.c.l.b16 %v1813
  %v1849 = vunpack.c.l.b16 %v1814
  %v1850 = vpack.c.b16 %v1840, %v1839
  %v1851 = vpack.c.b16 %v1842, %v1841
  %v1852 = vpack.c.b16 %v1844, %v1843
  %v1853 = vpack.c.b16 %v1846, %v1845
  %v1854 = vpack.c.b16 %v1848, %v1847
  %v1855 = vpack.c.b16 %v1849, %v1849
  %vm1861 = vcmask 687104
  %v1863 = vsel %vm1861, %v1825, 0
  %v1866 = vsel %vm1861, %v1826, 0
  %v1869 = vsel %vm1861, %v1827, 0
  %vm1871 = vcmask 1041408
  %v1873 = vsel %vm1871, %v1855, 0
  %1875 = vmatpush.bf16.msra.mxu0 0
  %1876 = vmatpush.bf16.msra.mxu0 0
  %1877 = vmatpush.bf16.msra.mxu0 %v1873
  %1878 = vmatpush.bf16.msra.mxu0 %v1854
  %1879 = vmatpush.bf16.msra.mxu0 %v1853
  %1880 = vmatpush.bf16.msra.mxu0 %v1852
  %1881 = vmatpush.bf16.msra.mxu0 %v1851
  %1882 = vmatpush.bf16.msra.mxu0 %v1850
  %1883 = vmatmul.bf16.gmra.mxu0 %v1863
  %v1884 = vpop.f32.mrf.mxu0
  %v1885 = vadd.f32 0.0, %v1884
  %v1886 = vpop.f32.mrf.mxu0
  %v1887 = vadd.f32 0.0, %v1886
  %1888 = vmatmul.bf16.gmra.mxu0 %v1866
  %v1889 = vpop.f32.mrf.mxu0
  %v1890 = vadd.f32 0.0, %v1889
  %v1891 = vpop.f32.mrf.mxu0
  %v1892 = vadd.f32 0.0, %v1891
  %1893 = vmatmul.bf16.gmra.mxu0 %v1869
  %v1894 = vpop.f32.mrf.mxu0
  %v1895 = vadd.f32 0.0, %v1894
  %v1896 = vpop.f32.mrf.mxu0
  %1897 = vdwg.mxu0
  %v1903 = vunpack.c.l.b16 %v1782
  %v1904 = vunpack.c.l.b16 %v1783
  %v1905 = vunpack.c.l.b16 %v1784
  %v1906 = vunpack.c.l.b16 %v1785
  %v1907 = vunpack.c.l.b16 %v1786
  %v1908 = vpack.c.b16 %v1904, %v1903
  %v1909 = vpack.c.b16 %v1906, %v1905
  %v1910 = vpack.c.b16 %v1907, %v1907
  %v1922 = vunpack.c.l.b16 %v1787
  %v1923 = vunpack.c.l.b16 %v1788
  %v1924 = vunpack.c.l.b16 %v1789
  %v1925 = vunpack.c.l.b16 %v1790
  %v1926 = vunpack.c.l.b16 %v1791
  %v1927 = vunpack.c.l.b16 %v1792
  %v1928 = vunpack.c.l.b16 %v1793
  %v1929 = vunpack.c.l.b16 %v1794
  %v1930 = vunpack.c.l.b16 %v1795
  %v1931 = vunpack.c.l.b16 %v1796
  %v1932 = vunpack.c.l.b16 %v1797
  %v1933 = vpack.c.b16 %v1923, %v1922
  %v1934 = vpack.c.b16 %v1925, %v1924
  %v1935 = vpack.c.b16 %v1927, %v1926
  %v1936 = vpack.c.b16 %v1929, %v1928
  %v1937 = vpack.c.b16 %v1931, %v1930
  %v1938 = vpack.c.b16 %v1932, %v1932
  %v1945 = vsel %vm1861, %v1908, 0
  %v1948 = vsel %vm1861, %v1909, 0
  %v1951 = vsel %vm1861, %v1910, 0
  %v1954 = vsel %vm1871, %v1938, 0
  %1956 = vmatpush.bf16.msra.mxu0 0
  %1957 = vmatpush.bf16.msra.mxu0 0
  %1958 = vmatpush.bf16.msra.mxu0 %v1954
  %1959 = vmatpush.bf16.msra.mxu0 %v1937
  %1960 = vmatpush.bf16.msra.mxu0 %v1936
  %1961 = vmatpush.bf16.msra.mxu0 %v1935
  %1962 = vmatpush.bf16.msra.mxu0 %v1934
  %1963 = vmatpush.bf16.msra.mxu0 %v1933
  %1964 = vmatmul.bf16.gmra.mxu0 %v1945
  %v1965 = vpop.f32.mrf.mxu0
  %v1966 = vadd.f32 %v1885, %v1965
  %v1967 = vpop.f32.mrf.mxu0
  %v1968 = vadd.f32 %v1887, %v1967
  %1969 = vmatmul.bf16.gmra.mxu0 %v1948
  %v1970 = vpop.f32.mrf.mxu0
  %v1971 = vadd.f32 %v1890, %v1970
  %v1972 = vpop.f32.mrf.mxu0
  %v1973 = vadd.f32 %v1892, %v1972
  %1974 = vmatmul.bf16.gmra.mxu0 %v1951
  %v1975 = vpop.f32.mrf.mxu0
  %v1976 = vadd.f32 %v1895, %v1975
  %v1977 = vpop.f32.mrf.mxu0
  %1978 = vdwg.mxu0
  %v1979 = vld [vmem:[#allocation2 + $0x4] sm:$0xf]
  %v1980 = vld [vmem:[#allocation2 + $0x8] sm:$0xf]
  %v1981 = vld [vmem:[#allocation2 + $0xc] sm:$0xf]
  %v1982 = vld [vmem:[#allocation2 + $0x10] sm:$0xf]
  %v1983 = vld [vmem:[#allocation2 + $0x14] sm:$0xf]
  %s1984 = scalar_lea.vmem %s3, 88
  %v1985 = vld [vmem:[%s1984] sm:$0xf]
  %v1986 = vld [vmem:[%s1984 + $0x4] sm:$0xf]
  %v1987 = vld [vmem:[%s1984 + $0x8] sm:$0xf]
  %v1988 = vld [vmem:[%s1984 + $0xc] sm:$0xf]
  %v1989 = vld [vmem:[%s1984 + $0x10] sm:$0xf]
  %v1990 = vld [vmem:[%s1984 + $0x14] sm:$0xf]
  %v1991 = vld [vmem:[%s1984 + $0x18] sm:$0xf]
  %v1992 = vld [vmem:[%s1984 + $0x1c] sm:$0xf]
  %v1993 = vld [vmem:[%s1984 + $0x20] sm:$0xf]
  %v1994 = vld [vmem:[%s1984 + $0x24] sm:$0xf]
  %v1995 = vld [vmem:[%s1984 + $0x28] sm:$0x3]
  %v2001 = vunpack.c.l.b16 %v1979
  %v2002 = vunpack.c.l.b16 %v1980
  %v2003 = vunpack.c.l.b16 %v1981
  %v2004 = vunpack.c.l.b16 %v1982
  %v2005 = vunpack.c.l.b16 %v1983
  %v2006 = vpack.c.b16 %v2002, %v2001
  %v2007 = vpack.c.b16 %v2004, %v2003
  %v2008 = vpack.c.b16 %v2005, %v2005
  %v2020 = vunpack.c.l.b16 %v1985
  %v2021 = vunpack.c.l.b16 %v1986
  %v2022 = vunpack.c.l.b16 %v1987
  %v2023 = vunpack.c.l.b16 %v1988
  %v2024 = vunpack.c.l.b16 %v1989
  %v2025 = vunpack.c.l.b16 %v1990
  %v2026 = vunpack.c.l.b16 %v1991
  %v2027 = vunpack.c.l.b16 %v1992
  %v2028 = vunpack.c.l.b16 %v1993
  %v2029 = vunpack.c.l.b16 %v1994
  %v2030 = vunpack.c.l.b16 %v1995
  %v2031 = vpack.c.b16 %v2021, %v2020
  %v2032 = vpack.c.b16 %v2023, %v2022
  %v2033 = vpack.c.b16 %v2025, %v2024
  %v2034 = vpack.c.b16 %v2027, %v2026
  %v2035 = vpack.c.b16 %v2029, %v2028
  %v2036 = vpack.c.b16 %v2030, %v2030
  %v2043 = vsel %vm1861, %v2006, 0
  %v2046 = vsel %vm1861, %v2007, 0
  %v2049 = vsel %vm1861, %v2008, 0
  %v2052 = vsel %vm1871, %v2036, 0
  %2054 = vmatpush.bf16.msra.mxu0 0
  %2055 = vmatpush.bf16.msra.mxu0 0
  %2056 = vmatpush.bf16.msra.mxu0 %v2052
  %2057 = vmatpush.bf16.msra.mxu0 %v2035
  %2058 = vmatpush.bf16.msra.mxu0 %v2034
  %2059 = vmatpush.bf16.msra.mxu0 %v2033
  %2060 = vmatpush.bf16.msra.mxu0 %v2032
  %2061 = vmatpush.bf16.msra.mxu0 %v2031
  %2062 = vmatmul.bf16.gmra.mxu0 %v2043
  %v2063 = vpop.f32.mrf.mxu0
  %v2064 = vadd.f32 0.0, %v2063
  %v2065 = vpop.f32.mrf.mxu0
  %v2066 = vadd.f32 0.0, %v2065
  %2067 = vmatmul.bf16.gmra.mxu0 %v2046
  %v2068 = vpop.f32.mrf.mxu0
  %v2069 = vadd.f32 0.0, %v2068
  %v2070 = vpop.f32.mrf.mxu0
  %v2071 = vadd.f32 0.0, %v2070
  %2072 = vmatmul.bf16.gmra.mxu0 %v2049
  %v2073 = vpop.f32.mrf.mxu0
  %v2074 = vadd.f32 0.0, %v2073
  %v2075 = vpop.f32.mrf.mxu0
  %2076 = vdwg.mxu0
  %v2077 = vadd.f32 %v1966, %v2064
  %v2078 = vadd.f32 %v1968, %v2066
  %v2079 = vadd.f32 %v1971, %v2069
  %v2080 = vadd.f32 %v1973, %v2071
  %v2081 = vadd.f32 %v1976, %v2074
  %v2082 = vld [vmem:[%s1768 + $0x4] sm:$0xf]
  %v2083 = vld [vmem:[%s1768 + $0x8] sm:$0xf]
  %v2084 = vld [vmem:[%s1768 + $0xc] sm:$0xf]
  %v2085 = vld [vmem:[%s1768 + $0x10] sm:$0xf]
  %v2086 = vld [vmem:[%s1768 + $0x14] sm:$0xf]
  %s2087 = scalar_lea.vmem %s3, 132
  %v2088 = vld [vmem:[%s2087] sm:$0xf]
  %v2089 = vld [vmem:[%s2087 + $0x4] sm:$0xf]
  %v2090 = vld [vmem:[%s2087 + $0x8] sm:$0xf]
  %v2091 = vld [vmem:[%s2087 + $0xc] sm:$0xf]
  %v2092 = vld [vmem:[%s2087 + $0x10] sm:$0xf]
  %v2093 = vld [vmem:[%s2087 + $0x14] sm:$0xf]
  %v2094 = vld [vmem:[%s2087 + $0x18] sm:$0xf]
  %v2095 = vld [vmem:[%s2087 + $0x1c] sm:$0xf]
  %v2096 = vld [vmem:[%s2087 + $0x20] sm:$0xf]
  %v2097 = vld [vmem:[%s2087 + $0x24] sm:$0xf]
  %v2098 = vld [vmem:[%s2087 + $0x28] sm:$0x3]
  %v2104 = vunpack.c.l.b16 %v2082
  %v2105 = vunpack.c.l.b16 %v2083
  %v2106 = vunpack.c.l.b16 %v2084
  %v2107 = vunpack.c.l.b16 %v2085
  %v2108 = vunpack.c.l.b16 %v2086
  %v2109 = vpack.c.b16 %v2105, %v2104
  %v2110 = vpack.c.b16 %v2107, %v2106
  %v2111 = vpack.c.b16 %v2108, %v2108
  %v2123 = vunpack.c.l.b16 %v2088
  %v2124 = vunpack.c.l.b16 %v2089
  %v2125 = vunpack.c.l.b16 %v2090
  %v2126 = vunpack.c.l.b16 %v2091
  %v2127 = vunpack.c.l.b16 %v2092
  %v2128 = vunpack.c.l.b16 %v2093
  %v2129 = vunpack.c.l.b16 %v2094
  %v2130 = vunpack.c.l.b16 %v2095
  %v2131 = vunpack.c.l.b16 %v2096
  %v2132 = vunpack.c.l.b16 %v2097
  %v2133 = vunpack.c.l.b16 %v2098
  %v2134 = vpack.c.b16 %v2124, %v2123
  %v2135 = vpack.c.b16 %v2126, %v2125
  %v2136 = vpack.c.b16 %v2128, %v2127
  %v2137 = vpack.c.b16 %v2130, %v2129
  %v2138 = vpack.c.b16 %v2132, %v2131
  %v2139 = vpack.c.b16 %v2133, %v2133
  %v2146 = vsel %vm1861, %v2109, 0
  %v2149 = vsel %vm1861, %v2110, 0
  %v2152 = vsel %vm1861, %v2111, 0
  %v2155 = vsel %vm1871, %v2139, 0
  %2157 = vmatpush.bf16.msra.mxu0 0
  %2158 = vmatpush.bf16.msra.mxu0 0
  %2159 = vmatpush.bf16.msra.mxu0 %v2155
  %2160 = vmatpush.bf16.msra.mxu0 %v2138
  %2161 = vmatpush.bf16.msra.mxu0 %v2137
  %2162 = vmatpush.bf16.msra.mxu0 %v2136
  %2163 = vmatpush.bf16.msra.mxu0 %v2135
  %2164 = vmatpush.bf16.msra.mxu0 %v2134
  %2165 = vmatmul.bf16.gmra.mxu0 %v2146
  %v2166 = vpop.f32.mrf.mxu0
  %v2167 = vadd.f32 0.0, %v2166
  %v2168 = vpop.f32.mrf.mxu0
  %v2169 = vadd.f32 0.0, %v2168
  %2170 = vmatmul.bf16.gmra.mxu0 %v2149
  %v2171 = vpop.f32.mrf.mxu0
  %v2172 = vadd.f32 0.0, %v2171
  %v2173 = vpop.f32.mrf.mxu0
  %v2174 = vadd.f32 0.0, %v2173
  %2175 = vmatmul.bf16.gmra.mxu0 %v2152
  %v2176 = vpop.f32.mrf.mxu0
  %v2177 = vadd.f32 0.0, %v2176
  %v2178 = vpop.f32.mrf.mxu0
  %2179 = vdwg.mxu0
  %v2180 = vadd.f32 %v2077, %v2167
  %v2181 = vadd.f32 %v2078, %v2169
  %v2182 = vadd.f32 %v2079, %v2172
  %v2183 = vadd.f32 %v2080, %v2174
  %v2184 = vadd.f32 %v2081, %v2177
  %v2185 = vld [vmem:[#allocation2 + $0x8] sm:$0xf]
  %v2186 = vld [vmem:[#allocation2 + $0xc] sm:$0xf]
  %v2187 = vld [vmem:[#allocation2 + $0x10] sm:$0xf]
  %v2188 = vld [vmem:[#allocation2 + $0x14] sm:$0xf]
  %v2189 = vld [vmem:[#allocation2 + $0x18] sm:$0xf]
  %s2190 = scalar_lea.vmem %s3, 176
  %v2191 = vld [vmem:[%s2190] sm:$0xf]
  %v2192 = vld [vmem:[%s2190 + $0x4] sm:$0xf]
  %v2193 = vld [vmem:[%s2190 + $0x8] sm:$0xf]
  %v2194 = vld [vmem:[%s2190 + $0xc] sm:$0xf]
  %v2195 = vld [vmem:[%s2190 + $0x10] sm:$0xf]
  %v2196 = vld [vmem:[%s2190 + $0x14] sm:$0xf]
  %v2197 = vld [vmem:[%s2190 + $0x18] sm:$0xf]
  %v2198 = vld [vmem:[%s2190 + $0x1c] sm:$0xf]
  %v2199 = vld [vmem:[%s2190 + $0x20] sm:$0xf]
  %v2200 = vld [vmem:[%s2190 + $0x24] sm:$0xf]
  %v2201 = vld [vmem:[%s2190 + $0x28] sm:$0x3]
  %v2207 = vunpack.c.l.b16 %v2185
  %v2208 = vunpack.c.l.b16 %v2186
  %v2209 = vunpack.c.l.b16 %v2187
  %v2210 = vunpack.c.l.b16 %v2188
  %v2211 = vunpack.c.l.b16 %v2189
  %v2212 = vpack.c.b16 %v2208, %v2207
  %v2213 = vpack.c.b16 %v2210, %v2209
  %v2214 = vpack.c.b16 %v2211, %v2211
  %v2226 = vunpack.c.l.b16 %v2191
  %v2227 = vunpack.c.l.b16 %v2192
  %v2228 = vunpack.c.l.b16 %v2193
  %v2229 = vunpack.c.l.b16 %v2194
  %v2230 = vunpack.c.l.b16 %v2195
  %v2231 = vunpack.c.l.b16 %v2196
  %v2232 = vunpack.c.l.b16 %v2197
  %v2233 = vunpack.c.l.b16 %v2198
  %v2234 = vunpack.c.l.b16 %v2199
  %v2235 = vunpack.c.l.b16 %v2200
  %v2236 = vunpack.c.l.b16 %v2201
  %v2237 = vpack.c.b16 %v2227, %v2226
  %v2238 = vpack.c.b16 %v2229, %v2228
  %v2239 = vpack.c.b16 %v2231, %v2230
  %v2240 = vpack.c.b16 %v2233, %v2232
  %v2241 = vpack.c.b16 %v2235, %v2234
  %v2242 = vpack.c.b16 %v2236, %v2236
  %v2249 = vsel %vm1861, %v2212, 0
  %v2252 = vsel %vm1861, %v2213, 0
  %v2255 = vsel %vm1861, %v2214, 0
  %v2258 = vsel %vm1871, %v2242, 0
  %2260 = vmatpush.bf16.msra.mxu0 0
  %2261 = vmatpush.bf16.msra.mxu0 0
  %2262 = vmatpush.bf16.msra.mxu0 %v2258
  %2263 = vmatpush.bf16.msra.mxu0 %v2241
  %2264 = vmatpush.bf16.msra.mxu0 %v2240
  %2265 = vmatpush.bf16.msra.mxu0 %v2239
  %2266 = vmatpush.bf16.msra.mxu0 %v2238
  %2267 = vmatpush.bf16.msra.mxu0 %v2237
  %2268 = vmatmul.bf16.gmra.mxu0 %v2249
  %v2269 = vpop.f32.mrf.mxu0
  %v2270 = vadd.f32 0.0, %v2269
  %v2271 = vpop.f32.mrf.mxu0
  %v2272 = vadd.f32 0.0, %v2271
  %2273 = vmatmul.bf16.gmra.mxu0 %v2252
  %v2274 = vpop.f32.mrf.mxu0
  %v2275 = vadd.f32 0.0, %v2274
  %v2276 = vpop.f32.mrf.mxu0
  %v2277 = vadd.f32 0.0, %v2276
  %2278 = vmatmul.bf16.gmra.mxu0 %v2255
  %v2279 = vpop.f32.mrf.mxu0
  %v2280 = vadd.f32 0.0, %v2279
  %v2281 = vpop.f32.mrf.mxu0
  %2282 = vdwg.mxu0
  %v2283 = vadd.f32 %v2180, %v2270
  %v2284 = vadd.f32 %v2181, %v2272
  %v2285 = vadd.f32 %v2182, %v2275
  %v2286 = vadd.f32 %v2183, %v2277
  %v2287 = vadd.f32 %v2184, %v2280
  %s2288 = scalar_lea.vmem %s3, 220
  %v2289 = vld [vmem:[%s2288] sm:$0xf]
  %v2290 = vld [vmem:[%s2288 + $0x4] sm:$0xf]
  %v2291 = vld [vmem:[%s2288 + $0x8] sm:$0xf]
  %v2292 = vld [vmem:[%s2288 + $0xc] sm:$0xf]
  %v2293 = vld [vmem:[%s2288 + $0x10] sm:$0xf]
  %v2294 = vld [vmem:[%s2288 + $0x14] sm:$0xf]
  %v2295 = vld [vmem:[%s2288 + $0x18] sm:$0xf]
  %v2296 = vld [vmem:[%s2288 + $0x1c] sm:$0xf]
  %v2297 = vld [vmem:[%s2288 + $0x20] sm:$0xf]
  %v2298 = vld [vmem:[%s2288 + $0x24] sm:$0xf]
  %v2299 = vld [vmem:[%s2288 + $0x28] sm:$0x3]
  %s2300 = scalar_lea.vmem %s3, 264
  %v2301 = vld [vmem:[%s2300] sm:$0xf]
  %v2302 = vld [vmem:[%s2300 + $0x4] sm:$0xf]
  %v2303 = vld [vmem:[%s2300 + $0x8] sm:$0xf]
  %v2304 = vld [vmem:[%s2300 + $0xc] sm:$0xf]
  %v2305 = vld [vmem:[%s2300 + $0x10] sm:$0xf]
  %v2306 = vld [vmem:[%s2300 + $0x14] sm:$0xf]
  %v2307 = vld [vmem:[%s2300 + $0x18] sm:$0xf]
  %v2308 = vld [vmem:[%s2300 + $0x1c] sm:$0xf]
  %v2309 = vld [vmem:[%s2300 + $0x20] sm:$0xf]
  %v2310 = vld [vmem:[%s2300 + $0x24] sm:$0xf]
  %v2311 = vld [vmem:[%s2300 + $0x28] sm:$0x3]
  %v2323 = vunpack.c.l.b16 %v2301
  %v2324 = vunpack.c.l.b16 %v2302
  %v2325 = vunpack.c.l.b16 %v2303
  %v2326 = vunpack.c.l.b16 %v2304
  %v2327 = vunpack.c.l.b16 %v2305
  %v2328 = vunpack.c.l.b16 %v2306
  %v2329 = vunpack.c.l.b16 %v2307
  %v2330 = vunpack.c.l.b16 %v2308
  %v2331 = vunpack.c.l.b16 %v2309
  %v2332 = vunpack.c.l.b16 %v2310
  %v2333 = vunpack.c.l.b16 %v2311
  %v2334 = vpack.c.b16 %v2324, %v2323
  %v2335 = vpack.c.b16 %v2326, %v2325
  %v2336 = vpack.c.b16 %v2328, %v2327
  %v2337 = vpack.c.b16 %v2330, %v2329
  %v2338 = vpack.c.b16 %v2332, %v2331
  %v2339 = vpack.c.b16 %v2333, %v2333
  %v2346 = vsel %vm1871, %v2339, 0
  %2348 = vmatpush.bf16.msra.mxu0 0
  %2349 = vmatpush.bf16.msra.mxu0 0
  %2350 = vmatpush.bf16.msra.mxu0 %v2346
  %2351 = vmatpush.bf16.msra.mxu0 %v2338
  %2352 = vmatpush.bf16.msra.mxu0 %v2337
  %2353 = vmatpush.bf16.msra.mxu0 %v2336
  %2354 = vmatpush.bf16.msra.mxu0 %v2335
  %2355 = vmatpush.bf16.msra.mxu0 %v2334
  %2356 = vmatmul.bf16.gmra.mxu0 %v1863
  %v2357 = vpop.f32.mrf.mxu0
  %v2358 = vadd.f32 0.0, %v2357
  %v2359 = vpop.f32.mrf.mxu0
  %v2360 = vadd.f32 0.0, %v2359
  %2361 = vmatmul.bf16.gmra.mxu0 %v1866
  %v2362 = vpop.f32.mrf.mxu0
  %v2363 = vadd.f32 0.0, %v2362
  %v2364 = vpop.f32.mrf.mxu0
  %v2365 = vadd.f32 0.0, %v2364
  %2366 = vmatmul.bf16.gmra.mxu0 %v1869
  %v2367 = vpop.f32.mrf.mxu0
  %v2368 = vadd.f32 0.0, %v2367
  %v2369 = vpop.f32.mrf.mxu0
  %2370 = vdwg.mxu0
  %v2382 = vunpack.c.l.b16 %v2289
  %v2383 = vunpack.c.l.b16 %v2290
  %v2384 = vunpack.c.l.b16 %v2291
  %v2385 = vunpack.c.l.b16 %v2292
  %v2386 = vunpack.c.l.b16 %v2293
  %v2387 = vunpack.c.l.b16 %v2294
  %v2388 = vunpack.c.l.b16 %v2295
  %v2389 = vunpack.c.l.b16 %v2296
  %v2390 = vunpack.c.l.b16 %v2297
  %v2391 = vunpack.c.l.b16 %v2298
  %v2392 = vunpack.c.l.b16 %v2299
  %v2393 = vpack.c.b16 %v2383, %v2382
  %v2394 = vpack.c.b16 %v2385, %v2384
  %v2395 = vpack.c.b16 %v2387, %v2386
  %v2396 = vpack.c.b16 %v2389, %v2388
  %v2397 = vpack.c.b16 %v2391, %v2390
  %v2398 = vpack.c.b16 %v2392, %v2392
  %v2405 = vsel %vm1871, %v2398, 0
  %2407 = vmatpush.bf16.msra.mxu0 0
  %2408 = vmatpush.bf16.msra.mxu0 0
  %2409 = vmatpush.bf16.msra.mxu0 %v2405
  %2410 = vmatpush.bf16.msra.mxu0 %v2397
  %2411 = vmatpush.bf16.msra.mxu0 %v2396
  %2412 = vmatpush.bf16.msra.mxu0 %v2395
  %2413 = vmatpush.bf16.msra.mxu0 %v2394
  %2414 = vmatpush.bf16.msra.mxu0 %v2393
  %2415 = vmatmul.bf16.gmra.mxu0 %v1945
  %v2416 = vpop.f32.mrf.mxu0
  %v2417 = vadd.f32 %v2358, %v2416
  %v2418 = vpop.f32.mrf.mxu0
  %v2419 = vadd.f32 %v2360, %v2418
  %2420 = vmatmul.bf16.gmra.mxu0 %v1948
  %v2421 = vpop.f32.mrf.mxu0
  %v2422 = vadd.f32 %v2363, %v2421
  %v2423 = vpop.f32.mrf.mxu0
  %v2424 = vadd.f32 %v2365, %v2423
  %2425 = vmatmul.bf16.gmra.mxu0 %v1951
  %v2426 = vpop.f32.mrf.mxu0
  %v2427 = vadd.f32 %v2368, %v2426
  %v2428 = vpop.f32.mrf.mxu0
  %2429 = vdwg.mxu0
  %s2430 = scalar_lea.vmem %s3, 308
  %v2431 = vld [vmem:[%s2430] sm:$0xf]
  %v2432 = vld [vmem:[%s2430 + $0x4] sm:$0xf]
  %v2433 = vld [vmem:[%s2430 + $0x8] sm:$0xf]
  %v2434 = vld [vmem:[%s2430 + $0xc] sm:$0xf]
  %v2435 = vld [vmem:[%s2430 + $0x10] sm:$0xf]
  %v2436 = vld [vmem:[%s2430 + $0x14] sm:$0xf]
  %v2437 = vld [vmem:[%s2430 + $0x18] sm:$0xf]
  %v2438 = vld [vmem:[%s2430 + $0x1c] sm:$0xf]
  %v2439 = vld [vmem:[%s2430 + $0x20] sm:$0xf]
  %v2440 = vld [vmem:[%s2430 + $0x24] sm:$0xf]
  %v2441 = vld [vmem:[%s2430 + $0x28] sm:$0x3]
  %v2453 = vunpack.c.l.b16 %v2431
  %v2454 = vunpack.c.l.b16 %v2432
  %v2455 = vunpack.c.l.b16 %v2433
  %v2456 = vunpack.c.l.b16 %v2434
  %v2457 = vunpack.c.l.b16 %v2435
  %v2458 = vunpack.c.l.b16 %v2436
  %v2459 = vunpack.c.l.b16 %v2437
  %v2460 = vunpack.c.l.b16 %v2438
  %v2461 = vunpack.c.l.b16 %v2439
  %v2462 = vunpack.c.l.b16 %v2440
  %v2463 = vunpack.c.l.b16 %v2441
  %v2464 = vpack.c.b16 %v2454, %v2453
  %v2465 = vpack.c.b16 %v2456, %v2455
  %v2466 = vpack.c.b16 %v2458, %v2457
  %v2467 = vpack.c.b16 %v2460, %v2459
  %v2468 = vpack.c.b16 %v2462, %v2461
  %v2469 = vpack.c.b16 %v2463, %v2463
  %v2476 = vsel %vm1871, %v2469, 0
  %2478 = vmatpush.bf16.msra.mxu0 0
  %2479 = vmatpush.bf16.msra.mxu0 0
  %2480 = vmatpush.bf16.msra.mxu0 %v2476
  %2481 = vmatpush.bf16.msra.mxu0 %v2468
  %2482 = vmatpush.bf16.msra.mxu0 %v2467
  %2483 = vmatpush.bf16.msra.mxu0 %v2466
  %2484 = vmatpush.bf16.msra.mxu0 %v2465
  %2485 = vmatpush.bf16.msra.mxu0 %v2464
  %2486 = vmatmul.bf16.gmra.mxu0 %v2043
  %v2487 = vpop.f32.mrf.mxu0
  %v2488 = vadd.f32 0.0, %v2487
  %v2489 = vpop.f32.mrf.mxu0
  %v2490 = vadd.f32 0.0, %v2489
  %2491 = vmatmul.bf16.gmra.mxu0 %v2046
  %v2492 = vpop.f32.mrf.mxu0
  %v2493 = vadd.f32 0.0, %v2492
  %v2494 = vpop.f32.mrf.mxu0
  %v2495 = vadd.f32 0.0, %v2494
  %2496 = vmatmul.bf16.gmra.mxu0 %v2049
  %v2497 = vpop.f32.mrf.mxu0
  %v2498 = vadd.f32 0.0, %v2497
  %v2499 = vpop.f32.mrf.mxu0
  %2500 = vdwg.mxu0
  %v2501 = vadd.f32 %v2417, %v2488
  %v2502 = vadd.f32 %v2419, %v2490
  %v2503 = vadd.f32 %v2422, %v2493
  %v2504 = vadd.f32 %v2424, %v2495
  %v2505 = vadd.f32 %v2427, %v2498
  %s2506 = scalar_lea.vmem %s3, 352
  %v2507 = vld [vmem:[%s2506] sm:$0xf]
  %v2508 = vld [vmem:[%s2506 + $0x4] sm:$0xf]
  %v2509 = vld [vmem:[%s2506 + $0x8] sm:$0xf]
  %v2510 = vld [vmem:[%s2506 + $0xc] sm:$0xf]
  %v2511 = vld [vmem:[%s2506 + $0x10] sm:$0xf]
  %v2512 = vld [vmem:[%s2506 + $0x14] sm:$0xf]
  %v2513 = vld [vmem:[%s2506 + $0x18] sm:$0xf]
  %v2514 = vld [vmem:[%s2506 + $0x1c] sm:$0xf]
  %v2515 = vld [vmem:[%s2506 + $0x20] sm:$0xf]
  %v2516 = vld [vmem:[%s2506 + $0x24] sm:$0xf]
  %v2517 = vld [vmem:[%s2506 + $0x28] sm:$0x3]
  %v2529 = vunpack.c.l.b16 %v2507
  %v2530 = vunpack.c.l.b16 %v2508
  %v2531 = vunpack.c.l.b16 %v2509
  %v2532 = vunpack.c.l.b16 %v2510
  %v2533 = vunpack.c.l.b16 %v2511
  %v2534 = vunpack.c.l.b16 %v2512
  %v2535 = vunpack.c.l.b16 %v2513
  %v2536 = vunpack.c.l.b16 %v2514
  %v2537 = vunpack.c.l.b16 %v2515
  %v2538 = vunpack.c.l.b16 %v2516
  %v2539 = vunpack.c.l.b16 %v2517
  %v2540 = vpack.c.b16 %v2530, %v2529
  %v2541 = vpack.c.b16 %v2532, %v2531
  %v2542 = vpack.c.b16 %v2534, %v2533
  %v2543 = vpack.c.b16 %v2536, %v2535
  %v2544 = vpack.c.b16 %v2538, %v2537
  %v2545 = vpack.c.b16 %v2539, %v2539
  %v2552 = vsel %vm1871, %v2545, 0
  %2554 = vmatpush.bf16.msra.mxu0 0
  %2555 = vmatpush.bf16.msra.mxu0 0
  %2556 = vmatpush.bf16.msra.mxu0 %v2552
  %2557 = vmatpush.bf16.msra.mxu0 %v2544
  %2558 = vmatpush.bf16.msra.mxu0 %v2543
  %2559 = vmatpush.bf16.msra.mxu0 %v2542
  %2560 = vmatpush.bf16.msra.mxu0 %v2541
  %2561 = vmatpush.bf16.msra.mxu0 %v2540
  %2562 = vmatmul.bf16.gmra.mxu0 %v2146
  %v2563 = vpop.f32.mrf.mxu0
  %v2564 = vadd.f32 0.0, %v2563
  %v2565 = vpop.f32.mrf.mxu0
  %v2566 = vadd.f32 0.0, %v2565
  %2567 = vmatmul.bf16.gmra.mxu0 %v2149
  %v2568 = vpop.f32.mrf.mxu0
  %v2569 = vadd.f32 0.0, %v2568
  %v2570 = vpop.f32.mrf.mxu0
  %v2571 = vadd.f32 0.0, %v2570
  %2572 = vmatmul.bf16.gmra.mxu0 %v2152
  %v2573 = vpop.f32.mrf.mxu0
  %v2574 = vadd.f32 0.0, %v2573
  %v2575 = vpop.f32.mrf.mxu0
  %2576 = vdwg.mxu0
  %v2577 = vadd.f32 %v2501, %v2564
  %v2578 = vadd.f32 %v2502, %v2566
  %v2579 = vadd.f32 %v2503, %v2569
  %v2580 = vadd.f32 %v2504, %v2571
  %v2581 = vadd.f32 %v2505, %v2574
  %s2582 = scalar_lea.vmem %s3, 396
  %v2583 = vld [vmem:[%s2582] sm:$0xf]
  %v2584 = vld [vmem:[%s2582 + $0x4] sm:$0xf]
  %v2585 = vld [vmem:[%s2582 + $0x8] sm:$0xf]
  %v2586 = vld [vmem:[%s2582 + $0xc] sm:$0xf]
  %v2587 = vld [vmem:[%s2582 + $0x10] sm:$0xf]
  %v2588 = vld [vmem:[%s2582 + $0x14] sm:$0xf]
  %v2589 = vld [vmem:[%s2582 + $0x18] sm:$0xf]
  %v2590 = vld [vmem:[%s2582 + $0x1c] sm:$0xf]
  %v2591 = vld [vmem:[%s2582 + $0x20] sm:$0xf]
  %v2592 = vld [vmem:[%s2582 + $0x24] sm:$0xf]
  %v2593 = vld [vmem:[%s2582 + $0x28] sm:$0x3]
  %v2605 = vunpack.c.l.b16 %v2583
  %v2606 = vunpack.c.l.b16 %v2584
  %v2607 = vunpack.c.l.b16 %v2585
  %v2608 = vunpack.c.l.b16 %v2586
  %v2609 = vunpack.c.l.b16 %v2587
  %v2610 = vunpack.c.l.b16 %v2588
  %v2611 = vunpack.c.l.b16 %v2589
  %v2612 = vunpack.c.l.b16 %v2590
  %v2613 = vunpack.c.l.b16 %v2591
  %v2614 = vunpack.c.l.b16 %v2592
  %v2615 = vunpack.c.l.b16 %v2593
  %v2616 = vpack.c.b16 %v2606, %v2605
  %v2617 = vpack.c.b16 %v2608, %v2607
  %v2618 = vpack.c.b16 %v2610, %v2609
  %v2619 = vpack.c.b16 %v2612, %v2611
  %v2620 = vpack.c.b16 %v2614, %v2613
  %v2621 = vpack.c.b16 %v2615, %v2615
  %v2628 = vsel %vm1871, %v2621, 0
  %2630 = vmatpush.bf16.msra.mxu0 0
  %2631 = vmatpush.bf16.msra.mxu0 0
  %2632 = vmatpush.bf16.msra.mxu0 %v2628
  %2633 = vmatpush.bf16.msra.mxu0 %v2620
  %2634 = vmatpush.bf16.msra.mxu0 %v2619
  %2635 = vmatpush.bf16.msra.mxu0 %v2618
  %2636 = vmatpush.bf16.msra.mxu0 %v2617
  %2637 = vmatpush.bf16.msra.mxu0 %v2616
  %2638 = vmatmul.bf16.gmra.mxu0 %v2249
  %v2639 = vpop.f32.mrf.mxu0
  %v2640 = vadd.f32 0.0, %v2639
  %v2641 = vpop.f32.mrf.mxu0
  %v2642 = vadd.f32 0.0, %v2641
  %2643 = vmatmul.bf16.gmra.mxu0 %v2252
  %v2644 = vpop.f32.mrf.mxu0
  %v2645 = vadd.f32 0.0, %v2644
  %v2646 = vpop.f32.mrf.mxu0
  %v2647 = vadd.f32 0.0, %v2646
  %2648 = vmatmul.bf16.gmra.mxu0 %v2255
  %v2649 = vpop.f32.mrf.mxu0
  %v2650 = vadd.f32 0.0, %v2649
  %v2651 = vpop.f32.mrf.mxu0
  %2652 = vdwg.mxu0
  %v2653 = vadd.f32 %v2577, %v2640
  %v2654 = vadd.f32 %v2578, %v2642
  %v2655 = vadd.f32 %v2579, %v2645
  %v2656 = vadd.f32 %v2580, %v2647
  %v2657 = vadd.f32 %v2581, %v2650
  %v2658 = vmax.f32 %v2283, %v2653
  %v2659 = vmax.f32 %v2284, %v2654
  %v2660 = vmax.f32 %v2285, %v2655
  %v2661 = vmax.f32 %v2286, %v2656
  %v2662 = vmax.f32 %v2287, %v2657
  %2663 = vmatpush.bf16.msra.mxu0 0
  %2664 = vmatpush.bf16.msra.mxu0 0
  %2665 = vmatpush.bf16.msra.mxu0 %v1873
  %2666 = vmatpush.bf16.msra.mxu0 %v1854
  %2667 = vmatpush.bf16.msra.mxu0 %v1853
  %2668 = vmatpush.bf16.msra.mxu0 %v1852
  %2669 = vmatpush.bf16.msra.mxu0 %v1851
  %2670 = vmatpush.bf16.msra.mxu0 %v1850
  %2671 = vmatmul.bf16.gmra.mxu0 %v2043
  %v2672 = vpop.f32.mrf.mxu0
  %v2673 = vadd.f32 0.0, %v2672
  %v2674 = vpop.f32.mrf.mxu0
  %v2675 = vadd.f32 0.0, %v2674
  %2676 = vmatmul.bf16.gmra.mxu0 %v2046
  %v2677 = vpop.f32.mrf.mxu0
  %v2678 = vadd.f32 0.0, %v2677
  %v2679 = vpop.f32.mrf.mxu0
  %v2680 = vadd.f32 0.0, %v2679
  %2681 = vmatmul.bf16.gmra.mxu0 %v2049
  %v2682 = vpop.f32.mrf.mxu0
  %v2683 = vadd.f32 0.0, %v2682
  %v2684 = vpop.f32.mrf.mxu0
  %2685 = vdwg.mxu0
  %2686 = vmatpush.bf16.msra.mxu0 0
  %2687 = vmatpush.bf16.msra.mxu0 0
  %2688 = vmatpush.bf16.msra.mxu0 %v1954
  %2689 = vmatpush.bf16.msra.mxu0 %v1937
  %2690 = vmatpush.bf16.msra.mxu0 %v1936
  %2691 = vmatpush.bf16.msra.mxu0 %v1935
  %2692 = vmatpush.bf16.msra.mxu0 %v1934
  %2693 = vmatpush.bf16.msra.mxu0 %v1933
  %2694 = vmatmul.bf16.gmra.mxu0 %v1863
  %v2695 = vpop.f32.mrf.mxu0
  %v2696 = vadd.f32 %v2673, %v2695
  %v2697 = vpop.f32.mrf.mxu0
  %v2698 = vadd.f32 %v2675, %v2697
  %2699 = vmatmul.bf16.gmra.mxu0 %v1866
  %v2700 = vpop.f32.mrf.mxu0
  %v2701 = vadd.f32 %v2678, %v2700
  %v2702 = vpop.f32.mrf.mxu0
  %v2703 = vadd.f32 %v2680, %v2702
  %2704 = vmatmul.bf16.gmra.mxu0 %v1869
  %v2705 = vpop.f32.mrf.mxu0
  %v2706 = vadd.f32 %v2683, %v2705
  %v2707 = vpop.f32.mrf.mxu0
  %2708 = vdwg.mxu0
  %2709 = vmatpush.bf16.msra.mxu0 0
  %2710 = vmatpush.bf16.msra.mxu0 0
  %2711 = vmatpush.bf16.msra.mxu0 %v2052
  %2712 = vmatpush.bf16.msra.mxu0 %v2035
  %2713 = vmatpush.bf16.msra.mxu0 %v2034
  %2714 = vmatpush.bf16.msra.mxu0 %v2033
  %2715 = vmatpush.bf16.msra.mxu0 %v2032
  %2716 = vmatpush.bf16.msra.mxu0 %v2031
  %2717 = vmatmul.bf16.gmra.mxu0 %v2146
  %v2718 = vpop.f32.mrf.mxu0
  %v2719 = vadd.f32 0.0, %v2718
  %v2720 = vpop.f32.mrf.mxu0
  %v2721 = vadd.f32 0.0, %v2720
  %2722 = vmatmul.bf16.gmra.mxu0 %v2149
  %v2723 = vpop.f32.mrf.mxu0
  %v2724 = vadd.f32 0.0, %v2723
  %v2725 = vpop.f32.mrf.mxu0
  %v2726 = vadd.f32 0.0, %v2725
  %2727 = vmatmul.bf16.gmra.mxu0 %v2152
  %v2728 = vpop.f32.mrf.mxu0
  %v2729 = vadd.f32 0.0, %v2728
  %v2730 = vpop.f32.mrf.mxu0
  %2731 = vdwg.mxu0
  %v2732 = vadd.f32 %v2696, %v2719
  %v2733 = vadd.f32 %v2698, %v2721
  %v2734 = vadd.f32 %v2701, %v2724
  %v2735 = vadd.f32 %v2703, %v2726
  %v2736 = vadd.f32 %v2706, %v2729
  %2737 = vmatpush.bf16.msra.mxu0 0
  %2738 = vmatpush.bf16.msra.mxu0 0
  %2739 = vmatpush.bf16.msra.mxu0 %v2155
  %2740 = vmatpush.bf16.msra.mxu0 %v2138
  %2741 = vmatpush.bf16.msra.mxu0 %v2137
  %2742 = vmatpush.bf16.msra.mxu0 %v2136
  %2743 = vmatpush.bf16.msra.mxu0 %v2135
  %2744 = vmatpush.bf16.msra.mxu0 %v2134
  %2745 = vmatmul.bf16.gmra.mxu0 %v2249
  %v2746 = vpop.f32.mrf.mxu0
  %v2747 = vadd.f32 0.0, %v2746
  %v2748 = vpop.f32.mrf.mxu0
  %v2749 = vadd.f32 0.0, %v2748
  %2750 = vmatmul.bf16.gmra.mxu0 %v2252
  %v2751 = vpop.f32.mrf.mxu0
  %v2752 = vadd.f32 0.0, %v2751
  %v2753 = vpop.f32.mrf.mxu0
  %v2754 = vadd.f32 0.0, %v2753
  %2755 = vmatmul.bf16.gmra.mxu0 %v2255
  %v2756 = vpop.f32.mrf.mxu0
  %v2757 = vadd.f32 0.0, %v2756
  %v2758 = vpop.f32.mrf.mxu0
  %2759 = vdwg.mxu0
  %v2760 = vadd.f32 %v2732, %v2747
  %v2761 = vadd.f32 %v2733, %v2749
  %v2762 = vadd.f32 %v2734, %v2752
  %v2763 = vadd.f32 %v2735, %v2754
  %v2764 = vadd.f32 %v2736, %v2757
  %v2765 = vld [vmem:[%s1768 + $0x8] sm:$0xf]
  %v2766 = vld [vmem:[%s1768 + $0xc] sm:$0xf]
  %v2767 = vld [vmem:[%s1768 + $0x10] sm:$0xf]
  %v2768 = vld [vmem:[%s1768 + $0x14] sm:$0xf]
  %v2769 = vld [vmem:[%s1768 + $0x18] sm:$0xf]
  %v2775 = vunpack.c.l.b16 %v2765
  %v2776 = vunpack.c.l.b16 %v2766
  %v2777 = vunpack.c.l.b16 %v2767
  %v2778 = vunpack.c.l.b16 %v2768
  %v2779 = vunpack.c.l.b16 %v2769
  %v2780 = vpack.c.b16 %v2776, %v2775
  %v2781 = vpack.c.b16 %v2778, %v2777
  %v2782 = vpack.c.b16 %v2779, %v2779
  %v2784 = vsel %vm1861, %v2780, 0
  %v2787 = vsel %vm1861, %v2781, 0
  %v2790 = vsel %vm1861, %v2782, 0
  %2792 = vmatpush.bf16.msra.mxu0 0
  %2793 = vmatpush.bf16.msra.mxu0 0
  %2794 = vmatpush.bf16.msra.mxu0 %v2258
  %2795 = vmatpush.bf16.msra.mxu0 %v2241
  %2796 = vmatpush.bf16.msra.mxu0 %v2240
  %2797 = vmatpush.bf16.msra.mxu0 %v2239
  %2798 = vmatpush.bf16.msra.mxu0 %v2238
  %2799 = vmatpush.bf16.msra.mxu0 %v2237
  %2800 = vmatmul.bf16.gmra.mxu0 %v2784
  %v2801 = vpop.f32.mrf.mxu0
  %v2802 = vadd.f32 0.0, %v2801
  %v2803 = vpop.f32.mrf.mxu0
  %v2804 = vadd.f32 0.0, %v2803
  %2805 = vmatmul.bf16.gmra.mxu0 %v2787
  %v2806 = vpop.f32.mrf.mxu0
  %v2807 = vadd.f32 0.0, %v2806
  %v2808 = vpop.f32.mrf.mxu0
  %v2809 = vadd.f32 0.0, %v2808
  %2810 = vmatmul.bf16.gmra.mxu0 %v2790
  %v2811 = vpop.f32.mrf.mxu0
  %v2812 = vadd.f32 0.0, %v2811
  %v2813 = vpop.f32.mrf.mxu0
  %2814 = vdwg.mxu0
  %v2815 = vadd.f32 %v2760, %v2802
  %v2816 = vadd.f32 %v2761, %v2804
  %v2817 = vadd.f32 %v2762, %v2807
  %v2818 = vadd.f32 %v2763, %v2809
  %v2819 = vadd.f32 %v2764, %v2812
  %v2820 = vmax.f32 %v2658, %v2815
  %v2821 = vmax.f32 %v2659, %v2816
  %v2822 = vmax.f32 %v2660, %v2817
  %v2823 = vmax.f32 %v2661, %v2818
  %v2824 = vmax.f32 %v2662, %v2819
  %2825 = vmatpush.bf16.msra.mxu0 0
  %2826 = vmatpush.bf16.msra.mxu0 0
  %2827 = vmatpush.bf16.msra.mxu0 %v2346
  %2828 = vmatpush.bf16.msra.mxu0 %v2338
  %2829 = vmatpush.bf16.msra.mxu0 %v2337
  %2830 = vmatpush.bf16.msra.mxu0 %v2336
  %2831 = vmatpush.bf16.msra.mxu0 %v2335
  %2832 = vmatpush.bf16.msra.mxu0 %v2334
  %2833 = vmatmul.bf16.gmra.mxu0 %v2043
  %v2834 = vpop.f32.mrf.mxu0
  %v2835 = vadd.f32 0.0, %v2834
  %v2836 = vpop.f32.mrf.mxu0
  %v2837 = vadd.f32 0.0, %v2836
  %2838 = vmatmul.bf16.gmra.mxu0 %v2046
  %v2839 = vpop.f32.mrf.mxu0
  %v2840 = vadd.f32 0.0, %v2839
  %v2841 = vpop.f32.mrf.mxu0
  %v2842 = vadd.f32 0.0, %v2841
  %2843 = vmatmul.bf16.gmra.mxu0 %v2049
  %v2844 = vpop.f32.mrf.mxu0
  %v2845 = vadd.f32 0.0, %v2844
  %v2846 = vpop.f32.mrf.mxu0
  %2847 = vdwg.mxu0
  %2848 = vmatpush.bf16.msra.mxu0 0
  %2849 = vmatpush.bf16.msra.mxu0 0
  %2850 = vmatpush.bf16.msra.mxu0 %v2405
  %2851 = vmatpush.bf16.msra.mxu0 %v2397
  %2852 = vmatpush.bf16.msra.mxu0 %v2396
  %2853 = vmatpush.bf16.msra.mxu0 %v2395
  %2854 = vmatpush.bf16.msra.mxu0 %v2394
  %2855 = vmatpush.bf16.msra.mxu0 %v2393
  %2856 = vmatmul.bf16.gmra.mxu0 %v1863
  %v2857 = vpop.f32.mrf.mxu0
  %v2858 = vadd.f32 %v2835, %v2857
  %v2859 = vpop.f32.mrf.mxu0
  %v2860 = vadd.f32 %v2837, %v2859
  %2861 = vmatmul.bf16.gmra.mxu0 %v1866
  %v2862 = vpop.f32.mrf.mxu0
  %v2863 = vadd.f32 %v2840, %v2862
  %v2864 = vpop.f32.mrf.mxu0
  %v2865 = vadd.f32 %v2842, %v2864
  %2866 = vmatmul.bf16.gmra.mxu0 %v1869
  %v2867 = vpop.f32.mrf.mxu0
  %v2868 = vadd.f32 %v2845, %v2867
  %v2869 = vpop.f32.mrf.mxu0
  %2870 = vdwg.mxu0
  %2871 = vmatpush.bf16.msra.mxu0 0
  %2872 = vmatpush.bf16.msra.mxu0 0
  %2873 = vmatpush.bf16.msra.mxu0 %v2476
  %2874 = vmatpush.bf16.msra.mxu0 %v2468
  %2875 = vmatpush.bf16.msra.mxu0 %v2467
  %2876 = vmatpush.bf16.msra.mxu0 %v2466
  %2877 = vmatpush.bf16.msra.mxu0 %v2465
  %2878 = vmatpush.bf16.msra.mxu0 %v2464
  %2879 = vmatmul.bf16.gmra.mxu0 %v2146
  %v2880 = vpop.f32.mrf.mxu0
  %v2881 = vadd.f32 0.0, %v2880
  %v2882 = vpop.f32.mrf.mxu0
  %v2883 = vadd.f32 0.0, %v2882
  %2884 = vmatmul.bf16.gmra.mxu0 %v2149
  %v2885 = vpop.f32.mrf.mxu0
  %v2886 = vadd.f32 0.0, %v2885
  %v2887 = vpop.f32.mrf.mxu0
  %v2888 = vadd.f32 0.0, %v2887
  %2889 = vmatmul.bf16.gmra.mxu0 %v2152
  %v2890 = vpop.f32.mrf.mxu0
  %v2891 = vadd.f32 0.0, %v2890
  %v2892 = vpop.f32.mrf.mxu0
  %2893 = vdwg.mxu0
  %v2894 = vadd.f32 %v2858, %v2881
  %v2895 = vadd.f32 %v2860, %v2883
  %v2896 = vadd.f32 %v2863, %v2886
  %v2897 = vadd.f32 %v2865, %v2888
  %v2898 = vadd.f32 %v2868, %v2891
  %2899 = vmatpush.bf16.msra.mxu0 0
  %2900 = vmatpush.bf16.msra.mxu0 0
  %2901 = vmatpush.bf16.msra.mxu0 %v2552
  %2902 = vmatpush.bf16.msra.mxu0 %v2544
  %2903 = vmatpush.bf16.msra.mxu0 %v2543
  %2904 = vmatpush.bf16.msra.mxu0 %v2542
  %2905 = vmatpush.bf16.msra.mxu0 %v2541
  %2906 = vmatpush.bf16.msra.mxu0 %v2540
  %2907 = vmatmul.bf16.gmra.mxu0 %v2249
  %v2908 = vpop.f32.mrf.mxu0
  %v2909 = vadd.f32 0.0, %v2908
  %v2910 = vpop.f32.mrf.mxu0
  %v2911 = vadd.f32 0.0, %v2910
  %2912 = vmatmul.bf16.gmra.mxu0 %v2252
  %v2913 = vpop.f32.mrf.mxu0
  %v2914 = vadd.f32 0.0, %v2913
  %v2915 = vpop.f32.mrf.mxu0
  %v2916 = vadd.f32 0.0, %v2915
  %2917 = vmatmul.bf16.gmra.mxu0 %v2255
  %v2918 = vpop.f32.mrf.mxu0
  %v2919 = vadd.f32 0.0, %v2918
  %v2920 = vpop.f32.mrf.mxu0
  %2921 = vdwg.mxu0
  %v2922 = vadd.f32 %v2894, %v2909
  %v2923 = vadd.f32 %v2895, %v2911
  %v2924 = vadd.f32 %v2896, %v2914
  %v2925 = vadd.f32 %v2897, %v2916
  %v2926 = vadd.f32 %v2898, %v2919
  %2927 = vmatpush.bf16.msra.mxu0 0
  %2928 = vmatpush.bf16.msra.mxu0 0
  %2929 = vmatpush.bf16.msra.mxu0 %v2628
  %2930 = vmatpush.bf16.msra.mxu0 %v2620
  %2931 = vmatpush.bf16.msra.mxu0 %v2619
  %2932 = vmatpush.bf16.msra.mxu0 %v2618
  %2933 = vmatpush.bf16.msra.mxu0 %v2617
  %2934 = vmatpush.bf16.msra.mxu0 %v2616
  %2935 = vmatmul.bf16.gmra.mxu0 %v2784
  %v2936 = vpop.f32.mrf.mxu0
  %v2937 = vadd.f32 0.0, %v2936
  %v2938 = vpop.f32.mrf.mxu0
  %v2939 = vadd.f32 0.0, %v2938
  %2940 = vmatmul.bf16.gmra.mxu0 %v2787
  %v2941 = vpop.f32.mrf.mxu0
  %v2942 = vadd.f32 0.0, %v2941
  %v2943 = vpop.f32.mrf.mxu0
  %v2944 = vadd.f32 0.0, %v2943
  %2945 = vmatmul.bf16.gmra.mxu0 %v2790
  %v2946 = vpop.f32.mrf.mxu0
  %v2947 = vadd.f32 0.0, %v2946
  %v2948 = vpop.f32.mrf.mxu0
  %2949 = vdwg.mxu0
  %v2950 = vadd.f32 %v2922, %v2937
  %v2951 = vadd.f32 %v2923, %v2939
  %v2952 = vadd.f32 %v2924, %v2942
  %v2953 = vadd.f32 %v2925, %v2944
  %v2954 = vadd.f32 %v2926, %v2947
  %v2955 = vmax.f32 %v2820, %v2950
  %v2956 = vmax.f32 %v2821, %v2951
  %v2957 = vmax.f32 %v2822, %v2952
  %v2958 = vmax.f32 %v2823, %v2953
  %v2959 = vmax.f32 %v2824, %v2954
  %v2960 = vld [vmem:[%s4] sm:$0x1]
  %v2962 = vperm.slane %v2960, 0
  %v2964 = vadd.f32 %v2955, %v2962
  %v2965 = vadd.f32 %v2956, %v2962
  %v2966 = vadd.f32 %v2957, %v2962
  %v2967 = vadd.f32 %v2958, %v2962
  %v2968 = vadd.f32 %v2959, %v2962
  %v2969 = vtanh.pop %v2964
  %v2970 = vtanh.pop %v2965
  %v2971 = vtanh.pop %v2966
  %v2972 = vtanh.pop %v2967
  %v2973 = vtanh.pop %v2968
  %v2974 = vpack.c.bf16 %v2969, %v2969
  %v2975 = vpack.c.bf16 %v2970, %v2970
  %v2976 = vpack.c.bf16 %v2971, %v2971
  %v2977 = vpack.c.bf16 %v2972, %v2972
  %v2978 = vpack.c.bf16 %v2973, %v2973
  %vm2979 = vcmask 650240
  %2980 = vst.msk [vmem:[#allocation3] sm:$0xf] %vm2979, %v2974
  %2982 = vrot.lane.b32.xlu0 %v2975, 80
  %v2983 = vpop.permute.xlu0 %2982
  %v2984 = vrot.slane %v2983, 4
  %vm2985 = vcmask 654336
  %v2986 = vsel %vm2985, %v2984, %v2983
  %vm2988 = vcmask 1044096
  %vm2989 = vcmask 261124
  %vm2990 = vmor %vm2989, %vm2988
  %2991 = vst.msk [vmem:[#allocation3] sm:$0xff] %vm2990, %v2986
  %2993 = vrot.lane.b32.xlu0 %v2976, 32
  %v2994 = vpop.permute.xlu0 %2993
  %vm2996 = vcmask 912640
  %2997 = vst.msk [vmem:[#allocation3 + $0x4] sm:$0xf] %vm2996, %v2994
  %2999 = vrot.lane.b32.xlu0 %v2977, 112
  %v3000 = vpop.permute.xlu0 %2999
  %v3001 = vrot.slane %v3000, 4
  %vm3002 = vcmask 916480
  %v3003 = vsel %vm3002, %v3001, %v3000
  %vm3005 = vcmask 1044352
  %vm3006 = vcmask 523268
  %vm3007 = vmor %vm3006, %vm3005
  %3008 = vst.msk [vmem:[#allocation3 + $0x4] sm:$0xff] %vm3007, %v3003
  %3010 = vrot.lane.b32.xlu0 %v2978, 64
  %v3011 = vpop.permute.xlu0 %3010
  %v3012 = vrot.slane %v3011, 4
  %vm3013 = vcmask 523264
  %v3014 = vsel %vm3013, %v3012, %v3011
  %vm3016 = vcmask 1043968
  %vm3017 = vcmask 130052
  %vm3018 = vmor %vm3017, %vm3016
  %3019 = vst.msk [vmem:[#allocation3 + $0x8] sm:$0xff] %vm3018, %v3014
  %v3020 = vld [vmem:[#allocation3] sm:$0xff]
  %v3021 = vld [vmem:[#allocation3 + $0x8] sm:$0xff]
  %v3022 = vld [vmem:[%s5] sm:$0xf]
  %v3023 = vld [vmem:[%s5 + $0x4] sm:$0xf]
  %v3024 = vld [vmem:[%s5 + $0x8] sm:$0xf]
  %v3025 = vld [vmem:[%s5 + $0xc] sm:$0xf]
  %v3026 = vld [vmem:[%s5 + $0x10] sm:$0xf]
  %v3027 = vld [vmem:[%s5 + $0x14] sm:$0xf]
  %v3028 = vld [vmem:[%s5 + $0x18] sm:$0xf]
  %v3029 = vld [vmem:[%s5 + $0x1c] sm:$0xf]
  %v3030 = vld [vmem:[%s5 + $0x20] sm:$0xf]
  %v3031 = vld [vmem:[%s5 + $0x24] sm:$0xf]
  %v3032 = vld [vmem:[%s5 + $0x28] sm:$0xf]
  %v3033 = vld [vmem:[%s5 + $0x2c] sm:$0xf]
  %v3034 = vld [vmem:[%s5 + $0x30] sm:$0xf]
  %v3035 = vld [vmem:[%s5 + $0x34] sm:$0xf]
  %v3036 = vld [vmem:[%s5 + $0x38] sm:$0xf]
  %v3037 = vld [vmem:[%s5 + $0x3c] sm:$0xf]
  %v3038 = vld [vmem:[%s5 + $0x40] sm:$0xf]
  %v3039 = vld [vmem:[%s5 + $0x44] sm:$0xf]
  %v3040 = vld [vmem:[%s5 + $0x48] sm:$0xf]
  %v3041 = vld [vmem:[%s5 + $0x4c] sm:$0xf]
  %v3042 = vld [vmem:[%s5 + $0x50] sm:$0xf]
  %v3043 = vld [vmem:[%s5 + $0x54] sm:$0xf]
  %v3044 = vld [vmem:[%s5 + $0x58] sm:$0xf]
  %v3045 = vld [vmem:[%s5 + $0x5c] sm:$0xf]
  %v3046 = vld [vmem:[%s5 + $0x60] sm:$0xf]
  %v3047 = vld [vmem:[%s5 + $0x64] sm:$0xf]
  %v3048 = vld [vmem:[%s5 + $0x68] sm:$0xf]
  %v3049 = vld [vmem:[%s5 + $0x6c] sm:$0xf]
  %v3050 = vld [vmem:[%s5 + $0x70] sm:$0xf]
  %v3051 = vld [vmem:[%s5 + $0x74] sm:$0xf]
  %v3052 = vld [vmem:[%s5 + $0x78] sm:$0xf]
  %v3053 = vld [vmem:[%s5 + $0x7c] sm:$0xf]
  %v3054 = vld [vmem:[%s5 + $0x80] sm:$0xf]
  %v3055 = vld [vmem:[%s5 + $0x84] sm:$0xf]
  %v3056 = vld [vmem:[%s5 + $0x88] sm:$0xf]
  %v3057 = vld [vmem:[%s5 + $0x8c] sm:$0xf]
  %v3058 = vld [vmem:[%s5 + $0x90] sm:$0xf]
  %v3059 = vld [vmem:[%s5 + $0x94] sm:$0xf]
  %v3060 = vld [vmem:[%s5 + $0x98] sm:$0xf]
  %v3061 = vld [vmem:[%s5 + $0x9c] sm:$0xf]
  %v3062 = vld [vmem:[%s5 + $0xa0] sm:$0xf]
  %v3063 = vld [vmem:[%s5 + $0xa4] sm:$0xf]
  %v3064 = vld [vmem:[%s5 + $0xa8] sm:$0xf]
  %v3065 = vld [vmem:[%s5 + $0xac] sm:$0xf]
  %v3066 = vld [vmem:[%s5 + $0xb0] sm:$0xf]
  %v3067 = vld [vmem:[%s5 + $0xb4] sm:$0xf]
  %v3068 = vld [vmem:[%s5 + $0xb8] sm:$0xf]
  %v3069 = vld [vmem:[%s5 + $0xbc] sm:$0xf]
  %v3070 = vld [vmem:[%s5 + $0xc0] sm:$0xf]
  %v3071 = vld [vmem:[%s5 + $0xc4] sm:$0xf]
  %v3072 = vld [vmem:[%s6] sm:$0x1]
  %v3074 = vperm.slane %v3072, 0
  %v3078 = vunpack.c.l.b16 %v3020
  %v3079 = vunpack.c.h.b16 %v3020
  %v3080 = vunpack.c.l.b16 %v3021
  %v3081 = vunpack.c.h.b16 %v3021
  %v3082 = vpack.c.b16 %v3078, %v3078
  %v3083 = vpack.c.b16 %v3079, %v3079
  %v3084 = vpack.c.b16 %v3080, %v3080
  %v3085 = vpack.c.b16 %v3081, %v3081
  %v3139 = vunpack.c.l.b16 %v3022
  %v3140 = vunpack.c.l.b16 %v3023
  %v3141 = vunpack.c.l.b16 %v3024
  %v3142 = vunpack.c.l.b16 %v3025
  %v3143 = vunpack.c.l.b16 %v3026
  %v3144 = vunpack.c.l.b16 %v3027
  %v3145 = vunpack.c.l.b16 %v3028
  %v3146 = vunpack.c.l.b16 %v3029
  %v3147 = vunpack.c.l.b16 %v3030
  %v3148 = vunpack.c.l.b16 %v3031
  %v3149 = vunpack.c.l.b16 %v3032
  %v3150 = vunpack.c.l.b16 %v3033
  %v3151 = vunpack.c.l.b16 %v3034
  %v3152 = vunpack.c.l.b16 %v3035
  %v3153 = vunpack.c.l.b16 %v3036
  %v3154 = vunpack.c.l.b16 %v3037
  %v3155 = vunpack.c.l.b16 %v3038
  %v3156 = vunpack.c.l.b16 %v3039
  %v3157 = vunpack.c.l.b16 %v3040
  %v3158 = vunpack.c.l.b16 %v3041
  %v3159 = vunpack.c.l.b16 %v3042
  %v3160 = vunpack.c.l.b16 %v3043
  %v3161 = vunpack.c.l.b16 %v3044
  %v3162 = vunpack.c.l.b16 %v3045
  %v3163 = vunpack.c.l.b16 %v3046
  %v3164 = vunpack.c.l.b16 %v3047
  %v3165 = vunpack.c.l.b16 %v3048
  %v3166 = vunpack.c.l.b16 %v3049
  %v3167 = vunpack.c.l.b16 %v3050
  %v3168 = vunpack.c.l.b16 %v3051
  %v3169 = vunpack.c.l.b16 %v3052
  %v3170 = vunpack.c.l.b16 %v3053
  %v3171 = vunpack.c.l.b16 %v3054
  %v3172 = vunpack.c.l.b16 %v3055
  %v3173 = vunpack.c.l.b16 %v3056
  %v3174 = vunpack.c.l.b16 %v3057
  %v3175 = vunpack.c.l.b16 %v3058
  %v3176 = vunpack.c.l.b16 %v3059
  %v3177 = vunpack.c.l.b16 %v3060
  %v3178 = vunpack.c.l.b16 %v3061
  %v3179 = vunpack.c.l.b16 %v3062
  %v3180 = vunpack.c.l.b16 %v3063
  %v3181 = vunpack.c.l.b16 %v3064
  %v3182 = vunpack.c.l.b16 %v3065
  %v3183 = vunpack.c.l.b16 %v3066
  %v3184 = vunpack.c.l.b16 %v3067
  %v3185 = vunpack.c.l.b16 %v3068
  %v3186 = vunpack.c.l.b16 %v3069
  %v3187 = vunpack.c.l.b16 %v3070
  %v3188 = vunpack.c.l.b16 %v3071
  %v3189 = vpack.c.b16 %v3140, %v3139
  %v3190 = vpack.c.b16 %v3142, %v3141
  %v3191 = vpack.c.b16 %v3144, %v3143
  %v3192 = vpack.c.b16 %v3146, %v3145
  %v3193 = vpack.c.b16 %v3148, %v3147
  %v3194 = vpack.c.b16 %v3150, %v3149
  %v3195 = vpack.c.b16 %v3152, %v3151
  %v3196 = vpack.c.b16 %v3154, %v3153
  %v3197 = vpack.c.b16 %v3156, %v3155
  %v3198 = vpack.c.b16 %v3158, %v3157
  %v3199 = vpack.c.b16 %v3160, %v3159
  %v3200 = vpack.c.b16 %v3162, %v3161
  %v3201 = vpack.c.b16 %v3164, %v3163
  %v3202 = vpack.c.b16 %v3166, %v3165
  %v3203 = vpack.c.b16 %v3168, %v3167
  %v3204 = vpack.c.b16 %v3170, %v3169
  %v3205 = vpack.c.b16 %v3172, %v3171
  %v3206 = vpack.c.b16 %v3174, %v3173
  %v3207 = vpack.c.b16 %v3176, %v3175
  %v3208 = vpack.c.b16 %v3178, %v3177
  %v3209 = vpack.c.b16 %v3180, %v3179
  %v3210 = vpack.c.b16 %v3182, %v3181
  %v3211 = vpack.c.b16 %v3184, %v3183
  %v3212 = vpack.c.b16 %v3186, %v3185
  %v3213 = vpack.c.b16 %v3188, %v3187
  %vm3239 = vcmask 130048
  %v3241 = vsel %vm3239, %v3085, 0
  %3243 = vmatpush.bf16.msra.mxu0 %v3196
  %3244 = vmatpush.bf16.msra.mxu0 %v3195
  %3245 = vmatpush.bf16.msra.mxu0 %v3194
  %3246 = vmatpush.bf16.msra.mxu0 %v3193
  %3247 = vmatpush.bf16.msra.mxu0 %v3192
  %3248 = vmatpush.bf16.msra.mxu0 %v3191
  %3249 = vmatpush.bf16.msra.mxu0 %v3190
  %3250 = vmatpush.bf16.msra.mxu0 %v3189
  %3251 = vmatmul.bf16.gmra.mxu0 %v3082
  %v3252 = vpop.f32.mrf.mxu0
  %v3253 = vadd.f32 %v3074, %v3252
  %v3254 = vpop.f32.mrf.mxu0
  %3255 = vdwg.mxu0
  %3256 = vmatpush.bf16.msra.mxu0 %v3204
  %3257 = vmatpush.bf16.msra.mxu0 %v3203
  %3258 = vmatpush.bf16.msra.mxu0 %v3202
  %3259 = vmatpush.bf16.msra.mxu0 %v3201
  %3260 = vmatpush.bf16.msra.mxu0 %v3200
  %3261 = vmatpush.bf16.msra.mxu0 %v3199
  %3262 = vmatpush.bf16.msra.mxu0 %v3198
  %3263 = vmatpush.bf16.msra.mxu0 %v3197
  %3264 = vmatmul.bf16.gmra.mxu0 %v3083
  %v3265 = vpop.f32.mrf.mxu0
  %v3266 = vadd.f32 %v3253, %v3265
  %v3267 = vpop.f32.mrf.mxu0
  %3268 = vdwg.mxu0
  %3269 = vmatpush.bf16.msra.mxu0 %v3212
  %3270 = vmatpush.bf16.msra.mxu0 %v3211
  %3271 = vmatpush.bf16.msra.mxu0 %v3210
  %3272 = vmatpush.bf16.msra.mxu0 %v3209
  %3273 = vmatpush.bf16.msra.mxu0 %v3208
  %3274 = vmatpush.bf16.msra.mxu0 %v3207
  %3275 = vmatpush.bf16.msra.mxu0 %v3206
  %3276 = vmatpush.bf16.msra.mxu0 %v3205
  %3277 = vmatmul.bf16.gmra.mxu0 %v3084
  %v3278 = vpop.f32.mrf.mxu0
  %v3279 = vadd.f32 %v3266, %v3278
  %v3280 = vpop.f32.mrf.mxu0
  %3281 = vdwg.mxu0
  %3282 = vmatpush.bf16.msra.mxu0 0
  %3283 = vmatpush.bf16.msra.mxu0 0
  %3284 = vmatpush.bf16.msra.mxu0 0
  %3285 = vmatpush.bf16.msra.mxu0 0
  %3286 = vmatpush.bf16.msra.mxu0 0
  %3287 = vmatpush.bf16.msra.mxu0 0
  %3288 = vmatpush.bf16.msra.mxu0 0
  %3289 = vmatpush.bf16.msra.mxu0 %v3213
  %3290 = vmatmul.bf16.gmra.mxu0 %v3241
  %v3291 = vpop.f32.mrf.mxu0
  %v3292 = vadd.f32 %v3279, %v3291
  %v3293 = vpop.f32.mrf.mxu0
  %3294 = vdwg.mxu0
  %v3295 = vtanh.pop %v3292
  %v3296 = vpack.c.bf16 %v3295, %v3295
  %v3297 = vld [vmem:[%s7] sm:$0xf]
  %v3298 = vld [vmem:[%s7 + $0x4] sm:$0xf]
  %v3299 = vld [vmem:[%s7 + $0x8] sm:$0xf]
  %v3300 = vld [vmem:[%s7 + $0xc] sm:$0xf]
  %v3301 = vld [vmem:[%s7 + $0x10] sm:$0xf]
  %v3302 = vld [vmem:[%s7 + $0x14] sm:$0xf]
  %v3303 = vld [vmem:[%s7 + $0x18] sm:$0xf]
  %v3304 = vld [vmem:[%s7 + $0x1c] sm:$0xf]
  %v3305 = vld [vmem:[%s7 + $0x20] sm:$0xf]
  %v3306 = vld [vmem:[%s7 + $0x24] sm:$0xf]
  %v3307 = vld [vmem:[%s7 + $0x28] sm:$0xf]
  %v3308 = vld [vmem:[%s7 + $0x2c] sm:$0xf]
  %v3309 = vld [vmem:[%s7 + $0x30] sm:$0xf]
  %v3310 = vld [vmem:[%s7 + $0x34] sm:$0xf]
  %v3311 = vld [vmem:[%s7 + $0x38] sm:$0xf]
  %v3312 = vld [vmem:[%s8] sm:$0x1]
  %v3314 = vperm.slane %v3312, 0
  %v3331 = vunpack.c.l.b16 %v3297
  %v3332 = vunpack.c.l.b16 %v3298
  %v3333 = vunpack.c.l.b16 %v3299
  %v3334 = vunpack.c.l.b16 %v3300
  %v3335 = vunpack.c.l.b16 %v3301
  %v3336 = vunpack.c.l.b16 %v3302
  %v3337 = vunpack.c.l.b16 %v3303
  %v3338 = vunpack.c.l.b16 %v3304
  %v3339 = vunpack.c.l.b16 %v3305
  %v3340 = vunpack.c.l.b16 %v3306
  %v3341 = vunpack.c.l.b16 %v3307
  %v3342 = vunpack.c.l.b16 %v3308
  %v3343 = vunpack.c.l.b16 %v3309
  %v3344 = vunpack.c.l.b16 %v3310
  %v3345 = vunpack.c.l.b16 %v3311
  %v3346 = vpack.c.b16 %v3332, %v3331
  %v3347 = vpack.c.b16 %v3334, %v3333
  %v3348 = vpack.c.b16 %v3336, %v3335
  %v3349 = vpack.c.b16 %v3338, %v3337
  %v3350 = vpack.c.b16 %v3340, %v3339
  %v3351 = vpack.c.b16 %v3342, %v3341
  %v3352 = vpack.c.b16 %v3344, %v3343
  %v3353 = vpack.c.b16 %v3345, %v3345
  %vm3361 = vcmask 982016
  %v3363 = vsel %vm3361, %v3296, 0
  %vm3365 = vcmask 1043456
  %v3367 = vsel %vm3365, %v3353, 0
  %3369 = vmatpush.bf16.msra.mxu0 %v3367
  %3370 = vmatpush.bf16.msra.mxu0 %v3352
  %3371 = vmatpush.bf16.msra.mxu0 %v3351
  %3372 = vmatpush.bf16.msra.mxu0 %v3350
  %3373 = vmatpush.bf16.msra.mxu0 %v3349
  %3374 = vmatpush.bf16.msra.mxu0 %v3348
  %3375 = vmatpush.bf16.msra.mxu0 %v3347
  %3376 = vmatpush.bf16.msra.mxu0 %v3346
  %3377 = vmatmul.bf16.gmra.mxu0 %v3363
  %v3378 = vpop.f32.mrf.mxu0
  %v3379 = vadd.f32 %v3314, %v3378
  %v3380 = vpop.f32.mrf.mxu0
  %3381 = vdwg.mxu0
  %v3382 = vtanh.pop %v3379
  %v3383 = vpack.c.bf16 %v3382, %v3382
  %v3384 = vld [vmem:[%s9] sm:$0xf]
  %v3385 = vld [vmem:[%s9 + $0x4] sm:$0xf]
  %v3386 = vld [vmem:[%s9 + $0x8] sm:$0xf]
  %v3387 = vld [vmem:[%s9 + $0xc] sm:$0xf]
  %v3388 = vld [vmem:[%s9 + $0x10] sm:$0xf]
  %v3389 = vld [vmem:[%s9 + $0x14] sm:$0xf]
  %v3390 = vld [vmem:[%s9 + $0x18] sm:$0xf]
  %v3391 = vld [vmem:[%s9 + $0x1c] sm:$0xf]
  %v3392 = vld [vmem:[%s9 + $0x20] sm:$0xf]
  %v3393 = vld [vmem:[%s9 + $0x24] sm:$0xf]
  %v3394 = vld [vmem:[%s9 + $0x28] sm:$0x3]
  %v3395 = vld [vmem:[%s10] sm:$0x1]
  %v3397 = vperm.slane %v3395, 0
  %v3410 = vunpack.c.l.b16 %v3384
  %v3411 = vunpack.c.l.b16 %v3385
  %v3412 = vunpack.c.l.b16 %v3386
  %v3413 = vunpack.c.l.b16 %v3387
  %v3414 = vunpack.c.l.b16 %v3388
  %v3415 = vunpack.c.l.b16 %v3389
  %v3416 = vunpack.c.l.b16 %v3390
  %v3417 = vunpack.c.l.b16 %v3391
  %v3418 = vunpack.c.l.b16 %v3392
  %v3419 = vunpack.c.l.b16 %v3393
  %v3420 = vunpack.c.l.b16 %v3394
  %v3421 = vpack.c.b16 %v3411, %v3410
  %v3422 = vpack.c.b16 %v3413, %v3412
  %v3423 = vpack.c.b16 %v3415, %v3414
  %v3424 = vpack.c.b16 %v3417, %v3416
  %v3425 = vpack.c.b16 %v3419, %v3418
  %v3426 = vpack.c.b16 %v3420, %v3420
  %v3433 = vsel %vm1861, %v3383, 0
  %v3436 = vsel %vm1871, %v3426, 0
  %3438 = vmatpush.bf16.msra.mxu0 0
  %3439 = vmatpush.bf16.msra.mxu0 0
  %3440 = vmatpush.bf16.msra.mxu0 %v3436
  %3441 = vmatpush.bf16.msra.mxu0 %v3425
  %3442 = vmatpush.bf16.msra.mxu0 %v3424
  %3443 = vmatpush.bf16.msra.mxu0 %v3423
  %3444 = vmatpush.bf16.msra.mxu0 %v3422
  %3445 = vmatpush.bf16.msra.mxu0 %v3421
  %3446 = vmatmul.bf16.gmra.mxu0 %v3433
  %v3447 = vpop.f32.mrf.mxu0
  %v3448 = vadd.f32 %v3397, %v3447
  %v3449 = vpop.f32.mrf.mxu0
  %3450 = vdwg.mxu0
  %vm3451 = vcmask 80896
  %3452 = vst.msk [vmem:[%s11] sm:$0xff] %vm3451, %v3448
  // Predicated region
  $region46: #{lenet5_forward.1} parent=0 // pred_check
    _
  $region47: #{lenet5_forward.1} parent=0 // pred_check_branch
    %3454 = sbr.rel (0) target = $region49
  $region48: #{lenet5_forward.1} parent=0 // pred_region
    _
  $region49: #{lenet5_forward.1} parent=0 // pred_fallthru
    _
  // Predicated region
  $region50: #{lenet5_forward.1} parent=0 // pred_check
    _
  $region51: #{lenet5_forward.1} parent=0 // pred_check_branch
    %3456 = sbr.rel (0) target = $region53
  $region52: #{lenet5_forward.1} parent=0 // pred_region
    _
  $region53: #{lenet5_forward.1} parent=0 // pred_fallthru
    _

</llo_original>
